<compile_context>
chip_gen: v5e
topology: v5e:2x2
jax: 0.10.0
libtpu: 0.0.40
codegen_flags: <defaults>
</compile_context>

<pallas_src>
import math
from functools import partial

import numpy as np
import jax
import jax.numpy as jnp
from jax import lax
from jax.experimental import pallas as pl
from jax.experimental.pallas import tpu as pltpu


# ----------------------------------------------------------------------------
# small in-kernel helpers (pure jnp)
# ----------------------------------------------------------------------------

def _ln(x, g, b, eps):
    # one-pass stats (E[x], E[x^2]); biased variance, like torch.nn.LayerNorm
    m = jnp.mean(x, axis=-1, keepdims=True)
    ms = jnp.mean(x * x, axis=-1, keepdims=True)
    v = jnp.maximum(ms - m * m, 0.0)
    return (x - m) * lax.rsqrt(v + eps) * g + b


def _gelu_tanh(x):
    # TODO(synk): switch to exact erf GELU if/when lax.erf lowers in Mosaic;
    # the tanh form (EUP tanh) differs from nn.GELU by < ~1e-3 per element.
    c = 0.7978845608028654
    return 0.5 * x * (1.0 + jnp.tanh(c * (x + 0.044715 * x * x * x)))


# ----------------------------------------------------------------------------
# fused Encoder kernel: one grid step == (one Bt-block of sequences, one layer)
# ----------------------------------------------------------------------------

def _encoder_kernel(x_ref, tap_ref, sp_ref,
                    ln1g_ref, ln1b_ref, wqkv_ref, bqkv_ref, wo_ref, bo_ref,
                    ln2g_ref, ln2b_ref, w1_ref, b1_ref, w2_ref, b2_ref,
                    convw_ref, convb_ref, lnfg_ref, lnfb_ref,
                    o_ref, act_ref,
                    *, num_heads, S_real, W, eps):
    f32, bf16 = jnp.float32, jnp.bfloat16
    Bt, S, D = act_ref.shape
    hd = D // num_heads
    l = pl.program_id(1)
    nl = pl.num_programs(1)

    # layer 0: load the residual stream from the input (input dropout = id).
    @pl.when(l == 0)
    def _():
        act_ref[...] = x_ref[...]

    # per-layer weights: DMA'd once per grid step, reused for all Bt sequences.
    ln1g, ln1b = ln1g_ref[0], ln1b_ref[0]
    wqkv, bqkv = wqkv_ref[0], bqkv_ref[0]
    wo, bo = wo_ref[0], bo_ref[0]
    ln2g, ln2b = ln2g_ref[0], ln2b_ref[0]
    w1, b1 = w1_ref[0], b1_ref[0]
    w2, b2 = w2_ref[0], b2_ref[0]
    w9, cb = convw_ref[0], convb_ref[0]
    lnfg, lnfb = lnfg_ref[...], lnfb_ref[...]
    sp = sp_ref[...]                                     # (S, 1) spatial-row mask
    taps = [tap_ref[t] for t in range(9)]                # 9 x (S, 1) sublane slabs

    # key-padding bias for softmax (only when S was padded to a sublane mult.)
    if S > S_real:
        kid = lax.broadcasted_iota(jnp.int32, (1, S), 1)
        kbias = jnp.where(kid < S_real, 0.0, -1e30)
    else:
        kbias = None

    for b in range(Bt):                                  # static; Bt kept small
        x = act_ref[b]                                   # (S, D) f32 residual

        # ---------------- attention sublayer (LN1 fused) ----------------
        h = _ln(x, ln1g, ln1b, eps)
        qkv = jnp.dot(h.astype(bf16), wqkv, preferred_element_type=f32) + bqkv
        qkv = qkv.astype(bf16)                           # bf16 MXU operands
        ctxs = []
        # TODO(synk): at realistic head_dim batch the heads with one leading-
        # batch einsum once the (S,nh,hd)->(nh,S,hd) relayout is profiled;
        # the static loop keeps every op rank-2 (guaranteed lowering).
        for hh in range(num_heads):
            q_h = qkv[:, hh * hd:(hh + 1) * hd]          # 1/sqrt(hd) folded in
            k_h = qkv[:, D + hh * hd:D + (hh + 1) * hd]
            v_h = qkv[:, 2 * D + hh * hd:2 * D + (hh + 1) * hd]
            s = lax.dot_general(q_h, k_h, (((1,), (1,)), ((), ())),
                                preferred_element_type=f32)      # (S,S), no .T
            if kbias is not None:
                s = s + kbias
            s = s - jnp.max(s, axis=-1, keepdims=True)
            p = jnp.exp(s)
            p = p * pl.reciprocal(jnp.sum(p, axis=-1, keepdims=True), approx=True)
            ctxs.append(jnp.dot(p.astype(bf16), v_h, preferred_element_type=f32))
        ctx = jnp.concatenate(ctxs, axis=-1)             # lane-dense (S, D) merge
        attn = jnp.dot(ctx.astype(bf16), wo, preferred_element_type=f32) + bo
        x1 = x + attn                                    # dropout = identity

        # ------------------------ MLP sublayer (LN2 fused) ----------------
        h2 = _ln(x1, ln2g, ln2b, eps)
        m = jnp.dot(h2.astype(bf16), w1, preferred_element_type=f32) + b1
        m = _gelu_tanh(m)
        y = jnp.dot(m.astype(bf16), w2, preferred_element_type=f32) + b2
        x2 = x1 + y

        # -------- PEG: depthwise 3x3 conv over the HxW spatial tokens --------
        # conv[i] = sum_t w9[t] * x2[i + (kh-1)*W + (kw-1)]  (zero padded),
        # realized as 9 XLU row-rolls with host-built boundary masks.
        conv = jnp.zeros((S, D), f32)
        for kh2 in range(3):
            for kw2 in range(3):
                t = 3 * kh2 + kw2
                sh = (kh2 - 1) * W + (kw2 - 1)
                src = x2 if sh == 0 else pltpu.roll(x2, shift=(-sh) % S, axis=0)
                conv = conv + (src * taps[t]) * w9[t:t + 1, :]
        conv = conv + cb
        x3 = x2 + sp * (conv - x2)                       # cls / pad rows pass through
        new_x = x3 + y                                   # EncoderBlock: peg(x) + y

        act_ref[b] = new_x                               # carry layer->layer in VMEM

        @pl.when(l == nl - 1)
        def _():
            o_ref[b] = _ln(new_x, lnfg, lnfb, eps)       # final encoder LayerNorm


# ----------------------------------------------------------------------------
# host-side wrapper: pads/stacks, builds masks, ONE pallas_call
# ----------------------------------------------------------------------------

def _peg_masks(S_real, S_pad, H, W):
    """tap[t, i, 0] = 1 iff the t-th 3x3 tap of token row i is in bounds."""
    tap = np.zeros((9, S_pad, 1), np.float32)
    for i in range(1, S_real):
        r, c = divmod(i - 1, W)
        for kh in range(3):
            for kw in range(3):
                if 0 <= r + kh - 1 < H and 0 <= c + kw - 1 < W:
                    tap[3 * kh + kw, i, 0] = 1.0
    sp = np.zeros((S_pad, 1), np.float32)
    sp[1:S_real, 0] = 1.0
    return jnp.asarray(tap), jnp.asarray(sp)


def encoder_forward(x, params, num_heads, H, W, bt=None):
    B, S, D = x.shape
    assert D % num_heads == 0 and S == 1 + H * W
    layers = params['layers']
    L = len(layers)
    M = layers[0]['w1'].shape[1]
    hd = D // num_heads
    bf16 = jnp.bfloat16

    # ---- shape prep: pad S to a sublane multiple, block the batch ----
    S_pad = -(-S // 8) * 8
    if bt is None:
        # weight-reuse factor; TODO(synk): on v7x keep bt <= B//2 so both
        # TensorCores get at least one "parallel" block each.
        bt = min(B, 8)
    B_pad = -(-B // bt) * bt
    x_p = jnp.pad(x, ((0, B_pad - B), (0, S_pad - S), (0, 0)))

    # ---- stack per-layer weights; fold 1/sqrt(hd) into the Q projection ----
    scale = 1.0 / math.sqrt(hd)
    st = lambda name: jnp.stack([lp[name] for lp in layers])
    ln1g = st('ln1_g').reshape(L, 1, D)
    ln1b = st('ln1_b').reshape(L, 1, D)
    wqkv = st('wqkv').at[:, :, :D].multiply(scale).astype(bf16)   # (L, D, 3D)
    bqkv = st('bqkv').at[:, :D].multiply(scale).reshape(L, 1, 3 * D)
    wo = st('wo').astype(bf16)                                    # (L, D, D)
    bo = st('bo').reshape(L, 1, D)
    ln2g = st('ln2_g').reshape(L, 1, D)
    ln2b = st('ln2_b').reshape(L, 1, D)
    w1 = st('w1').astype(bf16)                                    # (L, D, M)
    b1 = st('b1').reshape(L, 1, M)
    w2 = st('w2').astype(bf16)                                    # (L, M, D)
    b2 = st('b2').reshape(L, 1, D)
    convw = st('conv_w').reshape(L, 9, D)                         # [3*kh+kw]
    convb = st('conv_b').reshape(L, 1, D)
    lnfg = params['ln_g'].reshape(1, D)
    lnfb = params['ln_b'].reshape(1, D)

    tap_mask, sp_mask = _peg_masks(S, S_pad, H, W)

    lspec = lambda a, c: pl.BlockSpec((1, a, c), lambda b, l: (l, 0, 0))
    in_specs = [
        pl.BlockSpec((bt, S_pad, D), lambda b, l: (b, 0, 0)),   # x (read at l==0)
        pl.BlockSpec((9, S_pad, 1), lambda b, l: (0, 0, 0)),    # PEG tap masks
        pl.BlockSpec((S_pad, 1), lambda b, l: (0, 0)),          # spatial-row mask
        lspec(1, D), lspec(1, D),                               # ln1 gamma/beta
        lspec(D, 3 * D), lspec(1, 3 * D),                       # wqkv, bqkv
        lspec(D, D), lspec(1, D),                               # wo, bo
        lspec(1, D), lspec(1, D),                               # ln2 gamma/beta
        lspec(D, M), lspec(1, M),                               # w1, b1
        lspec(M, D), lspec(1, D),                               # w2, b2
        lspec(9, D), lspec(1, D),                               # conv w, conv b
        pl.BlockSpec((1, D), lambda b, l: (0, 0)),              # final LN gamma
        pl.BlockSpec((1, D), lambda b, l: (0, 0)),              # final LN beta
    ]
    out_specs = pl.BlockSpec((bt, S_pad, D), lambda b, l: (b, 0, 0))

    # VMEM budget: double-buffered bf16 weights + the (Bt,S,D) activation blocks.
    wbytes = 2 * 2 * (D * 3 * D + D * D + 2 * D * M)
    abytes = 3 * 2 * bt * S_pad * D * 4
    vmem_limit = int(min(96 * 2 ** 20, max(32 * 2 ** 20, 3 * (wbytes + abytes))))
    # TODO(synk): on v7x (64 MiB VMEM) tile w1/w2 over an extra K/N grid axis
    # (f32 accumulator scratch) and lower this limit; on v5e deepen the weight
    # stream with pipeline_mode=pl.Buffered(3) on wqkv/w1/w2.

    kernel = partial(_encoder_kernel, num_heads=num_heads, S_real=S, W=W, eps=1e-6)
    out = pl.pallas_call(
        kernel,
        out_shape=jax.ShapeDtypeStruct((B_pad, S_pad, D), jnp.float32),
        grid=(B_pad // bt, L),
        in_specs=in_specs,
        out_specs=out_specs,
        scratch_shapes=[pltpu.VMEM((bt, S_pad, D), jnp.float32)],  # residual carry
        compiler_params=pltpu.CompilerParams(
            dimension_semantics=("parallel", "arbitrary"),
            vmem_limit_bytes=vmem_limit),
    )(x_p, tap_mask, sp_mask, ln1g, ln1b, wqkv, bqkv, wo, bo,
      ln2g, ln2b, w1, b1, w2, b2, convw, convb, lnfg, lnfb)
    return out[:B, :S, :]


# ----------------------------------------------------------------------------
# Deterministic synthetic parameters (no checkpoint)
# ----------------------------------------------------------------------------

def init_params(key, num_layers, D, mlp_dim):
    layers = []
    f32 = jnp.float32
    for _ in range(num_layers):
        key, *ks = jax.random.split(key, 13)
        lp = dict(
            ln1_g=jnp.ones((D,), f32),
            ln1_b=jnp.zeros((D,), f32),
            wqkv=0.05 * jax.random.normal(ks[0], (D, 3 * D), f32),
            bqkv=0.01 * jax.random.normal(ks[1], (3 * D,), f32),
            wo=0.05 * jax.random.normal(ks[2], (D, D), f32),
            bo=0.01 * jax.random.normal(ks[3], (D,), f32),
            ln2_g=jnp.ones((D,), f32) + 0.01 * jax.random.normal(ks[4], (D,), f32),
            ln2_b=0.01 * jax.random.normal(ks[5], (D,), f32),
            w1=0.05 * jax.random.normal(ks[6], (D, mlp_dim), f32),
            b1=1e-6 * jax.random.normal(ks[7], (mlp_dim,), f32),
            w2=0.05 * jax.random.normal(ks[8], (mlp_dim, D), f32),
            b2=1e-6 * jax.random.normal(ks[9], (D,), f32),
            conv_w=0.1 * jax.random.normal(ks[10], (3, 3, D), f32),  # [kh, kw, d]
            conv_b=0.01 * jax.random.normal(ks[11], (D,), f32),
        )
        layers.append(lp)
    return dict(layers=layers,
                ln_g=jnp.ones((D,), f32),
                ln_b=jnp.zeros((D,), f32))


# ----------------------------------------------------------------------------
# Pure-JAX f32 reference (mirrors the PyTorch forward) for validation
# ----------------------------------------------------------------------------

def _ref_ln(x, g, b, eps=1e-6):
    m = x.mean(-1, keepdims=True)
    v = ((x - m) ** 2).mean(-1, keepdims=True)
    return (x - m) / jnp.sqrt(v + eps) * g + b


def _ref_mha(x, wqkv, bqkv, wo, bo, nh):
    B, S, D = x.shape
    hd = D // nh
    qkv = x @ wqkv + bqkv
    q, k, v = qkv[..., :D], qkv[..., D:2 * D], qkv[..., 2 * D:]
    q = q.reshape(B, S, nh, hd).transpose(0, 2, 1, 3)
    k = k.reshape(B, S, nh, hd).transpose(0, 2, 1, 3)
    v = v.reshape(B, S, nh, hd).transpose(0, 2, 1, 3)
    a = jax.nn.softmax(q @ k.transpose(0, 1, 3, 2) / math.sqrt(hd), axis=-1)
    o = (a @ v).transpose(0, 2, 1, 3).reshape(B, S, D)
    return o @ wo + bo


def _ref_block(x, p, nh, H, W):
    h = _ref_mha(_ref_ln(x, p['ln1_g'], p['ln1_b']), p['wqkv'], p['bqkv'],
                 p['wo'], p['bo'], nh)
    x1 = h + x
    y = _ref_ln(x1, p['ln2_g'], p['ln2_b'])
    y = jax.nn.gelu(y @ p['w1'] + p['b1'], approximate=False) @ p['w2'] + p['b2']
    x2 = x1 + y
    B, S, D = x2.shape
    cls_tok, sp = x2[:, :1], x2[:, 1:].reshape(B, H, W, D)
    conv = jax.lax.conv_general_dilated(
        sp, p['conv_w'].reshape(3, 3, 1, D), (1, 1), 'SAME',
        dimension_numbers=('NHWC', 'HWIO', 'NHWC'),
        feature_group_count=D) + p['conv_b']
    x3 = jnp.concatenate([cls_tok, conv.reshape(B, S - 1, D)], axis=1)
    return x3 + y


def _ref_encoder(x, params, nh, H, W):
    for lp in params['layers']:
        x = _ref_block(x, lp, nh, H, W)
    return _ref_ln(x, params['ln_g'], params['ln_b'])


# ----------------------------------------------------------------------------

if __name__ == "__main__":
    B, D, num_heads, mlp_dim, num_layers = 2, 32, 4, 64, 2
    H = W = 4
    S = 1 + H * W                                  # class token + H*W patches

    key = jax.random.PRNGKey(0)
    kx, kp = jax.random.split(key)
    x = jax.random.normal(kx, (B, S, D), jnp.float32)
    params = init_params(kp, num_layers, D, mlp_dim)

    fwd = jax.jit(encoder_forward, static_argnums=(2, 3, 4))
    out = jax.block_until_ready(fwd(x, params, num_heads, H, W))

    ref = _ref_encoder(x, params, num_heads, H, W)
    max_err = float(jnp.max(jnp.abs(out - ref)))

    assert out.shape == (B, S, D)
    assert bool(jnp.isfinite(out).all())
    # tolerance covers bf16 MXU operands + tanh-GELU + approx-reciprocal softmax
    assert max_err < 5e-2, f"max abs diff vs reference too large: {max_err}"
    print("KERNEL_OK")
</pallas_src>

<mosaic_0001>
module attributes {stable_mosaic.version = 11 : i64} {
  func.func @_encoder_kernel(%arg0: i32, %arg1: i32, %arg2: memref<2x24x32xf32, #tpu.memory_space<vmem>>, %arg3: memref<9x24x1xf32, #tpu.memory_space<vmem>>, %arg4: memref<24x1xf32, #tpu.memory_space<vmem>>, %arg5: memref<1x1x32xf32, #tpu.memory_space<vmem>>, %arg6: memref<1x1x32xf32, #tpu.memory_space<vmem>>, %arg7: memref<1x32x96xbf16, #tpu.memory_space<vmem>>, %arg8: memref<1x1x96xf32, #tpu.memory_space<vmem>>, %arg9: memref<1x32x32xbf16, #tpu.memory_space<vmem>>, %arg10: memref<1x1x32xf32, #tpu.memory_space<vmem>>, %arg11: memref<1x1x32xf32, #tpu.memory_space<vmem>>, %arg12: memref<1x1x32xf32, #tpu.memory_space<vmem>>, %arg13: memref<1x32x64xbf16, #tpu.memory_space<vmem>>, %arg14: memref<1x1x64xf32, #tpu.memory_space<vmem>>, %arg15: memref<1x64x32xbf16, #tpu.memory_space<vmem>>, %arg16: memref<1x1x32xf32, #tpu.memory_space<vmem>>, %arg17: memref<1x9x32xf32, #tpu.memory_space<vmem>>, %arg18: memref<1x1x32xf32, #tpu.memory_space<vmem>>, %arg19: memref<1x32xf32, #tpu.memory_space<vmem>>, %arg20: memref<1x32xf32, #tpu.memory_space<vmem>>, %arg21: memref<2x24x32xf32, #tpu.memory_space<vmem>>, %arg22: memref<2x24x32xf32, #tpu.memory_space<vmem>>) attributes {dimension_semantics = [#tpu.dimension_semantics<parallel>, #tpu.dimension_semantics<arbitrary>], iteration_bounds = array<i64: 1, 2>, scalar_prefetch = 0 : i64, scratch_operands = 1 : i64, tpu.core_type = #tpu.core_type<tc>, window_params = [{transform_indices = @transform_0, window_bounds = array<i64: 2, 24, 32>}, {pipeline_mode = #tpu.pipeline_mode<synchronous>, transform_indices = @transform_1, window_bounds = array<i64: 9, 24, 1>}, {pipeline_mode = #tpu.pipeline_mode<synchronous>, transform_indices = @transform_2, window_bounds = array<i64: 24, 1>}, {transform_indices = @transform_3, window_bounds = array<i64: 1, 1, 32>}, {transform_indices = @transform_4, window_bounds = array<i64: 1, 1, 32>}, {transform_indices = @transform_5, window_bounds = array<i64: 1, 32, 96>}, {transform_indices = @transform_6, window_bounds = array<i64: 1, 1, 96>}, {transform_indices = @transform_7, window_bounds = array<i64: 1, 32, 32>}, {transform_indices = @transform_8, window_bounds = array<i64: 1, 1, 32>}, {transform_indices = @transform_9, window_bounds = array<i64: 1, 1, 32>}, {transform_indices = @transform_10, window_bounds = array<i64: 1, 1, 32>}, {transform_indices = @transform_11, window_bounds = array<i64: 1, 32, 64>}, {transform_indices = @transform_12, window_bounds = array<i64: 1, 1, 64>}, {transform_indices = @transform_13, window_bounds = array<i64: 1, 64, 32>}, {transform_indices = @transform_14, window_bounds = array<i64: 1, 1, 32>}, {transform_indices = @transform_15, window_bounds = array<i64: 1, 9, 32>}, {transform_indices = @transform_16, window_bounds = array<i64: 1, 1, 32>}, {pipeline_mode = #tpu.pipeline_mode<synchronous>, transform_indices = @transform_17, window_bounds = array<i64: 1, 32>}, {pipeline_mode = #tpu.pipeline_mode<synchronous>, transform_indices = @transform_18, window_bounds = array<i64: 1, 32>}, {transform_indices = @transform_19, window_bounds = array<i64: 2, 24, 32>}]} {
    %c0_i32 = arith.constant 0 : i32
    %0 = arith.cmpi eq, %arg1, %c0_i32 : i32
    %1 = arith.extui %0 : i1 to i32
    %c0_i32_0 = arith.constant 0 : i32
    %2 = arith.cmpi ne, %1, %c0_i32_0 : i32
    scf.if %2 {
      %c0_166 = arith.constant 0 : index
      %c0_167 = arith.constant 0 : index
      %c0_168 = arith.constant 0 : index
      %520 = vector.load %arg2[%c0_166, %c0_167, %c0_168] : memref<2x24x32xf32, #tpu.memory_space<vmem>>, vector<2x24x32xf32>
      %c0_169 = arith.constant 0 : index
      %c0_170 = arith.constant 0 : index
      %c0_171 = arith.constant 0 : index
      %521 = vector.load %arg22[%c0_169, %c0_170, %c0_171] : memref<2x24x32xf32, #tpu.memory_space<vmem>>, vector<2x24x32xf32>
      tpu.vector_store %arg22[%c0_169, %c0_170, %c0_171], %520 {strides = array<i32>} : memref<2x24x32xf32, #tpu.memory_space<vmem>>, vector<2x24x32xf32>,
    } else {
    }
    %c0 = arith.constant 0 : index
    %c0_1 = arith.constant 0 : index
    %c0_2 = arith.constant 0 : index
    %3 = vector.load %arg5[%c0, %c0_1, %c0_2] : memref<1x1x32xf32, #tpu.memory_space<vmem>>, vector<1x1x32xf32>
    %4 = vector.shape_cast %3 : vector<1x1x32xf32> to vector<1x32xf32>
    %c0_3 = arith.constant 0 : index
    %c0_4 = arith.constant 0 : index
    %c0_5 = arith.constant 0 : index
    %5 = vector.load %arg6[%c0_3, %c0_4, %c0_5] : memref<1x1x32xf32, #tpu.memory_space<vmem>>, vector<1x1x32xf32>
    %6 = vector.shape_cast %5 : vector<1x1x32xf32> to vector<1x32xf32>
    %c0_6 = arith.constant 0 : index
    %c0_7 = arith.constant 0 : index
    %c0_8 = arith.constant 0 : index
    %7 = vector.load %arg7[%c0_6, %c0_7, %c0_8] : memref<1x32x96xbf16, #tpu.memory_space<vmem>>, vector<1x32x96xbf16>
    %8 = vector.shape_cast %7 : vector<1x32x96xbf16> to vector<32x96xbf16>
    %c0_9 = arith.constant 0 : index
    %c0_10 = arith.constant 0 : index
    %c0_11 = arith.constant 0 : index
    %9 = vector.load %arg8[%c0_9, %c0_10, %c0_11] : memref<1x1x96xf32, #tpu.memory_space<vmem>>, vector<1x1x96xf32>
    %10 = vector.shape_cast %9 : vector<1x1x96xf32> to vector<1x96xf32>
    %c0_12 = arith.constant 0 : index
    %c0_13 = arith.constant 0 : index
    %c0_14 = arith.constant 0 : index
    %11 = vector.load %arg9[%c0_12, %c0_13, %c0_14] : memref<1x32x32xbf16, #tpu.memory_space<vmem>>, vector<1x32x32xbf16>
    %12 = vector.shape_cast %11 : vector<1x32x32xbf16> to vector<32x32xbf16>
    %c0_15 = arith.constant 0 : index
    %c0_16 = arith.constant 0 : index
    %c0_17 = arith.constant 0 : index
    %13 = vector.load %arg10[%c0_15, %c0_16, %c0_17] : memref<1x1x32xf32, #tpu.memory_space<vmem>>, vector<1x1x32xf32>
    %14 = vector.shape_cast %13 : vector<1x1x32xf32> to vector<1x32xf32>
    %c0_18 = arith.constant 0 : index
    %c0_19 = arith.constant 0 : index
    %c0_20 = arith.constant 0 : index
    %15 = vector.load %arg11[%c0_18, %c0_19, %c0_20] : memref<1x1x32xf32, #tpu.memory_space<vmem>>, vector<1x1x32xf32>
    %16 = vector.shape_cast %15 : vector<1x1x32xf32> to vector<1x32xf32>
    %c0_21 = arith.constant 0 : index
    %c0_22 = arith.constant 0 : index
    %c0_23 = arith.constant 0 : index
    %17 = vector.load %arg12[%c0_21, %c0_22, %c0_23] : memref<1x1x32xf32, #tpu.memory_space<vmem>>, vector<1x1x32xf32>
    %18 = vector.shape_cast %17 : vector<1x1x32xf32> to vector<1x32xf32>
    %c0_24 = arith.constant 0 : index
    %c0_25 = arith.constant 0 : index
    %c0_26 = arith.constant 0 : index
    %19 = vector.load %arg13[%c0_24, %c0_25, %c0_26] : memref<1x32x64xbf16, #tpu.memory_space<vmem>>, vector<1x32x64xbf16>
    %20 = vector.shape_cast %19 : vector<1x32x64xbf16> to vector<32x64xbf16>
    %c0_27 = arith.constant 0 : index
    %c0_28 = arith.constant 0 : index
    %c0_29 = arith.constant 0 : index
    %21 = vector.load %arg14[%c0_27, %c0_28, %c0_29] : memref<1x1x64xf32, #tpu.memory_space<vmem>>, vector<1x1x64xf32>
    %22 = vector.shape_cast %21 : vector<1x1x64xf32> to vector<1x64xf32>
    %c0_30 = arith.constant 0 : index
    %c0_31 = arith.constant 0 : index
    %c0_32 = arith.constant 0 : index
    %23 = vector.load %arg15[%c0_30, %c0_31, %c0_32] : memref<1x64x32xbf16, #tpu.memory_space<vmem>>, vector<1x64x32xbf16>
    %24 = vector.shape_cast %23 : vector<1x64x32xbf16> to vector<64x32xbf16>
    %c0_33 = arith.constant 0 : index
    %c0_34 = arith.constant 0 : index
    %c0_35 = arith.constant 0 : index
    %25 = vector.load %arg16[%c0_33, %c0_34, %c0_35] : memref<1x1x32xf32, #tpu.memory_space<vmem>>, vector<1x1x32xf32>
    %26 = vector.shape_cast %25 : vector<1x1x32xf32> to vector<1x32xf32>
    %c0_36 = arith.constant 0 : index
    %c0_37 = arith.constant 0 : index
    %c0_38 = arith.constant 0 : index
    %27 = vector.load %arg17[%c0_36, %c0_37, %c0_38] : memref<1x9x32xf32, #tpu.memory_space<vmem>>, vector<1x9x32xf32>
    %28 = vector.shape_cast %27 : vector<1x9x32xf32> to vector<9x32xf32>
    %c0_39 = arith.constant 0 : index
    %c0_40 = arith.constant 0 : index
    %c0_41 = arith.constant 0 : index
    %29 = vector.load %arg18[%c0_39, %c0_40, %c0_41] : memref<1x1x32xf32, #tpu.memory_space<vmem>>, vector<1x1x32xf32>
    %30 = vector.shape_cast %29 : vector<1x1x32xf32> to vector<1x32xf32>
    %c0_42 = arith.constant 0 : index
    %c0_43 = arith.constant 0 : index
    %31 = vector.load %arg19[%c0_42, %c0_43] : memref<1x32xf32, #tpu.memory_space<vmem>>, vector<1x32xf32>
    %c0_44 = arith.constant 0 : index
    %c0_45 = arith.constant 0 : index
    %32 = vector.load %arg20[%c0_44, %c0_45] : memref<1x32xf32, #tpu.memory_space<vmem>>, vector<1x32xf32>
    %c0_46 = arith.constant 0 : index
    %c0_47 = arith.constant 0 : index
    %33 = vector.load %arg4[%c0_46, %c0_47] : memref<24x1xf32, #tpu.memory_space<vmem>>, vector<24x1xf32>
    %c0_48 = arith.constant 0 : index
    %c0_49 = arith.constant 0 : index
    %c0_50 = arith.constant 0 : index
    %34 = vector.load %arg3[%c0_48, %c0_49, %c0_50] : memref<9x24x1xf32, #tpu.memory_space<vmem>>, vector<1x24x1xf32>
    %35 = vector.shape_cast %34 : vector<1x24x1xf32> to vector<24x1xf32>
    %c1 = arith.constant 1 : index
    %c0_51 = arith.constant 0 : index
    %c0_52 = arith.constant 0 : index
    %36 = vector.load %arg3[%c1, %c0_51, %c0_52] : memref<9x24x1xf32, #tpu.memory_space<vmem>>, vector<1x24x1xf32>
    %37 = vector.shape_cast %36 : vector<1x24x1xf32> to vector<24x1xf32>
    %c2 = arith.constant 2 : index
    %c0_53 = arith.constant 0 : index
    %c0_54 = arith.constant 0 : index
    %38 = vector.load %arg3[%c2, %c0_53, %c0_54] : memref<9x24x1xf32, #tpu.memory_space<vmem>>, vector<1x24x1xf32>
    %39 = vector.shape_cast %38 : vector<1x24x1xf32> to vector<24x1xf32>
    %c3 = arith.constant 3 : index
    %c0_55 = arith.constant 0 : index
    %c0_56 = arith.constant 0 : index
    %40 = vector.load %arg3[%c3, %c0_55, %c0_56] : memref<9x24x1xf32, #tpu.memory_space<vmem>>, vector<1x24x1xf32>
    %41 = vector.shape_cast %40 : vector<1x24x1xf32> to vector<24x1xf32>
    %c4 = arith.constant 4 : index
    %c0_57 = arith.constant 0 : index
    %c0_58 = arith.constant 0 : index
    %42 = vector.load %arg3[%c4, %c0_57, %c0_58] : memref<9x24x1xf32, #tpu.memory_space<vmem>>, vector<1x24x1xf32>
    %43 = vector.shape_cast %42 : vector<1x24x1xf32> to vector<24x1xf32>
    %c5 = arith.constant 5 : index
    %c0_59 = arith.constant 0 : index
    %c0_60 = arith.constant 0 : index
    %44 = vector.load %arg3[%c5, %c0_59, %c0_60] : memref<9x24x1xf32, #tpu.memory_space<vmem>>, vector<1x24x1xf32>
    %45 = vector.shape_cast %44 : vector<1x24x1xf32> to vector<24x1xf32>
    %c6 = arith.constant 6 : index
    %c0_61 = arith.constant 0 : index
    %c0_62 = arith.constant 0 : index
    %46 = vector.load %arg3[%c6, %c0_61, %c0_62] : memref<9x24x1xf32, #tpu.memory_space<vmem>>, vector<1x24x1xf32>
    %47 = vector.shape_cast %46 : vector<1x24x1xf32> to vector<24x1xf32>
    %c7 = arith.constant 7 : index
    %c0_63 = arith.constant 0 : index
    %c0_64 = arith.constant 0 : index
    %48 = vector.load %arg3[%c7, %c0_63, %c0_64] : memref<9x24x1xf32, #tpu.memory_space<vmem>>, vector<1x24x1xf32>
    %49 = vector.shape_cast %48 : vector<1x24x1xf32> to vector<24x1xf32>
    %c8 = arith.constant 8 : index
    %c0_65 = arith.constant 0 : index
    %c0_66 = arith.constant 0 : index
    %50 = vector.load %arg3[%c8, %c0_65, %c0_66] : memref<9x24x1xf32, #tpu.memory_space<vmem>>, vector<1x24x1xf32>
    %51 = vector.shape_cast %50 : vector<1x24x1xf32> to vector<24x1xf32>
    %52 = tpu.iota {dimensions = array<i32: 1>} : vector<1x24xi32>
    %c17_i32 = arith.constant 17 : i32
    %53 = vector.broadcast %c17_i32 : i32 to vector<1x24xi32>
    %54 = arith.cmpi slt, %52, %53 : vector<1x24xi32>
    %cst = arith.constant 0.000000e+00 : f32
    %cst_67 = arith.constant -1.000000e+30 : f32
    %55 = vector.broadcast %cst : f32 to vector<1x24xf32>
    %56 = vector.broadcast %cst_67 : f32 to vector<1x24xf32>
    %57 = arith.select %54, %55, %56 : vector<1x24xi1>, vector<1x24xf32>
    %c0_68 = arith.constant 0 : index
    %c0_69 = arith.constant 0 : index
    %c0_70 = arith.constant 0 : index
    %58 = vector.load %arg22[%c0_68, %c0_69, %c0_70] : memref<2x24x32xf32, #tpu.memory_space<vmem>>, vector<1x24x32xf32>
    %59 = vector.shape_cast %58 : vector<1x24x32xf32> to vector<24x32xf32>
    %cst_71 = arith.constant dense<0.000000e+00> : vector<24xf32>
    %60 = vector.multi_reduction <add>, %59, %cst_71 [1] : vector<24x32xf32> to vector<24xf32>
    %61 = vector.shape_cast %60 : vector<24xf32> to vector<24x1xf32>
    %cst_72 = arith.constant 3.200000e+01 : f32
    %62 = vector.broadcast %cst_72 : f32 to vector<24x1xf32>
    %63 = arith.divf %61, %62 : vector<24x1xf32>
    %64 = arith.mulf %59, %59 : vector<24x32xf32>
    %cst_73 = arith.constant dense<0.000000e+00> : vector<24xf32>
    %65 = vector.multi_reduction <add>, %64, %cst_73 [1] : vector<24x32xf32> to vector<24xf32>
    %66 = vector.shape_cast %65 : vector<24xf32> to vector<24x1xf32>
    %cst_74 = arith.constant 3.200000e+01 : f32
    %67 = vector.broadcast %cst_74 : f32 to vector<24x1xf32>
    %68 = arith.divf %66, %67 : vector<24x1xf32>
    %69 = arith.mulf %63, %63 : vector<24x1xf32>
    %70 = arith.subf %68, %69 : vector<24x1xf32>
    %cst_75 = arith.constant 0.000000e+00 : f32
    %71 = vector.broadcast %cst_75 : f32 to vector<24x1xf32>
    %72 = arith.maximumf %70, %71 : vector<24x1xf32>
    %73 = vector.broadcast %63 : vector<24x1xf32> to vector<24x32xf32>
    %74 = arith.subf %59, %73 : vector<24x32xf32>
    %cst_76 = arith.constant 9.99999997E-7 : f32
    %75 = vector.broadcast %cst_76 : f32 to vector<24x1xf32>
    %76 = arith.addf %72, %75 : vector<24x1xf32>
    %77 = math.rsqrt %76 : vector<24x1xf32>
    %78 = vector.broadcast %77 : vector<24x1xf32> to vector<24x32xf32>
    %79 = arith.mulf %74, %78 : vector<24x32xf32>
    %80 = vector.broadcast %4 : vector<1x32xf32> to vector<24x32xf32>
    %81 = arith.mulf %79, %80 : vector<24x32xf32>
    %82 = vector.broadcast %6 : vector<1x32xf32> to vector<24x32xf32>
    %83 = arith.addf %81, %82 : vector<24x32xf32>
    %84 = arith.truncf %83 : vector<24x32xf32> to vector<24x32xbf16>
    %cst_77 = arith.constant dense<0.000000e+00> : vector<24x96xf32>
    %85 = tpu.matmul %84, %8, %cst_77 {dimension_numbers = #tpu.dot_dimension_numbers<[1], [0], [0], [1], [0, 0, 1, 1], [], []>} : vector<24x32xbf16>, vector<32x96xbf16>, vector<24x96xf32> -> vector<24x96xf32>
    %86 = vector.broadcast %10 : vector<1x96xf32> to vector<24x96xf32>
    %87 = arith.addf %85, %86 : vector<24x96xf32>
    %88 = arith.truncf %87 : vector<24x96xf32> to vector<24x96xbf16>
    %89 = vector.extract_strided_slice %88 {offsets = [0, 0], sizes = [24, 8], strides = [1, 1]} : vector<24x96xbf16> to vector<24x8xbf16>
    %90 = vector.extract_strided_slice %88 {offsets = [0, 32], sizes = [24, 8], strides = [1, 1]} : vector<24x96xbf16> to vector<24x8xbf16>
    %91 = vector.extract_strided_slice %88 {offsets = [0, 64], sizes = [24, 8], strides = [1, 1]} : vector<24x96xbf16> to vector<24x8xbf16>
    %cst_78 = arith.constant dense<0.000000e+00> : vector<24x24xf32>
    %92 = tpu.matmul %89, %90, %cst_78 {dimension_numbers = #tpu.dot_dimension_numbers<[1], [1], [0], [0], [0, 0, 1, 0], [], []>} : vector<24x8xbf16>, vector<24x8xbf16>, vector<24x24xf32> -> vector<24x24xf32>
    %93 = vector.broadcast %57 : vector<1x24xf32> to vector<24x24xf32>
    %94 = arith.addf %92, %93 : vector<24x24xf32>
    %cst_79 = arith.constant dense<0xFF800000> : vector<24xf32>
    %95 = vector.multi_reduction <maximumf>, %94, %cst_79 [1] : vector<24x24xf32> to vector<24xf32>
    %96 = vector.shape_cast %95 : vector<24xf32> to vector<24x1xf32>
    %97 = vector.broadcast %96 : vector<24x1xf32> to vector<24x24xf32>
    %98 = arith.subf %94, %97 : vector<24x24xf32>
    %99 = math.exp %98 : vector<24x24xf32>
    %cst_80 = arith.constant dense<0.000000e+00> : vector<24xf32>
    %100 = vector.multi_reduction <add>, %99, %cst_80 [1] : vector<24x24xf32> to vector<24xf32>
    %101 = vector.shape_cast %100 : vector<24xf32> to vector<24x1xf32>
    %102 = tpu.reciprocal %101 {approx = true} : vector<24x1xf32> -> vector<24x1xf32>
    %103 = vector.broadcast %102 : vector<24x1xf32> to vector<24x24xf32>
    %104 = arith.mulf %99, %103 : vector<24x24xf32>
    %105 = arith.truncf %104 : vector<24x24xf32> to vector<24x24xbf16>
    %cst_81 = arith.constant dense<0.000000e+00> : vector<24x8xf32>
    %106 = tpu.matmul %105, %91, %cst_81 {dimension_numbers = #tpu.dot_dimension_numbers<[1], [0], [0], [1], [0, 0, 1, 1], [], []>} : vector<24x24xbf16>, vector<24x8xbf16>, vector<24x8xf32> -> vector<24x8xf32>
    %107 = vector.extract_strided_slice %88 {offsets = [0, 8], sizes = [24, 8], strides = [1, 1]} : vector<24x96xbf16> to vector<24x8xbf16>
    %108 = vector.extract_strided_slice %88 {offsets = [0, 40], sizes = [24, 8], strides = [1, 1]} : vector<24x96xbf16> to vector<24x8xbf16>
    %109 = vector.extract_strided_slice %88 {offsets = [0, 72], sizes = [24, 8], strides = [1, 1]} : vector<24x96xbf16> to vector<24x8xbf16>
    %cst_82 = arith.constant dense<0.000000e+00> : vector<24x24xf32>
    %110 = tpu.matmul %107, %108, %cst_82 {dimension_numbers = #tpu.dot_dimension_numbers<[1], [1], [0], [0], [0, 0, 1, 0], [], []>} : vector<24x8xbf16>, vector<24x8xbf16>, vector<24x24xf32> -> vector<24x24xf32>
    %111 = vector.broadcast %57 : vector<1x24xf32> to vector<24x24xf32>
    %112 = arith.addf %110, %111 : vector<24x24xf32>
    %cst_83 = arith.constant dense<0xFF800000> : vector<24xf32>
    %113 = vector.multi_reduction <maximumf>, %112, %cst_83 [1] : vector<24x24xf32> to vector<24xf32>
    %114 = vector.shape_cast %113 : vector<24xf32> to vector<24x1xf32>
    %115 = vector.broadcast %114 : vector<24x1xf32> to vector<24x24xf32>
    %116 = arith.subf %112, %115 : vector<24x24xf32>
    %117 = math.exp %116 : vector<24x24xf32>
    %cst_84 = arith.constant dense<0.000000e+00> : vector<24xf32>
    %118 = vector.multi_reduction <add>, %117, %cst_84 [1] : vector<24x24xf32> to vector<24xf32>
    %119 = vector.shape_cast %118 : vector<24xf32> to vector<24x1xf32>
    %120 = tpu.reciprocal %119 {approx = true} : vector<24x1xf32> -> vector<24x1xf32>
    %121 = vector.broadcast %120 : vector<24x1xf32> to vector<24x24xf32>
    %122 = arith.mulf %117, %121 : vector<24x24xf32>
    %123 = arith.truncf %122 : vector<24x24xf32> to vector<24x24xbf16>
    %cst_85 = arith.constant dense<0.000000e+00> : vector<24x8xf32>
    %124 = tpu.matmul %123, %109, %cst_85 {dimension_numbers = #tpu.dot_dimension_numbers<[1], [0], [0], [1], [0, 0, 1, 1], [], []>} : vector<24x24xbf16>, vector<24x8xbf16>, vector<24x8xf32> -> vector<24x8xf32>
    %125 = vector.extract_strided_slice %88 {offsets = [0, 16], sizes = [24, 8], strides = [1, 1]} : vector<24x96xbf16> to vector<24x8xbf16>
    %126 = vector.extract_strided_slice %88 {offsets = [0, 48], sizes = [24, 8], strides = [1, 1]} : vector<24x96xbf16> to vector<24x8xbf16>
    %127 = vector.extract_strided_slice %88 {offsets = [0, 80], sizes = [24, 8], strides = [1, 1]} : vector<24x96xbf16> to vector<24x8xbf16>
    %cst_86 = arith.constant dense<0.000000e+00> : vector<24x24xf32>
    %128 = tpu.matmul %125, %126, %cst_86 {dimension_numbers = #tpu.dot_dimension_numbers<[1], [1], [0], [0], [0, 0, 1, 0], [], []>} : vector<24x8xbf16>, vector<24x8xbf16>, vector<24x24xf32> -> vector<24x24xf32>
    %129 = vector.broadcast %57 : vector<1x24xf32> to vector<24x24xf32>
    %130 = arith.addf %128, %129 : vector<24x24xf32>
    %cst_87 = arith.constant dense<0xFF800000> : vector<24xf32>
    %131 = vector.multi_reduction <maximumf>, %130, %cst_87 [1] : vector<24x24xf32> to vector<24xf32>
    %132 = vector.shape_cast %131 : vector<24xf32> to vector<24x1xf32>
    %133 = vector.broadcast %132 : vector<24x1xf32> to vector<24x24xf32>
    %134 = arith.subf %130, %133 : vector<24x24xf32>
    %135 = math.exp %134 : vector<24x24xf32>
    %cst_88 = arith.constant dense<0.000000e+00> : vector<24xf32>
    %136 = vector.multi_reduction <add>, %135, %cst_88 [1] : vector<24x24xf32> to vector<24xf32>
    %137 = vector.shape_cast %136 : vector<24xf32> to vector<24x1xf32>
    %138 = tpu.reciprocal %137 {approx = true} : vector<24x1xf32> -> vector<24x1xf32>
    %139 = vector.broadcast %138 : vector<24x1xf32> to vector<24x24xf32>
    %140 = arith.mulf %135, %139 : vector<24x24xf32>
    %141 = arith.truncf %140 : vector<24x24xf32> to vector<24x24xbf16>
    %cst_89 = arith.constant dense<0.000000e+00> : vector<24x8xf32>
    %142 = tpu.matmul %141, %127, %cst_89 {dimension_numbers = #tpu.dot_dimension_numbers<[1], [0], [0], [1], [0, 0, 1, 1], [], []>} : vector<24x24xbf16>, vector<24x8xbf16>, vector<24x8xf32> -> vector<24x8xf32>
    %143 = vector.extract_strided_slice %88 {offsets = [0, 24], sizes = [24, 8], strides = [1, 1]} : vector<24x96xbf16> to vector<24x8xbf16>
    %144 = vector.extract_strided_slice %88 {offsets = [0, 56], sizes = [24, 8], strides = [1, 1]} : vector<24x96xbf16> to vector<24x8xbf16>
    %145 = vector.extract_strided_slice %88 {offsets = [0, 88], sizes = [24, 8], strides = [1, 1]} : vector<24x96xbf16> to vector<24x8xbf16>
    %cst_90 = arith.constant dense<0.000000e+00> : vector<24x24xf32>
    %146 = tpu.matmul %143, %144, %cst_90 {dimension_numbers = #tpu.dot_dimension_numbers<[1], [1], [0], [0], [0, 0, 1, 0], [], []>} : vector<24x8xbf16>, vector<24x8xbf16>, vector<24x24xf32> -> vector<24x24xf32>
    %147 = vector.broadcast %57 : vector<1x24xf32> to vector<24x24xf32>
    %148 = arith.addf %146, %147 : vector<24x24xf32>
    %cst_91 = arith.constant dense<0xFF800000> : vector<24xf32>
    %149 = vector.multi_reduction <maximumf>, %148, %cst_91 [1] : vector<24x24xf32> to vector<24xf32>
    %150 = vector.shape_cast %149 : vector<24xf32> to vector<24x1xf32>
    %151 = vector.broadcast %150 : vector<24x1xf32> to vector<24x24xf32>
    %152 = arith.subf %148, %151 : vector<24x24xf32>
    %153 = math.exp %152 : vector<24x24xf32>
    %cst_92 = arith.constant dense<0.000000e+00> : vector<24xf32>
    %154 = vector.multi_reduction <add>, %153, %cst_92 [1] : vector<24x24xf32> to vector<24xf32>
    %155 = vector.shape_cast %154 : vector<24xf32> to vector<24x1xf32>
    %156 = tpu.reciprocal %155 {approx = true} : vector<24x1xf32> -> vector<24x1xf32>
    %157 = vector.broadcast %156 : vector<24x1xf32> to vector<24x24xf32>
    %158 = arith.mulf %153, %157 : vector<24x24xf32>
    %159 = arith.truncf %158 : vector<24x24xf32> to vector<24x24xbf16>
    %cst_93 = arith.constant dense<0.000000e+00> : vector<24x8xf32>
    %160 = tpu.matmul %159, %145, %cst_93 {dimension_numbers = #tpu.dot_dimension_numbers<[1], [0], [0], [1], [0, 0, 1, 1], [], []>} : vector<24x24xbf16>, vector<24x8xbf16>, vector<24x8xf32> -> vector<24x8xf32>
    %161 = tpu.concatenate %106, %124, %142, %160 in 1 : vector<24x8xf32>, vector<24x8xf32>, vector<24x8xf32>, vector<24x8xf32> -> vector<24x32xf32>
    %162 = arith.truncf %161 : vector<24x32xf32> to vector<24x32xbf16>
    %cst_94 = arith.constant dense<0.000000e+00> : vector<24x32xf32>
    %163 = tpu.matmul %162, %12, %cst_94 {dimension_numbers = #tpu.dot_dimension_numbers<[1], [0], [0], [1], [0, 0, 1, 1], [], []>} : vector<24x32xbf16>, vector<32x32xbf16>, vector<24x32xf32> -> vector<24x32xf32>
    %164 = vector.broadcast %14 : vector<1x32xf32> to vector<24x32xf32>
    %165 = arith.addf %163, %164 : vector<24x32xf32>
    %166 = arith.addf %59, %165 : vector<24x32xf32>
    %cst_95 = arith.constant dense<0.000000e+00> : vector<24xf32>
    %167 = vector.multi_reduction <add>, %166, %cst_95 [1] : vector<24x32xf32> to vector<24xf32>
    %168 = vector.shape_cast %167 : vector<24xf32> to vector<24x1xf32>
    %cst_96 = arith.constant 3.200000e+01 : f32
    %169 = vector.broadcast %cst_96 : f32 to vector<24x1xf32>
    %170 = arith.divf %168, %169 : vector<24x1xf32>
    %171 = arith.mulf %166, %166 : vector<24x32xf32>
    %cst_97 = arith.constant dense<0.000000e+00> : vector<24xf32>
    %172 = vector.multi_reduction <add>, %171, %cst_97 [1] : vector<24x32xf32> to vector<24xf32>
    %173 = vector.shape_cast %172 : vector<24xf32> to vector<24x1xf32>
    %cst_98 = arith.constant 3.200000e+01 : f32
    %174 = vector.broadcast %cst_98 : f32 to vector<24x1xf32>
    %175 = arith.divf %173, %174 : vector<24x1xf32>
    %176 = arith.mulf %170, %170 : vector<24x1xf32>
    %177 = arith.subf %175, %176 : vector<24x1xf32>
    %cst_99 = arith.constant 0.000000e+00 : f32
    %178 = vector.broadcast %cst_99 : f32 to vector<24x1xf32>
    %179 = arith.maximumf %177, %178 : vector<24x1xf32>
    %180 = vector.broadcast %170 : vector<24x1xf32> to vector<24x32xf32>
    %181 = arith.subf %166, %180 : vector<24x32xf32>
    %cst_100 = arith.constant 9.99999997E-7 : f32
    %182 = vector.broadcast %cst_100 : f32 to vector<24x1xf32>
    %183 = arith.addf %179, %182 : vector<24x1xf32>
    %184 = math.rsqrt %183 : vector<24x1xf32>
    %185 = vector.broadcast %184 : vector<24x1xf32> to vector<24x32xf32>
    %186 = arith.mulf %181, %185 : vector<24x32xf32>
    %187 = vector.broadcast %16 : vector<1x32xf32> to vector<24x32xf32>
    %188 = arith.mulf %186, %187 : vector<24x32xf32>
    %189 = vector.broadcast %18 : vector<1x32xf32> to vector<24x32xf32>
    %190 = arith.addf %188, %189 : vector<24x32xf32>
    %191 = arith.truncf %190 : vector<24x32xf32> to vector<24x32xbf16>
    %cst_101 = arith.constant dense<0.000000e+00> : vector<24x64xf32>
    %192 = tpu.matmul %191, %20, %cst_101 {dimension_numbers = #tpu.dot_dimension_numbers<[1], [0], [0], [1], [0, 0, 1, 1], [], []>} : vector<24x32xbf16>, vector<32x64xbf16>, vector<24x64xf32> -> vector<24x64xf32>
    %193 = vector.broadcast %22 : vector<1x64xf32> to vector<24x64xf32>
    %194 = arith.addf %192, %193 : vector<24x64xf32>
    %cst_102 = arith.constant 5.000000e-01 : f32
    %195 = vector.broadcast %cst_102 : f32 to vector<24x64xf32>
    %196 = arith.mulf %195, %194 : vector<24x64xf32>
    %cst_103 = arith.constant 4.471500e-02 : f32
    %197 = vector.broadcast %cst_103 : f32 to vector<24x64xf32>
    %198 = arith.mulf %197, %194 : vector<24x64xf32>
    %199 = arith.mulf %198, %194 : vector<24x64xf32>
    %200 = arith.mulf %199, %194 : vector<24x64xf32>
    %201 = arith.addf %194, %200 : vector<24x64xf32>
    %cst_104 = arith.constant 0.797884583 : f32
    %202 = vector.broadcast %cst_104 : f32 to vector<24x64xf32>
    %203 = arith.mulf %202, %201 : vector<24x64xf32>
    %204 = math.tanh %203 : vector<24x64xf32>
    %cst_105 = arith.constant 1.000000e+00 : f32
    %205 = vector.broadcast %cst_105 : f32 to vector<24x64xf32>
    %206 = arith.addf %205, %204 : vector<24x64xf32>
    %207 = arith.mulf %196, %206 : vector<24x64xf32>
    %208 = arith.truncf %207 : vector<24x64xf32> to vector<24x64xbf16>
    %cst_106 = arith.constant dense<0.000000e+00> : vector<24x32xf32>
    %209 = tpu.matmul %208, %24, %cst_106 {dimension_numbers = #tpu.dot_dimension_numbers<[1], [0], [0], [1], [0, 0, 1, 1], [], []>} : vector<24x64xbf16>, vector<64x32xbf16>, vector<24x32xf32> -> vector<24x32xf32>
    %210 = vector.broadcast %26 : vector<1x32xf32> to vector<24x32xf32>
    %211 = arith.addf %209, %210 : vector<24x32xf32>
    %212 = arith.addf %166, %211 : vector<24x32xf32>
    %cst_107 = arith.constant 0.000000e+00 : f32
    %213 = vector.broadcast %cst_107 : f32 to vector<24x32xf32>
    %c5_i32 = arith.constant 5 : i32
    %214 = tpu.dynamic_rotate %212 by %c5_i32 dim 0 : vector<24x32xf32>, i32 -> vector<24x32xf32>
    %215 = vector.broadcast %35 : vector<24x1xf32> to vector<24x32xf32>
    %216 = arith.mulf %214, %215 : vector<24x32xf32>
    %217 = vector.extract_strided_slice %28 {offsets = [0, 0], sizes = [1, 32], strides = [1, 1]} : vector<9x32xf32> to vector<1x32xf32>
    %218 = vector.broadcast %217 : vector<1x32xf32> to vector<24x32xf32>
    %219 = arith.mulf %216, %218 : vector<24x32xf32>
    %220 = arith.addf %213, %219 : vector<24x32xf32>
    %c4_i32 = arith.constant 4 : i32
    %221 = tpu.dynamic_rotate %212 by %c4_i32 dim 0 : vector<24x32xf32>, i32 -> vector<24x32xf32>
    %222 = vector.broadcast %37 : vector<24x1xf32> to vector<24x32xf32>
    %223 = arith.mulf %221, %222 : vector<24x32xf32>
    %224 = vector.extract_strided_slice %28 {offsets = [1, 0], sizes = [1, 32], strides = [1, 1]} : vector<9x32xf32> to vector<1x32xf32>
    %225 = vector.broadcast %224 : vector<1x32xf32> to vector<24x32xf32>
    %226 = arith.mulf %223, %225 : vector<24x32xf32>
    %227 = arith.addf %220, %226 : vector<24x32xf32>
    %c3_i32 = arith.constant 3 : i32
    %228 = tpu.dynamic_rotate %212 by %c3_i32 dim 0 : vector<24x32xf32>, i32 -> vector<24x32xf32>
    %229 = vector.broadcast %39 : vector<24x1xf32> to vector<24x32xf32>
    %230 = arith.mulf %228, %229 : vector<24x32xf32>
    %231 = vector.extract_strided_slice %28 {offsets = [2, 0], sizes = [1, 32], strides = [1, 1]} : vector<9x32xf32> to vector<1x32xf32>
    %232 = vector.broadcast %231 : vector<1x32xf32> to vector<24x32xf32>
    %233 = arith.mulf %230, %232 : vector<24x32xf32>
    %234 = arith.addf %227, %233 : vector<24x32xf32>
    %c1_i32 = arith.constant 1 : i32
    %235 = tpu.dynamic_rotate %212 by %c1_i32 dim 0 : vector<24x32xf32>, i32 -> vector<24x32xf32>
    %236 = vector.broadcast %41 : vector<24x1xf32> to vector<24x32xf32>
    %237 = arith.mulf %235, %236 : vector<24x32xf32>
    %238 = vector.extract_strided_slice %28 {offsets = [3, 0], sizes = [1, 32], strides = [1, 1]} : vector<9x32xf32> to vector<1x32xf32>
    %239 = vector.broadcast %238 : vector<1x32xf32> to vector<24x32xf32>
    %240 = arith.mulf %237, %239 : vector<24x32xf32>
    %241 = arith.addf %234, %240 : vector<24x32xf32>
    %242 = vector.broadcast %43 : vector<24x1xf32> to vector<24x32xf32>
    %243 = arith.mulf %212, %242 : vector<24x32xf32>
    %244 = vector.extract_strided_slice %28 {offsets = [4, 0], sizes = [1, 32], strides = [1, 1]} : vector<9x32xf32> to vector<1x32xf32>
    %245 = vector.broadcast %244 : vector<1x32xf32> to vector<24x32xf32>
    %246 = arith.mulf %243, %245 : vector<24x32xf32>
    %247 = arith.addf %241, %246 : vector<24x32xf32>
    %c23_i32 = arith.constant 23 : i32
    %248 = tpu.dynamic_rotate %212 by %c23_i32 dim 0 : vector<24x32xf32>, i32 -> vector<24x32xf32>
    %249 = vector.broadcast %45 : vector<24x1xf32> to vector<24x32xf32>
    %250 = arith.mulf %248, %249 : vector<24x32xf32>
    %251 = vector.extract_strided_slice %28 {offsets = [5, 0], sizes = [1, 32], strides = [1, 1]} : vector<9x32xf32> to vector<1x32xf32>
    %252 = vector.broadcast %251 : vector<1x32xf32> to vector<24x32xf32>
    %253 = arith.mulf %250, %252 : vector<24x32xf32>
    %254 = arith.addf %247, %253 : vector<24x32xf32>
    %c21_i32 = arith.constant 21 : i32
    %255 = tpu.dynamic_rotate %212 by %c21_i32 dim 0 : vector<24x32xf32>, i32 -> vector<24x32xf32>
    %256 = vector.broadcast %47 : vector<24x1xf32> to vector<24x32xf32>
    %257 = arith.mulf %255, %256 : vector<24x32xf32>
    %258 = vector.extract_strided_slice %28 {offsets = [6, 0], sizes = [1, 32], strides = [1, 1]} : vector<9x32xf32> to vector<1x32xf32>
    %259 = vector.broadcast %258 : vector<1x32xf32> to vector<24x32xf32>
    %260 = arith.mulf %257, %259 : vector<24x32xf32>
    %261 = arith.addf %254, %260 : vector<24x32xf32>
    %c20_i32 = arith.constant 20 : i32
    %262 = tpu.dynamic_rotate %212 by %c20_i32 dim 0 : vector<24x32xf32>, i32 -> vector<24x32xf32>
    %263 = vector.broadcast %49 : vector<24x1xf32> to vector<24x32xf32>
    %264 = arith.mulf %262, %263 : vector<24x32xf32>
    %265 = vector.extract_strided_slice %28 {offsets = [7, 0], sizes = [1, 32], strides = [1, 1]} : vector<9x32xf32> to vector<1x32xf32>
    %266 = vector.broadcast %265 : vector<1x32xf32> to vector<24x32xf32>
    %267 = arith.mulf %264, %266 : vector<24x32xf32>
    %268 = arith.addf %261, %267 : vector<24x32xf32>
    %c19_i32 = arith.constant 19 : i32
    %269 = tpu.dynamic_rotate %212 by %c19_i32 dim 0 : vector<24x32xf32>, i32 -> vector<24x32xf32>
    %270 = vector.broadcast %51 : vector<24x1xf32> to vector<24x32xf32>
    %271 = arith.mulf %269, %270 : vector<24x32xf32>
    %272 = vector.extract_strided_slice %28 {offsets = [8, 0], sizes = [1, 32], strides = [1, 1]} : vector<9x32xf32> to vector<1x32xf32>
    %273 = vector.broadcast %272 : vector<1x32xf32> to vector<24x32xf32>
    %274 = arith.mulf %271, %273 : vector<24x32xf32>
    %275 = arith.addf %268, %274 : vector<24x32xf32>
    %276 = vector.broadcast %30 : vector<1x32xf32> to vector<24x32xf32>
    %277 = arith.addf %275, %276 : vector<24x32xf32>
    %278 = arith.subf %277, %212 : vector<24x32xf32>
    %279 = vector.broadcast %33 : vector<24x1xf32> to vector<24x32xf32>
    %280 = arith.mulf %279, %278 : vector<24x32xf32>
    %281 = arith.addf %212, %280 : vector<24x32xf32>
    %282 = arith.addf %281, %211 : vector<24x32xf32>
    %c0_108 = arith.constant 0 : index
    %c0_109 = arith.constant 0 : index
    %c0_110 = arith.constant 0 : index
    %283 = vector.load %arg22[%c0_108, %c0_109, %c0_110] : memref<2x24x32xf32, #tpu.memory_space<vmem>>, vector<1x24x32xf32>
    %284 = vector.shape_cast %283 : vector<1x24x32xf32> to vector<24x32xf32>
    %285 = vector.shape_cast %282 : vector<24x32xf32> to vector<1x24x32xf32>
    tpu.vector_store %arg22[%c0_108, %c0_109, %c0_110], %285 {strides = array<i32>} : memref<2x24x32xf32, #tpu.memory_space<vmem>>, vector<1x24x32xf32>,
    %c1_i32_111 = arith.constant 1 : i32
    %286 = arith.cmpi eq, %arg1, %c1_i32_111 : i32
    %287 = arith.extui %286 : i1 to i32
    %c0_i32_112 = arith.constant 0 : i32
    %288 = arith.cmpi ne, %287, %c0_i32_112 : i32
    scf.if %288 {
      %cst_166 = arith.constant dense<0.000000e+00> : vector<24xf32>
      %520 = vector.multi_reduction <add>, %282, %cst_166 [1] : vector<24x32xf32> to vector<24xf32>
      %521 = vector.shape_cast %520 : vector<24xf32> to vector<24x1xf32>
      %cst_167 = arith.constant 3.200000e+01 : f32
      %522 = vector.broadcast %cst_167 : f32 to vector<24x1xf32>
      %523 = arith.divf %521, %522 : vector<24x1xf32>
      %524 = arith.mulf %282, %282 : vector<24x32xf32>
      %cst_168 = arith.constant dense<0.000000e+00> : vector<24xf32>
      %525 = vector.multi_reduction <add>, %524, %cst_168 [1] : vector<24x32xf32> to vector<24xf32>
      %526 = vector.shape_cast %525 : vector<24xf32> to vector<24x1xf32>
      %cst_169 = arith.constant 3.200000e+01 : f32
      %527 = vector.broadcast %cst_169 : f32 to vector<24x1xf32>
      %528 = arith.divf %526, %527 : vector<24x1xf32>
      %529 = arith.mulf %523, %523 : vector<24x1xf32>
      %530 = arith.subf %528, %529 : vector<24x1xf32>
      %cst_170 = arith.constant 0.000000e+00 : f32
      %531 = vector.broadcast %cst_170 : f32 to vector<24x1xf32>
      %532 = arith.maximumf %530, %531 : vector<24x1xf32>
      %533 = vector.broadcast %523 : vector<24x1xf32> to vector<24x32xf32>
      %534 = arith.subf %282, %533 : vector<24x32xf32>
      %cst_171 = arith.constant 9.99999997E-7 : f32
      %535 = vector.broadcast %cst_171 : f32 to vector<24x1xf32>
      %536 = arith.addf %532, %535 : vector<24x1xf32>
      %537 = math.rsqrt %536 : vector<24x1xf32>
      %538 = vector.broadcast %537 : vector<24x1xf32> to vector<24x32xf32>
      %539 = arith.mulf %534, %538 : vector<24x32xf32>
      %540 = vector.broadcast %31 : vector<1x32xf32> to vector<24x32xf32>
      %541 = arith.mulf %539, %540 : vector<24x32xf32>
      %542 = vector.broadcast %32 : vector<1x32xf32> to vector<24x32xf32>
      %543 = arith.addf %541, %542 : vector<24x32xf32>
      %c0_172 = arith.constant 0 : index
      %c0_173 = arith.constant 0 : index
      %c0_174 = arith.constant 0 : index
      %544 = vector.load %arg21[%c0_172, %c0_173, %c0_174] : memref<2x24x32xf32, #tpu.memory_space<vmem>>, vector<1x24x32xf32>
      %545 = vector.shape_cast %544 : vector<1x24x32xf32> to vector<24x32xf32>
      %546 = vector.shape_cast %543 : vector<24x32xf32> to vector<1x24x32xf32>
      tpu.vector_store %arg21[%c0_172, %c0_173, %c0_174], %546 {strides = array<i32>} : memref<2x24x32xf32, #tpu.memory_space<vmem>>, vector<1x24x32xf32>,
    } else {
    }
    %c1_113 = arith.constant 1 : index
    %c0_114 = arith.constant 0 : index
    %c0_115 = arith.constant 0 : index
    %289 = vector.load %arg22[%c1_113, %c0_114, %c0_115] : memref<2x24x32xf32, #tpu.memory_space<vmem>>, vector<1x24x32xf32>
    %290 = vector.shape_cast %289 : vector<1x24x32xf32> to vector<24x32xf32>
    %cst_116 = arith.constant dense<0.000000e+00> : vector<24xf32>
    %291 = vector.multi_reduction <add>, %290, %cst_116 [1] : vector<24x32xf32> to vector<24xf32>
    %292 = vector.shape_cast %291 : vector<24xf32> to vector<24x1xf32>
    %cst_117 = arith.constant 3.200000e+01 : f32
    %293 = vector.broadcast %cst_117 : f32 to vector<24x1xf32>
    %294 = arith.divf %292, %293 : vector<24x1xf32>
    %295 = arith.mulf %290, %290 : vector<24x32xf32>
    %cst_118 = arith.constant dense<0.000000e+00> : vector<24xf32>
    %296 = vector.multi_reduction <add>, %295, %cst_118 [1] : vector<24x32xf32> to vector<24xf32>
    %297 = vector.shape_cast %296 : vector<24xf32> to vector<24x1xf32>
    %cst_119 = arith.constant 3.200000e+01 : f32
    %298 = vector.broadcast %cst_119 : f32 to vector<24x1xf32>
    %299 = arith.divf %297, %298 : vector<24x1xf32>
    %300 = arith.mulf %294, %294 : vector<24x1xf32>
    %301 = arith.subf %299, %300 : vector<24x1xf32>
    %cst_120 = arith.constant 0.000000e+00 : f32
    %302 = vector.broadcast %cst_120 : f32 to vector<24x1xf32>
    %303 = arith.maximumf %301, %302 : vector<24x1xf32>
    %304 = vector.broadcast %294 : vector<24x1xf32> to vector<24x32xf32>
    %305 = arith.subf %290, %304 : vector<24x32xf32>
    %cst_121 = arith.constant 9.99999997E-7 : f32
    %306 = vector.broadcast %cst_121 : f32 to vector<24x1xf32>
    %307 = arith.addf %303, %306 : vector<24x1xf32>
    %308 = math.rsqrt %307 : vector<24x1xf32>
    %309 = vector.broadcast %308 : vector<24x1xf32> to vector<24x32xf32>
    %310 = arith.mulf %305, %309 : vector<24x32xf32>
    %311 = vector.broadcast %4 : vector<1x32xf32> to vector<24x32xf32>
    %312 = arith.mulf %310, %311 : vector<24x32xf32>
    %313 = vector.broadcast %6 : vector<1x32xf32> to vector<24x32xf32>
    %314 = arith.addf %312, %313 : vector<24x32xf32>
    %315 = arith.truncf %314 : vector<24x32xf32> to vector<24x32xbf16>
    %cst_122 = arith.constant dense<0.000000e+00> : vector<24x96xf32>
    %316 = tpu.matmul %315, %8, %cst_122 {dimension_numbers = #tpu.dot_dimension_numbers<[1], [0], [0], [1], [0, 0, 1, 1], [], []>} : vector<24x32xbf16>, vector<32x96xbf16>, vector<24x96xf32> -> vector<24x96xf32>
    %317 = vector.broadcast %10 : vector<1x96xf32> to vector<24x96xf32>
    %318 = arith.addf %316, %317 : vector<24x96xf32>
    %319 = arith.truncf %318 : vector<24x96xf32> to vector<24x96xbf16>
    %320 = vector.extract_strided_slice %319 {offsets = [0, 0], sizes = [24, 8], strides = [1, 1]} : vector<24x96xbf16> to vector<24x8xbf16>
    %321 = vector.extract_strided_slice %319 {offsets = [0, 32], sizes = [24, 8], strides = [1, 1]} : vector<24x96xbf16> to vector<24x8xbf16>
    %322 = vector.extract_strided_slice %319 {offsets = [0, 64], sizes = [24, 8], strides = [1, 1]} : vector<24x96xbf16> to vector<24x8xbf16>
    %cst_123 = arith.constant dense<0.000000e+00> : vector<24x24xf32>
    %323 = tpu.matmul %320, %321, %cst_123 {dimension_numbers = #tpu.dot_dimension_numbers<[1], [1], [0], [0], [0, 0, 1, 0], [], []>} : vector<24x8xbf16>, vector<24x8xbf16>, vector<24x24xf32> -> vector<24x24xf32>
    %324 = vector.broadcast %57 : vector<1x24xf32> to vector<24x24xf32>
    %325 = arith.addf %323, %324 : vector<24x24xf32>
    %cst_124 = arith.constant dense<0xFF800000> : vector<24xf32>
    %326 = vector.multi_reduction <maximumf>, %325, %cst_124 [1] : vector<24x24xf32> to vector<24xf32>
    %327 = vector.shape_cast %326 : vector<24xf32> to vector<24x1xf32>
    %328 = vector.broadcast %327 : vector<24x1xf32> to vector<24x24xf32>
    %329 = arith.subf %325, %328 : vector<24x24xf32>
    %330 = math.exp %329 : vector<24x24xf32>
    %cst_125 = arith.constant dense<0.000000e+00> : vector<24xf32>
    %331 = vector.multi_reduction <add>, %330, %cst_125 [1] : vector<24x24xf32> to vector<24xf32>
    %332 = vector.shape_cast %331 : vector<24xf32> to vector<24x1xf32>
    %333 = tpu.reciprocal %332 {approx = true} : vector<24x1xf32> -> vector<24x1xf32>
    %334 = vector.broadcast %333 : vector<24x1xf32> to vector<24x24xf32>
    %335 = arith.mulf %330, %334 : vector<24x24xf32>
    %336 = arith.truncf %335 : vector<24x24xf32> to vector<24x24xbf16>
    %cst_126 = arith.constant dense<0.000000e+00> : vector<24x8xf32>
    %337 = tpu.matmul %336, %322, %cst_126 {dimension_numbers = #tpu.dot_dimension_numbers<[1], [0], [0], [1], [0, 0, 1, 1], [], []>} : vector<24x24xbf16>, vector<24x8xbf16>, vector<24x8xf32> -> vector<24x8xf32>
    %338 = vector.extract_strided_slice %319 {offsets = [0, 8], sizes = [24, 8], strides = [1, 1]} : vector<24x96xbf16> to vector<24x8xbf16>
    %339 = vector.extract_strided_slice %319 {offsets = [0, 40], sizes = [24, 8], strides = [1, 1]} : vector<24x96xbf16> to vector<24x8xbf16>
    %340 = vector.extract_strided_slice %319 {offsets = [0, 72], sizes = [24, 8], strides = [1, 1]} : vector<24x96xbf16> to vector<24x8xbf16>
    %cst_127 = arith.constant dense<0.000000e+00> : vector<24x24xf32>
    %341 = tpu.matmul %338, %339, %cst_127 {dimension_numbers = #tpu.dot_dimension_numbers<[1], [1], [0], [0], [0, 0, 1, 0], [], []>} : vector<24x8xbf16>, vector<24x8xbf16>, vector<24x24xf32> -> vector<24x24xf32>
    %342 = vector.broadcast %57 : vector<1x24xf32> to vector<24x24xf32>
    %343 = arith.addf %341, %342 : vector<24x24xf32>
    %cst_128 = arith.constant dense<0xFF800000> : vector<24xf32>
    %344 = vector.multi_reduction <maximumf>, %343, %cst_128 [1] : vector<24x24xf32> to vector<24xf32>
    %345 = vector.shape_cast %344 : vector<24xf32> to vector<24x1xf32>
    %346 = vector.broadcast %345 : vector<24x1xf32> to vector<24x24xf32>
    %347 = arith.subf %343, %346 : vector<24x24xf32>
    %348 = math.exp %347 : vector<24x24xf32>
    %cst_129 = arith.constant dense<0.000000e+00> : vector<24xf32>
    %349 = vector.multi_reduction <add>, %348, %cst_129 [1] : vector<24x24xf32> to vector<24xf32>
    %350 = vector.shape_cast %349 : vector<24xf32> to vector<24x1xf32>
    %351 = tpu.reciprocal %350 {approx = true} : vector<24x1xf32> -> vector<24x1xf32>
    %352 = vector.broadcast %351 : vector<24x1xf32> to vector<24x24xf32>
    %353 = arith.mulf %348, %352 : vector<24x24xf32>
    %354 = arith.truncf %353 : vector<24x24xf32> to vector<24x24xbf16>
    %cst_130 = arith.constant dense<0.000000e+00> : vector<24x8xf32>
    %355 = tpu.matmul %354, %340, %cst_130 {dimension_numbers = #tpu.dot_dimension_numbers<[1], [0], [0], [1], [0, 0, 1, 1], [], []>} : vector<24x24xbf16>, vector<24x8xbf16>, vector<24x8xf32> -> vector<24x8xf32>
    %356 = vector.extract_strided_slice %319 {offsets = [0, 16], sizes = [24, 8], strides = [1, 1]} : vector<24x96xbf16> to vector<24x8xbf16>
    %357 = vector.extract_strided_slice %319 {offsets = [0, 48], sizes = [24, 8], strides = [1, 1]} : vector<24x96xbf16> to vector<24x8xbf16>
    %358 = vector.extract_strided_slice %319 {offsets = [0, 80], sizes = [24, 8], strides = [1, 1]} : vector<24x96xbf16> to vector<24x8xbf16>
    %cst_131 = arith.constant dense<0.000000e+00> : vector<24x24xf32>
    %359 = tpu.matmul %356, %357, %cst_131 {dimension_numbers = #tpu.dot_dimension_numbers<[1], [1], [0], [0], [0, 0, 1, 0], [], []>} : vector<24x8xbf16>, vector<24x8xbf16>, vector<24x24xf32> -> vector<24x24xf32>
    %360 = vector.broadcast %57 : vector<1x24xf32> to vector<24x24xf32>
    %361 = arith.addf %359, %360 : vector<24x24xf32>
    %cst_132 = arith.constant dense<0xFF800000> : vector<24xf32>
    %362 = vector.multi_reduction <maximumf>, %361, %cst_132 [1] : vector<24x24xf32> to vector<24xf32>
    %363 = vector.shape_cast %362 : vector<24xf32> to vector<24x1xf32>
    %364 = vector.broadcast %363 : vector<24x1xf32> to vector<24x24xf32>
    %365 = arith.subf %361, %364 : vector<24x24xf32>
    %366 = math.exp %365 : vector<24x24xf32>
    %cst_133 = arith.constant dense<0.000000e+00> : vector<24xf32>
    %367 = vector.multi_reduction <add>, %366, %cst_133 [1] : vector<24x24xf32> to vector<24xf32>
    %368 = vector.shape_cast %367 : vector<24xf32> to vector<24x1xf32>
    %369 = tpu.reciprocal %368 {approx = true} : vector<24x1xf32> -> vector<24x1xf32>
    %370 = vector.broadcast %369 : vector<24x1xf32> to vector<24x24xf32>
    %371 = arith.mulf %366, %370 : vector<24x24xf32>
    %372 = arith.truncf %371 : vector<24x24xf32> to vector<24x24xbf16>
    %cst_134 = arith.constant dense<0.000000e+00> : vector<24x8xf32>
    %373 = tpu.matmul %372, %358, %cst_134 {dimension_numbers = #tpu.dot_dimension_numbers<[1], [0], [0], [1], [0, 0, 1, 1], [], []>} : vector<24x24xbf16>, vector<24x8xbf16>, vector<24x8xf32> -> vector<24x8xf32>
    %374 = vector.extract_strided_slice %319 {offsets = [0, 24], sizes = [24, 8], strides = [1, 1]} : vector<24x96xbf16> to vector<24x8xbf16>
    %375 = vector.extract_strided_slice %319 {offsets = [0, 56], sizes = [24, 8], strides = [1, 1]} : vector<24x96xbf16> to vector<24x8xbf16>
    %376 = vector.extract_strided_slice %319 {offsets = [0, 88], sizes = [24, 8], strides = [1, 1]} : vector<24x96xbf16> to vector<24x8xbf16>
    %cst_135 = arith.constant dense<0.000000e+00> : vector<24x24xf32>
    %377 = tpu.matmul %374, %375, %cst_135 {dimension_numbers = #tpu.dot_dimension_numbers<[1], [1], [0], [0], [0, 0, 1, 0], [], []>} : vector<24x8xbf16>, vector<24x8xbf16>, vector<24x24xf32> -> vector<24x24xf32>
    %378 = vector.broadcast %57 : vector<1x24xf32> to vector<24x24xf32>
    %379 = arith.addf %377, %378 : vector<24x24xf32>
    %cst_136 = arith.constant dense<0xFF800000> : vector<24xf32>
    %380 = vector.multi_reduction <maximumf>, %379, %cst_136 [1] : vector<24x24xf32> to vector<24xf32>
    %381 = vector.shape_cast %380 : vector<24xf32> to vector<24x1xf32>
    %382 = vector.broadcast %381 : vector<24x1xf32> to vector<24x24xf32>
    %383 = arith.subf %379, %382 : vector<24x24xf32>
    %384 = math.exp %383 : vector<24x24xf32>
    %cst_137 = arith.constant dense<0.000000e+00> : vector<24xf32>
    %385 = vector.multi_reduction <add>, %384, %cst_137 [1] : vector<24x24xf32> to vector<24xf32>
    %386 = vector.shape_cast %385 : vector<24xf32> to vector<24x1xf32>
    %387 = tpu.reciprocal %386 {approx = true} : vector<24x1xf32> -> vector<24x1xf32>
    %388 = vector.broadcast %387 : vector<24x1xf32> to vector<24x24xf32>
    %389 = arith.mulf %384, %388 : vector<24x24xf32>
    %390 = arith.truncf %389 : vector<24x24xf32> to vector<24x24xbf16>
    %cst_138 = arith.constant dense<0.000000e+00> : vector<24x8xf32>
    %391 = tpu.matmul %390, %376, %cst_138 {dimension_numbers = #tpu.dot_dimension_numbers<[1], [0], [0], [1], [0, 0, 1, 1], [], []>} : vector<24x24xbf16>, vector<24x8xbf16>, vector<24x8xf32> -> vector<24x8xf32>
    %392 = tpu.concatenate %337, %355, %373, %391 in 1 : vector<24x8xf32>, vector<24x8xf32>, vector<24x8xf32>, vector<24x8xf32> -> vector<24x32xf32>
    %393 = arith.truncf %392 : vector<24x32xf32> to vector<24x32xbf16>
    %cst_139 = arith.constant dense<0.000000e+00> : vector<24x32xf32>
    %394 = tpu.matmul %393, %12, %cst_139 {dimension_numbers = #tpu.dot_dimension_numbers<[1], [0], [0], [1], [0, 0, 1, 1], [], []>} : vector<24x32xbf16>, vector<32x32xbf16>, vector<24x32xf32> -> vector<24x32xf32>
    %395 = vector.broadcast %14 : vector<1x32xf32> to vector<24x32xf32>
    %396 = arith.addf %394, %395 : vector<24x32xf32>
    %397 = arith.addf %290, %396 : vector<24x32xf32>
    %cst_140 = arith.constant dense<0.000000e+00> : vector<24xf32>
    %398 = vector.multi_reduction <add>, %397, %cst_140 [1] : vector<24x32xf32> to vector<24xf32>
    %399 = vector.shape_cast %398 : vector<24xf32> to vector<24x1xf32>
    %cst_141 = arith.constant 3.200000e+01 : f32
    %400 = vector.broadcast %cst_141 : f32 to vector<24x1xf32>
    %401 = arith.divf %399, %400 : vector<24x1xf32>
    %402 = arith.mulf %397, %397 : vector<24x32xf32>
    %cst_142 = arith.constant dense<0.000000e+00> : vector<24xf32>
    %403 = vector.multi_reduction <add>, %402, %cst_142 [1] : vector<24x32xf32> to vector<24xf32>
    %404 = vector.shape_cast %403 : vector<24xf32> to vector<24x1xf32>
    %cst_143 = arith.constant 3.200000e+01 : f32
    %405 = vector.broadcast %cst_143 : f32 to vector<24x1xf32>
    %406 = arith.divf %404, %405 : vector<24x1xf32>
    %407 = arith.mulf %401, %401 : vector<24x1xf32>
    %408 = arith.subf %406, %407 : vector<24x1xf32>
    %cst_144 = arith.constant 0.000000e+00 : f32
    %409 = vector.broadcast %cst_144 : f32 to vector<24x1xf32>
    %410 = arith.maximumf %408, %409 : vector<24x1xf32>
    %411 = vector.broadcast %401 : vector<24x1xf32> to vector<24x32xf32>
    %412 = arith.subf %397, %411 : vector<24x32xf32>
    %cst_145 = arith.constant 9.99999997E-7 : f32
    %413 = vector.broadcast %cst_145 : f32 to vector<24x1xf32>
    %414 = arith.addf %410, %413 : vector<24x1xf32>
    %415 = math.rsqrt %414 : vector<24x1xf32>
    %416 = vector.broadcast %415 : vector<24x1xf32> to vector<24x32xf32>
    %417 = arith.mulf %412, %416 : vector<24x32xf32>
    %418 = vector.broadcast %16 : vector<1x32xf32> to vector<24x32xf32>
    %419 = arith.mulf %417, %418 : vector<24x32xf32>
    %420 = vector.broadcast %18 : vector<1x32xf32> to vector<24x32xf32>
    %421 = arith.addf %419, %420 : vector<24x32xf32>
    %422 = arith.truncf %421 : vector<24x32xf32> to vector<24x32xbf16>
    %cst_146 = arith.constant dense<0.000000e+00> : vector<24x64xf32>
    %423 = tpu.matmul %422, %20, %cst_146 {dimension_numbers = #tpu.dot_dimension_numbers<[1], [0], [0], [1], [0, 0, 1, 1], [], []>} : vector<24x32xbf16>, vector<32x64xbf16>, vector<24x64xf32> -> vector<24x64xf32>
    %424 = vector.broadcast %22 : vector<1x64xf32> to vector<24x64xf32>
    %425 = arith.addf %423, %424 : vector<24x64xf32>
    %cst_147 = arith.constant 5.000000e-01 : f32
    %426 = vector.broadcast %cst_147 : f32 to vector<24x64xf32>
    %427 = arith.mulf %426, %425 : vector<24x64xf32>
    %cst_148 = arith.constant 4.471500e-02 : f32
    %428 = vector.broadcast %cst_148 : f32 to vector<24x64xf32>
    %429 = arith.mulf %428, %425 : vector<24x64xf32>
    %430 = arith.mulf %429, %425 : vector<24x64xf32>
    %431 = arith.mulf %430, %425 : vector<24x64xf32>
    %432 = arith.addf %425, %431 : vector<24x64xf32>
    %cst_149 = arith.constant 0.797884583 : f32
    %433 = vector.broadcast %cst_149 : f32 to vector<24x64xf32>
    %434 = arith.mulf %433, %432 : vector<24x64xf32>
    %435 = math.tanh %434 : vector<24x64xf32>
    %cst_150 = arith.constant 1.000000e+00 : f32
    %436 = vector.broadcast %cst_150 : f32 to vector<24x64xf32>
    %437 = arith.addf %436, %435 : vector<24x64xf32>
    %438 = arith.mulf %427, %437 : vector<24x64xf32>
    %439 = arith.truncf %438 : vector<24x64xf32> to vector<24x64xbf16>
    %cst_151 = arith.constant dense<0.000000e+00> : vector<24x32xf32>
    %440 = tpu.matmul %439, %24, %cst_151 {dimension_numbers = #tpu.dot_dimension_numbers<[1], [0], [0], [1], [0, 0, 1, 1], [], []>} : vector<24x64xbf16>, vector<64x32xbf16>, vector<24x32xf32> -> vector<24x32xf32>
    %441 = vector.broadcast %26 : vector<1x32xf32> to vector<24x32xf32>
    %442 = arith.addf %440, %441 : vector<24x32xf32>
    %443 = arith.addf %397, %442 : vector<24x32xf32>
    %cst_152 = arith.constant 0.000000e+00 : f32
    %444 = vector.broadcast %cst_152 : f32 to vector<24x32xf32>
    %c5_i32_153 = arith.constant 5 : i32
    %445 = tpu.dynamic_rotate %443 by %c5_i32_153 dim 0 : vector<24x32xf32>, i32 -> vector<24x32xf32>
    %446 = vector.broadcast %35 : vector<24x1xf32> to vector<24x32xf32>
    %447 = arith.mulf %445, %446 : vector<24x32xf32>
    %448 = vector.extract_strided_slice %28 {offsets = [0, 0], sizes = [1, 32], strides = [1, 1]} : vector<9x32xf32> to vector<1x32xf32>
    %449 = vector.broadcast %448 : vector<1x32xf32> to vector<24x32xf32>
    %450 = arith.mulf %447, %449 : vector<24x32xf32>
    %451 = arith.addf %444, %450 : vector<24x32xf32>
    %c4_i32_154 = arith.constant 4 : i32
    %452 = tpu.dynamic_rotate %443 by %c4_i32_154 dim 0 : vector<24x32xf32>, i32 -> vector<24x32xf32>
    %453 = vector.broadcast %37 : vector<24x1xf32> to vector<24x32xf32>
    %454 = arith.mulf %452, %453 : vector<24x32xf32>
    %455 = vector.extract_strided_slice %28 {offsets = [1, 0], sizes = [1, 32], strides = [1, 1]} : vector<9x32xf32> to vector<1x32xf32>
    %456 = vector.broadcast %455 : vector<1x32xf32> to vector<24x32xf32>
    %457 = arith.mulf %454, %456 : vector<24x32xf32>
    %458 = arith.addf %451, %457 : vector<24x32xf32>
    %c3_i32_155 = arith.constant 3 : i32
    %459 = tpu.dynamic_rotate %443 by %c3_i32_155 dim 0 : vector<24x32xf32>, i32 -> vector<24x32xf32>
    %460 = vector.broadcast %39 : vector<24x1xf32> to vector<24x32xf32>
    %461 = arith.mulf %459, %460 : vector<24x32xf32>
    %462 = vector.extract_strided_slice %28 {offsets = [2, 0], sizes = [1, 32], strides = [1, 1]} : vector<9x32xf32> to vector<1x32xf32>
    %463 = vector.broadcast %462 : vector<1x32xf32> to vector<24x32xf32>
    %464 = arith.mulf %461, %463 : vector<24x32xf32>
    %465 = arith.addf %458, %464 : vector<24x32xf32>
    %c1_i32_156 = arith.constant 1 : i32
    %466 = tpu.dynamic_rotate %443 by %c1_i32_156 dim 0 : vector<24x32xf32>, i32 -> vector<24x32xf32>
    %467 = vector.broadcast %41 : vector<24x1xf32> to vector<24x32xf32>
    %468 = arith.mulf %466, %467 : vector<24x32xf32>
    %469 = vector.extract_strided_slice %28 {offsets = [3, 0], sizes = [1, 32], strides = [1, 1]} : vector<9x32xf32> to vector<1x32xf32>
    %470 = vector.broadcast %469 : vector<1x32xf32> to vector<24x32xf32>
    %471 = arith.mulf %468, %470 : vector<24x32xf32>
    %472 = arith.addf %465, %471 : vector<24x32xf32>
    %473 = vector.broadcast %43 : vector<24x1xf32> to vector<24x32xf32>
    %474 = arith.mulf %443, %473 : vector<24x32xf32>
    %475 = vector.extract_strided_slice %28 {offsets = [4, 0], sizes = [1, 32], strides = [1, 1]} : vector<9x32xf32> to vector<1x32xf32>
    %476 = vector.broadcast %475 : vector<1x32xf32> to vector<24x32xf32>
    %477 = arith.mulf %474, %476 : vector<24x32xf32>
    %478 = arith.addf %472, %477 : vector<24x32xf32>
    %c23_i32_157 = arith.constant 23 : i32
    %479 = tpu.dynamic_rotate %443 by %c23_i32_157 dim 0 : vector<24x32xf32>, i32 -> vector<24x32xf32>
    %480 = vector.broadcast %45 : vector<24x1xf32> to vector<24x32xf32>
    %481 = arith.mulf %479, %480 : vector<24x32xf32>
    %482 = vector.extract_strided_slice %28 {offsets = [5, 0], sizes = [1, 32], strides = [1, 1]} : vector<9x32xf32> to vector<1x32xf32>
    %483 = vector.broadcast %482 : vector<1x32xf32> to vector<24x32xf32>
    %484 = arith.mulf %481, %483 : vector<24x32xf32>
    %485 = arith.addf %478, %484 : vector<24x32xf32>
    %c21_i32_158 = arith.constant 21 : i32
    %486 = tpu.dynamic_rotate %443 by %c21_i32_158 dim 0 : vector<24x32xf32>, i32 -> vector<24x32xf32>
    %487 = vector.broadcast %47 : vector<24x1xf32> to vector<24x32xf32>
    %488 = arith.mulf %486, %487 : vector<24x32xf32>
    %489 = vector.extract_strided_slice %28 {offsets = [6, 0], sizes = [1, 32], strides = [1, 1]} : vector<9x32xf32> to vector<1x32xf32>
    %490 = vector.broadcast %489 : vector<1x32xf32> to vector<24x32xf32>
    %491 = arith.mulf %488, %490 : vector<24x32xf32>
    %492 = arith.addf %485, %491 : vector<24x32xf32>
    %c20_i32_159 = arith.constant 20 : i32
    %493 = tpu.dynamic_rotate %443 by %c20_i32_159 dim 0 : vector<24x32xf32>, i32 -> vector<24x32xf32>
    %494 = vector.broadcast %49 : vector<24x1xf32> to vector<24x32xf32>
    %495 = arith.mulf %493, %494 : vector<24x32xf32>
    %496 = vector.extract_strided_slice %28 {offsets = [7, 0], sizes = [1, 32], strides = [1, 1]} : vector<9x32xf32> to vector<1x32xf32>
    %497 = vector.broadcast %496 : vector<1x32xf32> to vector<24x32xf32>
    %498 = arith.mulf %495, %497 : vector<24x32xf32>
    %499 = arith.addf %492, %498 : vector<24x32xf32>
    %c19_i32_160 = arith.constant 19 : i32
    %500 = tpu.dynamic_rotate %443 by %c19_i32_160 dim 0 : vector<24x32xf32>, i32 -> vector<24x32xf32>
    %501 = vector.broadcast %51 : vector<24x1xf32> to vector<24x32xf32>
    %502 = arith.mulf %500, %501 : vector<24x32xf32>
    %503 = vector.extract_strided_slice %28 {offsets = [8, 0], sizes = [1, 32], strides = [1, 1]} : vector<9x32xf32> to vector<1x32xf32>
    %504 = vector.broadcast %503 : vector<1x32xf32> to vector<24x32xf32>
    %505 = arith.mulf %502, %504 : vector<24x32xf32>
    %506 = arith.addf %499, %505 : vector<24x32xf32>
    %507 = vector.broadcast %30 : vector<1x32xf32> to vector<24x32xf32>
    %508 = arith.addf %506, %507 : vector<24x32xf32>
    %509 = arith.subf %508, %443 : vector<24x32xf32>
    %510 = vector.broadcast %33 : vector<24x1xf32> to vector<24x32xf32>
    %511 = arith.mulf %510, %509 : vector<24x32xf32>
    %512 = arith.addf %443, %511 : vector<24x32xf32>
    %513 = arith.addf %512, %442 : vector<24x32xf32>
    %c1_161 = arith.constant 1 : index
    %c0_162 = arith.constant 0 : index
    %c0_163 = arith.constant 0 : index
    %514 = vector.load %arg22[%c1_161, %c0_162, %c0_163] : memref<2x24x32xf32, #tpu.memory_space<vmem>>, vector<1x24x32xf32>
    %515 = vector.shape_cast %514 : vector<1x24x32xf32> to vector<24x32xf32>
    %516 = vector.shape_cast %513 : vector<24x32xf32> to vector<1x24x32xf32>
    tpu.vector_store %arg22[%c1_161, %c0_162, %c0_163], %516 {strides = array<i32>} : memref<2x24x32xf32, #tpu.memory_space<vmem>>, vector<1x24x32xf32>,
    %c1_i32_164 = arith.constant 1 : i32
    %517 = arith.cmpi eq, %arg1, %c1_i32_164 : i32
    %518 = arith.extui %517 : i1 to i32
    %c0_i32_165 = arith.constant 0 : i32
    %519 = arith.cmpi ne, %518, %c0_i32_165 : i32
    scf.if %519 {
      %cst_166 = arith.constant dense<0.000000e+00> : vector<24xf32>
      %520 = vector.multi_reduction <add>, %513, %cst_166 [1] : vector<24x32xf32> to vector<24xf32>
      %521 = vector.shape_cast %520 : vector<24xf32> to vector<24x1xf32>
      %cst_167 = arith.constant 3.200000e+01 : f32
      %522 = vector.broadcast %cst_167 : f32 to vector<24x1xf32>
      %523 = arith.divf %521, %522 : vector<24x1xf32>
      %524 = arith.mulf %513, %513 : vector<24x32xf32>
      %cst_168 = arith.constant dense<0.000000e+00> : vector<24xf32>
      %525 = vector.multi_reduction <add>, %524, %cst_168 [1] : vector<24x32xf32> to vector<24xf32>
      %526 = vector.shape_cast %525 : vector<24xf32> to vector<24x1xf32>
      %cst_169 = arith.constant 3.200000e+01 : f32
      %527 = vector.broadcast %cst_169 : f32 to vector<24x1xf32>
      %528 = arith.divf %526, %527 : vector<24x1xf32>
      %529 = arith.mulf %523, %523 : vector<24x1xf32>
      %530 = arith.subf %528, %529 : vector<24x1xf32>
      %cst_170 = arith.constant 0.000000e+00 : f32
      %531 = vector.broadcast %cst_170 : f32 to vector<24x1xf32>
      %532 = arith.maximumf %530, %531 : vector<24x1xf32>
      %533 = vector.broadcast %523 : vector<24x1xf32> to vector<24x32xf32>
      %534 = arith.subf %513, %533 : vector<24x32xf32>
      %cst_171 = arith.constant 9.99999997E-7 : f32
      %535 = vector.broadcast %cst_171 : f32 to vector<24x1xf32>
      %536 = arith.addf %532, %535 : vector<24x1xf32>
      %537 = math.rsqrt %536 : vector<24x1xf32>
      %538 = vector.broadcast %537 : vector<24x1xf32> to vector<24x32xf32>
      %539 = arith.mulf %534, %538 : vector<24x32xf32>
      %540 = vector.broadcast %31 : vector<1x32xf32> to vector<24x32xf32>
      %541 = arith.mulf %539, %540 : vector<24x32xf32>
      %542 = vector.broadcast %32 : vector<1x32xf32> to vector<24x32xf32>
      %543 = arith.addf %541, %542 : vector<24x32xf32>
      %c1_172 = arith.constant 1 : index
      %c0_173 = arith.constant 0 : index
      %c0_174 = arith.constant 0 : index
      %544 = vector.load %arg21[%c1_172, %c0_173, %c0_174] : memref<2x24x32xf32, #tpu.memory_space<vmem>>, vector<1x24x32xf32>
      %545 = vector.shape_cast %544 : vector<1x24x32xf32> to vector<24x32xf32>
      %546 = vector.shape_cast %543 : vector<24x32xf32> to vector<1x24x32xf32>
      tpu.vector_store %arg21[%c1_172, %c0_173, %c0_174], %546 {strides = array<i32>} : memref<2x24x32xf32, #tpu.memory_space<vmem>>, vector<1x24x32xf32>,
    } else {
    }
    return
  }
  func.func @transform_0(%arg0: i32, %arg1: i32) -> (i32, i32, i32) {
    %c0_i32 = arith.constant 0 : i32
    %c0_i32_0 = arith.constant 0 : i32
    %c0_i32_1 = arith.constant 0 : i32
    return %arg0, %c0_i32, %c0_i32_0 : i32, i32, i32
  }
  func.func @transform_1(%arg0: i32, %arg1: i32) -> (i32, i32, i32) {
    %c0_i32 = arith.constant 0 : i32
    %c0_i32_0 = arith.constant 0 : i32
    %c0_i32_1 = arith.constant 0 : i32
    %c0_i32_2 = arith.constant 0 : i32
    return %c0_i32, %c0_i32_0, %c0_i32_1 : i32, i32, i32
  }
  func.func @transform_2(%arg0: i32, %arg1: i32) -> (i32, i32) {
    %c0_i32 = arith.constant 0 : i32
    %c0_i32_0 = arith.constant 0 : i32
    %c0_i32_1 = arith.constant 0 : i32
    return %c0_i32, %c0_i32_0 : i32, i32
  }
  func.func @transform_3(%arg0: i32, %arg1: i32) -> (i32, i32, i32) {
    %c0_i32 = arith.constant 0 : i32
    %c0_i32_0 = arith.constant 0 : i32
    %c0_i32_1 = arith.constant 0 : i32
    return %arg1, %c0_i32, %c0_i32_0 : i32, i32, i32
  }
  func.func @transform_4(%arg0: i32, %arg1: i32) -> (i32, i32, i32) {
    %c0_i32 = arith.constant 0 : i32
    %c0_i32_0 = arith.constant 0 : i32
    %c0_i32_1 = arith.constant 0 : i32
    return %arg1, %c0_i32, %c0_i32_0 : i32, i32, i32
  }
  func.func @transform_5(%arg0: i32, %arg1: i32) -> (i32, i32, i32) {
    %c0_i32 = arith.constant 0 : i32
    %c0_i32_0 = arith.constant 0 : i32
    %c0_i32_1 = arith.constant 0 : i32
    return %arg1, %c0_i32, %c0_i32_0 : i32, i32, i32
  }
  func.func @transform_6(%arg0: i32, %arg1: i32) -> (i32, i32, i32) {
    %c0_i32 = arith.constant 0 : i32
    %c0_i32_0 = arith.constant 0 : i32
    %c0_i32_1 = arith.constant 0 : i32
    return %arg1, %c0_i32, %c0_i32_0 : i32, i32, i32
  }
  func.func @transform_7(%arg0: i32, %arg1: i32) -> (i32, i32, i32) {
    %c0_i32 = arith.constant 0 : i32
    %c0_i32_0 = arith.constant 0 : i32
    %c0_i32_1 = arith.constant 0 : i32
    return %arg1, %c0_i32, %c0_i32_0 : i32, i32, i32
  }
  func.func @transform_8(%arg0: i32, %arg1: i32) -> (i32, i32, i32) {
    %c0_i32 = arith.constant 0 : i32
    %c0_i32_0 = arith.constant 0 : i32
    %c0_i32_1 = arith.constant 0 : i32
    return %arg1, %c0_i32, %c0_i32_0 : i32, i32, i32
  }
  func.func @transform_9(%arg0: i32, %arg1: i32) -> (i32, i32, i32) {
    %c0_i32 = arith.constant 0 : i32
    %c0_i32_0 = arith.constant 0 : i32
    %c0_i32_1 = arith.constant 0 : i32
    return %arg1, %c0_i32, %c0_i32_0 : i32, i32, i32
  }
  func.func @transform_10(%arg0: i32, %arg1: i32) -> (i32, i32, i32) {
    %c0_i32 = arith.constant 0 : i32
    %c0_i32_0 = arith.constant 0 : i32
    %c0_i32_1 = arith.constant 0 : i32
    return %arg1, %c0_i32, %c0_i32_0 : i32, i32, i32
  }
  func.func @transform_11(%arg0: i32, %arg1: i32) -> (i32, i32, i32) {
    %c0_i32 = arith.constant 0 : i32
    %c0_i32_0 = arith.constant 0 : i32
    %c0_i32_1 = arith.constant 0 : i32
    return %arg1, %c0_i32, %c0_i32_0 : i32, i32, i32
  }
  func.func @transform_12(%arg0: i32, %arg1: i32) -> (i32, i32, i32) {
    %c0_i32 = arith.constant 0 : i32
    %c0_i32_0 = arith.constant 0 : i32
    %c0_i32_1 = arith.constant 0 : i32
    return %arg1, %c0_i32, %c0_i32_0 : i32, i32, i32
  }
  func.func @transform_13(%arg0: i32, %arg1: i32) -> (i32, i32, i32) {
    %c0_i32 = arith.constant 0 : i32
    %c0_i32_0 = arith.constant 0 : i32
    %c0_i32_1 = arith.constant 0 : i32
    return %arg1, %c0_i32, %c0_i32_0 : i32, i32, i32
  }
  func.func @transform_14(%arg0: i32, %arg1: i32) -> (i32, i32, i32) {
    %c0_i32 = arith.constant 0 : i32
    %c0_i32_0 = arith.constant 0 : i32
    %c0_i32_1 = arith.constant 0 : i32
    return %arg1, %c0_i32, %c0_i32_0 : i32, i32, i32
  }
  func.func @transform_15(%arg0: i32, %arg1: i32) -> (i32, i32, i32) {
    %c0_i32 = arith.constant 0 : i32
    %c0_i32_0 = arith.constant 0 : i32
    %c0_i32_1 = arith.constant 0 : i32
    return %arg1, %c0_i32, %c0_i32_0 : i32, i32, i32
  }
  func.func @transform_16(%arg0: i32, %arg1: i32) -> (i32, i32, i32) {
    %c0_i32 = arith.constant 0 : i32
    %c0_i32_0 = arith.constant 0 : i32
    %c0_i32_1 = arith.constant 0 : i32
    return %arg1, %c0_i32, %c0_i32_0 : i32, i32, i32
  }
  func.func @transform_17(%arg0: i32, %arg1: i32) -> (i32, i32) {
    %c0_i32 = arith.constant 0 : i32
    %c0_i32_0 = arith.constant 0 : i32
    %c0_i32_1 = arith.constant 0 : i32
    return %c0_i32, %c0_i32_0 : i32, i32
  }
  func.func @transform_18(%arg0: i32, %arg1: i32) -> (i32, i32) {
    %c0_i32 = arith.constant 0 : i32
    %c0_i32_0 = arith.constant 0 : i32
    %c0_i32_1 = arith.constant 0 : i32
    return %c0_i32, %c0_i32_0 : i32, i32
  }
  func.func @transform_19(%arg0: i32, %arg1: i32) -> (i32, i32, i32) {
    %c0_i32 = arith.constant 0 : i32
    %c0_i32_0 = arith.constant 0 : i32
    %c0_i32_1 = arith.constant 0 : i32
    return %arg0, %c0_i32, %c0_i32_0 : i32, i32, i32
  }
}

</mosaic_0001>

<llo_original>
// kernel: encoder_forward.1
$region0: #{encoder_forward.1}
  #allocation0 [shape = 'u32[]', space=smem, size = 0x4, offset = 0x4, fixed_abs, tag = 'smem constant byte address 0x4 - core index']
  #allocation1 [shape = 'u32[72,128]{1,0:T(1,128)}', space=vmem, size = 0x9000, scoped, tag = 'internal scratch']
  #allocation2 [shape = 'f32[2,24,32]{2,1,0:T(8,128)}', space=vmem, size = 0x6000, scoped, tag = 'scratch operand']
  %s0 = inlined_call_operand.vmem [shape: f32[2,24,32], index: 0, kind: input, shape index: {}]
  %s1 = inlined_call_operand.vmem [shape: f32[9,24,1], index: 1, kind: input, shape index: {}]
  %s2 = inlined_call_operand.vmem [shape: f32[24,1], index: 2, kind: input, shape index: {}]
  %s3 = inlined_call_operand.vmem [shape: f32[2,1,32], index: 3, kind: input, shape index: {}]
  %s4 = inlined_call_operand.vmem [shape: f32[2,1,32], index: 4, kind: input, shape index: {}]
  %s5 = inlined_call_operand.vmem [shape: bf16[2,32,96], index: 5, kind: input, shape index: {}]
  %s6 = inlined_call_operand.vmem [shape: f32[2,1,96], index: 6, kind: input, shape index: {}]
  %s7 = inlined_call_operand.vmem [shape: bf16[2,32,32], index: 7, kind: input, shape index: {}]
  %s8 = inlined_call_operand.vmem [shape: f32[2,1,32], index: 8, kind: input, shape index: {}]
  %s9 = inlined_call_operand.vmem [shape: f32[2,1,32], index: 9, kind: input, shape index: {}]
  %s10 = inlined_call_operand.vmem [shape: f32[2,1,32], index: 10, kind: input, shape index: {}]
  %s11 = inlined_call_operand.vmem [shape: bf16[2,32,64], index: 11, kind: input, shape index: {}]
  %s12 = inlined_call_operand.vmem [shape: f32[2,1,64], index: 12, kind: input, shape index: {}]
  %s13 = inlined_call_operand.vmem [shape: bf16[2,64,32], index: 13, kind: input, shape index: {}]
  %s14 = inlined_call_operand.vmem [shape: f32[2,1,32], index: 14, kind: input, shape index: {}]
  %s15 = inlined_call_operand.vmem [shape: f32[2,9,32], index: 15, kind: input, shape index: {}]
  %s16 = inlined_call_operand.vmem [shape: f32[2,1,32], index: 16, kind: input, shape index: {}]
  %s17 = inlined_call_operand.vmem [shape: f32[1,32], index: 17, kind: input, shape index: {}]
  %s18 = inlined_call_operand.vmem [shape: f32[1,32], index: 18, kind: input, shape index: {}]
  %s19 = inlined_call_operand.vmem [shape: f32[2,24,32], index: 19, kind: output, shape index: {}]
  %s20 = sld [smem:[#allocation0]]
  $region121: #{encoder_forward.1} parent=0
    _
  %s22 = ssub.s32 1, %s20
  %s23 = scalar_select 0, %s22, %s20
  loop: start=0, step=1, limit=4
  $region2: #{encoder_forward.1} parent=0 // loop_pre_header
    _
  $region3: #{encoder_forward.1} parent=0 // loop_header
    %s25 = sphi 0, %s29
    %p26 = scmp.ge.s32.totalorder %s25, 4
    %s32 = sphi 0, %s44
    %s33 = sphi 0, %s40
    %s34 = sphi 0, %s32
    %s35 = sphi 0, %s33
    %s36 = sphi 0, %s34
    %s37 = sphi 0, %s35
    %s47 = sphi 0, %s49
    %s50 = sphi 0, %s47
    %s51 = sphi 0, %s50
    %s67 = sphi 0, %s51
    %s71 = sphi 0, %s71
    %s73 = sphi 0, %s71
    %s74 = sphi 0, %s73
    %s88 = sphi 0, %s74
    %s92 = sphi 0, %s92
    %s94 = sphi 0, %s92
    %s95 = sphi 0, %s94
    %s109 = sphi 0, %s95
    %s115 = sphi 0, %s117
    %s118 = sphi 0, %s115
    %s119 = sphi 0, %s118
    %s135 = sphi 0, %s119
    %s141 = sphi 0, %s143
    %s144 = sphi 0, %s141
    %s145 = sphi 0, %s144
    %s161 = sphi 0, %s145
    %s167 = sphi 0, %s169
    %s170 = sphi 0, %s167
    %s171 = sphi 0, %s170
    %s187 = sphi 0, %s171
    %s193 = sphi 0, %s195
    %s196 = sphi 0, %s193
    %s197 = sphi 0, %s196
    %s213 = sphi 0, %s197
    %s219 = sphi 0, %s221
    %s222 = sphi 0, %s219
    %s223 = sphi 0, %s222
    %s239 = sphi 0, %s223
    %s245 = sphi 0, %s247
    %s248 = sphi 0, %s245
    %s249 = sphi 0, %s248
    %s265 = sphi 0, %s249
    %s271 = sphi 0, %s273
    %s274 = sphi 0, %s271
    %s275 = sphi 0, %s274
    %s291 = sphi 0, %s275
    %s297 = sphi 0, %s299
    %s300 = sphi 0, %s297
    %s301 = sphi 0, %s300
    %s317 = sphi 0, %s301
    %s323 = sphi 0, %s325
    %s326 = sphi 0, %s323
    %s327 = sphi 0, %s326
    %s343 = sphi 0, %s327
    %s349 = sphi 0, %s351
    %s352 = sphi 0, %s349
    %s353 = sphi 0, %s352
    %s369 = sphi 0, %s353
    %s375 = sphi 0, %s377
    %s378 = sphi 0, %s375
    %s379 = sphi 0, %s378
    %s395 = sphi 0, %s379
    %s401 = sphi 0, %s403
    %s404 = sphi 0, %s401
    %s405 = sphi 0, %s404
    %s421 = sphi 0, %s405
    %s427 = sphi 0, %s429
    %s430 = sphi 0, %s427
    %s431 = sphi 0, %s430
    %s447 = sphi 0, %s431
    %s453 = sphi 0, %s455
    %s456 = sphi 0, %s453
    %s457 = sphi 0, %s456
    %s473 = sphi 0, %s457
    %s477 = sphi 0, %s477
    %s479 = sphi 0, %s477
    %s480 = sphi 0, %s479
    %s494 = sphi 0, %s480
    %s498 = sphi 0, %s498
    %s500 = sphi 0, %s498
    %s501 = sphi 0, %s500
    %s515 = sphi 0, %s501
    %s521 = sphi 0, %s523
    %s524 = sphi 0, %s521
    %s525 = sphi 0, %s524
    %s541 = sphi 0, %s525
  $region4: #{encoder_forward.1} parent=0 // loop_header_branch
    %28 = sbr.rel (%p26) target = $region8
  $region5: #{encoder_forward.1} parent=0 // loop_body
    %s30 = ssub.s32 %s25, 1
    %s31 = ssub.s32 %s25, 2
    %s38 = sadd.s32 1, %s33
    %p39 = scmp.ge.s32.totalorder %s38, 2
    %s40 = scalar_select %p39, 0, %s38
    %s41 = sadd.s32 1, %s32
    %s42 = scalar_select %p39, %s41, %s32
    %p43 = scmp.ge.s32.totalorder %s42, 1
    %s44 = scalar_select %p43, 0, %s42
    %s45 = ssub.s32 %s32, %s44
    %p46 = scmp.eq.s32.totalorder %s45, 0
    %s48 = sadd.s32 %s47, 1
    %s49 = scalar_select %p46, %s47, %s48
    %p52 = pneg %p46
    %p53 = scmp.eq.s32.totalorder %s25, 1
    %p54 = por %p52, %p53
    %p55 = scmp.ne.s32.totalorder %s47, %s50
    %p56 = scmp.eq.s32.totalorder %s25, 0
    %p57 = por %p55, %p56
    %p58 = scmp.ne.s32.totalorder %s47, %s50
    %p59 = scmp.eq.s32.totalorder %s30, 1
    %p60 = por %p58, %p59
    %p61 = scmp.ne.s32.totalorder %s50, %s51
    %p62 = scmp.eq.s32.totalorder %s30, 0
    %p63 = por %p61, %p62
    %p64 = scmp.ne.s32.totalorder %s50, %s51
    %p65 = scmp.eq.s32.totalorder %s31, 1
    %p66 = por %p64, %p65
    %p68 = scmp.ne.s32.totalorder %s51, %s67
    %p69 = scmp.eq.s32.totalorder %s31, 0
    %p70 = por %p68, %p69
    %s72 = sadd.s32 %s71, 1
    %p75 = scmp.eq.s32.totalorder %s25, 1
    %p76 = scmp.ne.s32.totalorder %s71, %s73
    %p77 = scmp.eq.s32.totalorder %s25, 0
    %p78 = por %p76, %p77
    %p79 = scmp.ne.s32.totalorder %s71, %s73
    %p80 = scmp.eq.s32.totalorder %s30, 1
    %p81 = por %p79, %p80
    %p82 = scmp.ne.s32.totalorder %s73, %s74
    %p83 = scmp.eq.s32.totalorder %s30, 0
    %p84 = por %p82, %p83
    %p85 = scmp.ne.s32.totalorder %s73, %s74
    %p86 = scmp.eq.s32.totalorder %s31, 1
    %p87 = por %p85, %p86
    %p89 = scmp.ne.s32.totalorder %s74, %s88
    %p90 = scmp.eq.s32.totalorder %s31, 0
    %p91 = por %p89, %p90
    %s93 = sadd.s32 %s92, 1
    %p96 = scmp.eq.s32.totalorder %s25, 1
    %p97 = scmp.ne.s32.totalorder %s92, %s94
    %p98 = scmp.eq.s32.totalorder %s25, 0
    %p99 = por %p97, %p98
    %p100 = scmp.ne.s32.totalorder %s92, %s94
    %p101 = scmp.eq.s32.totalorder %s30, 1
    %p102 = por %p100, %p101
    %p103 = scmp.ne.s32.totalorder %s94, %s95
    %p104 = scmp.eq.s32.totalorder %s30, 0
    %p105 = por %p103, %p104
    %p106 = scmp.ne.s32.totalorder %s94, %s95
    %p107 = scmp.eq.s32.totalorder %s31, 1
    %p108 = por %p106, %p107
    %p110 = scmp.ne.s32.totalorder %s95, %s109
    %p111 = scmp.eq.s32.totalorder %s31, 0
    %p112 = por %p110, %p111
    %s113 = ssub.s32 %s33, %s40
    %p114 = scmp.eq.s32.totalorder %s113, 0
    %s116 = sadd.s32 %s115, 1
    %s117 = scalar_select %p114, %s115, %s116
    %p120 = pneg %p114
    %p121 = scmp.eq.s32.totalorder %s25, 1
    %p122 = por %p120, %p121
    %p123 = scmp.ne.s32.totalorder %s115, %s118
    %p124 = scmp.eq.s32.totalorder %s25, 0
    %p125 = por %p123, %p124
    %p126 = scmp.ne.s32.totalorder %s115, %s118
    %p127 = scmp.eq.s32.totalorder %s30, 1
    %p128 = por %p126, %p127
    %p129 = scmp.ne.s32.totalorder %s118, %s119
    %p130 = scmp.eq.s32.totalorder %s30, 0
    %p131 = por %p129, %p130
    %p132 = scmp.ne.s32.totalorder %s118, %s119
    %p133 = scmp.eq.s32.totalorder %s31, 1
    %p134 = por %p132, %p133
    %p136 = scmp.ne.s32.totalorder %s119, %s135
    %p137 = scmp.eq.s32.totalorder %s31, 0
    %p138 = por %p136, %p137
    %s139 = ssub.s32 %s33, %s40
    %p140 = scmp.eq.s32.totalorder %s139, 0
    %s142 = sadd.s32 %s141, 1
    %s143 = scalar_select %p140, %s141, %s142
    %p146 = pneg %p140
    %p147 = scmp.eq.s32.totalorder %s25, 1
    %p148 = por %p146, %p147
    %p149 = scmp.ne.s32.totalorder %s141, %s144
    %p150 = scmp.eq.s32.totalorder %s25, 0
    %p151 = por %p149, %p150
    %p152 = scmp.ne.s32.totalorder %s141, %s144
    %p153 = scmp.eq.s32.totalorder %s30, 1
    %p154 = por %p152, %p153
    %p155 = scmp.ne.s32.totalorder %s144, %s145
    %p156 = scmp.eq.s32.totalorder %s30, 0
    %p157 = por %p155, %p156
    %p158 = scmp.ne.s32.totalorder %s144, %s145
    %p159 = scmp.eq.s32.totalorder %s31, 1
    %p160 = por %p158, %p159
    %p162 = scmp.ne.s32.totalorder %s145, %s161
    %p163 = scmp.eq.s32.totalorder %s31, 0
    %p164 = por %p162, %p163
    %s165 = ssub.s32 %s33, %s40
    %p166 = scmp.eq.s32.totalorder %s165, 0
    %s168 = sadd.s32 %s167, 1
    %s169 = scalar_select %p166, %s167, %s168
    %p172 = pneg %p166
    %p173 = scmp.eq.s32.totalorder %s25, 1
    %p174 = por %p172, %p173
    %p175 = scmp.ne.s32.totalorder %s167, %s170
    %p176 = scmp.eq.s32.totalorder %s25, 0
    %p177 = por %p175, %p176
    %p178 = scmp.ne.s32.totalorder %s167, %s170
    %p179 = scmp.eq.s32.totalorder %s30, 1
    %p180 = por %p178, %p179
    %p181 = scmp.ne.s32.totalorder %s170, %s171
    %p182 = scmp.eq.s32.totalorder %s30, 0
    %p183 = por %p181, %p182
    %p184 = scmp.ne.s32.totalorder %s170, %s171
    %p185 = scmp.eq.s32.totalorder %s31, 1
    %p186 = por %p184, %p185
    %p188 = scmp.ne.s32.totalorder %s171, %s187
    %p189 = scmp.eq.s32.totalorder %s31, 0
    %p190 = por %p188, %p189
    %s191 = ssub.s32 %s33, %s40
    %p192 = scmp.eq.s32.totalorder %s191, 0
    %s194 = sadd.s32 %s193, 1
    %s195 = scalar_select %p192, %s193, %s194
    %p198 = pneg %p192
    %p199 = scmp.eq.s32.totalorder %s25, 1
    %p200 = por %p198, %p199
    %p201 = scmp.ne.s32.totalorder %s193, %s196
    %p202 = scmp.eq.s32.totalorder %s25, 0
    %p203 = por %p201, %p202
    %p204 = scmp.ne.s32.totalorder %s193, %s196
    %p205 = scmp.eq.s32.totalorder %s30, 1
    %p206 = por %p204, %p205
    %p207 = scmp.ne.s32.totalorder %s196, %s197
    %p208 = scmp.eq.s32.totalorder %s30, 0
    %p209 = por %p207, %p208
    %p210 = scmp.ne.s32.totalorder %s196, %s197
    %p211 = scmp.eq.s32.totalorder %s31, 1
    %p212 = por %p210, %p211
    %p214 = scmp.ne.s32.totalorder %s197, %s213
    %p215 = scmp.eq.s32.totalorder %s31, 0
    %p216 = por %p214, %p215
    %s217 = ssub.s32 %s33, %s40
    %p218 = scmp.eq.s32.totalorder %s217, 0
    %s220 = sadd.s32 %s219, 1
    %s221 = scalar_select %p218, %s219, %s220
    %p224 = pneg %p218
    %p225 = scmp.eq.s32.totalorder %s25, 1
    %p226 = por %p224, %p225
    %p227 = scmp.ne.s32.totalorder %s219, %s222
    %p228 = scmp.eq.s32.totalorder %s25, 0
    %p229 = por %p227, %p228
    %p230 = scmp.ne.s32.totalorder %s219, %s222
    %p231 = scmp.eq.s32.totalorder %s30, 1
    %p232 = por %p230, %p231
    %p233 = scmp.ne.s32.totalorder %s222, %s223
    %p234 = scmp.eq.s32.totalorder %s30, 0
    %p235 = por %p233, %p234
    %p236 = scmp.ne.s32.totalorder %s222, %s223
    %p237 = scmp.eq.s32.totalorder %s31, 1
    %p238 = por %p236, %p237
    %p240 = scmp.ne.s32.totalorder %s223, %s239
    %p241 = scmp.eq.s32.totalorder %s31, 0
    %p242 = por %p240, %p241
    %s243 = ssub.s32 %s33, %s40
    %p244 = scmp.eq.s32.totalorder %s243, 0
    %s246 = sadd.s32 %s245, 1
    %s247 = scalar_select %p244, %s245, %s246
    %p250 = pneg %p244
    %p251 = scmp.eq.s32.totalorder %s25, 1
    %p252 = por %p250, %p251
    %p253 = scmp.ne.s32.totalorder %s245, %s248
    %p254 = scmp.eq.s32.totalorder %s25, 0
    %p255 = por %p253, %p254
    %p256 = scmp.ne.s32.totalorder %s245, %s248
    %p257 = scmp.eq.s32.totalorder %s30, 1
    %p258 = por %p256, %p257
    %p259 = scmp.ne.s32.totalorder %s248, %s249
    %p260 = scmp.eq.s32.totalorder %s30, 0
    %p261 = por %p259, %p260
    %p262 = scmp.ne.s32.totalorder %s248, %s249
    %p263 = scmp.eq.s32.totalorder %s31, 1
    %p264 = por %p262, %p263
    %p266 = scmp.ne.s32.totalorder %s249, %s265
    %p267 = scmp.eq.s32.totalorder %s31, 0
    %p268 = por %p266, %p267
    %s269 = ssub.s32 %s33, %s40
    %p270 = scmp.eq.s32.totalorder %s269, 0
    %s272 = sadd.s32 %s271, 1
    %s273 = scalar_select %p270, %s271, %s272
    %p276 = pneg %p270
    %p277 = scmp.eq.s32.totalorder %s25, 1
    %p278 = por %p276, %p277
    %p279 = scmp.ne.s32.totalorder %s271, %s274
    %p280 = scmp.eq.s32.totalorder %s25, 0
    %p281 = por %p279, %p280
    %p282 = scmp.ne.s32.totalorder %s271, %s274
    %p283 = scmp.eq.s32.totalorder %s30, 1
    %p284 = por %p282, %p283
    %p285 = scmp.ne.s32.totalorder %s274, %s275
    %p286 = scmp.eq.s32.totalorder %s30, 0
    %p287 = por %p285, %p286
    %p288 = scmp.ne.s32.totalorder %s274, %s275
    %p289 = scmp.eq.s32.totalorder %s31, 1
    %p290 = por %p288, %p289
    %p292 = scmp.ne.s32.totalorder %s275, %s291
    %p293 = scmp.eq.s32.totalorder %s31, 0
    %p294 = por %p292, %p293
    %s295 = ssub.s32 %s33, %s40
    %p296 = scmp.eq.s32.totalorder %s295, 0
    %s298 = sadd.s32 %s297, 1
    %s299 = scalar_select %p296, %s297, %s298
    %p302 = pneg %p296
    %p303 = scmp.eq.s32.totalorder %s25, 1
    %p304 = por %p302, %p303
    %p305 = scmp.ne.s32.totalorder %s297, %s300
    %p306 = scmp.eq.s32.totalorder %s25, 0
    %p307 = por %p305, %p306
    %p308 = scmp.ne.s32.totalorder %s297, %s300
    %p309 = scmp.eq.s32.totalorder %s30, 1
    %p310 = por %p308, %p309
    %p311 = scmp.ne.s32.totalorder %s300, %s301
    %p312 = scmp.eq.s32.totalorder %s30, 0
    %p313 = por %p311, %p312
    %p314 = scmp.ne.s32.totalorder %s300, %s301
    %p315 = scmp.eq.s32.totalorder %s31, 1
    %p316 = por %p314, %p315
    %p318 = scmp.ne.s32.totalorder %s301, %s317
    %p319 = scmp.eq.s32.totalorder %s31, 0
    %p320 = por %p318, %p319
    %s321 = ssub.s32 %s33, %s40
    %p322 = scmp.eq.s32.totalorder %s321, 0
    %s324 = sadd.s32 %s323, 1
    %s325 = scalar_select %p322, %s323, %s324
    %p328 = pneg %p322
    %p329 = scmp.eq.s32.totalorder %s25, 1
    %p330 = por %p328, %p329
    %p331 = scmp.ne.s32.totalorder %s323, %s326
    %p332 = scmp.eq.s32.totalorder %s25, 0
    %p333 = por %p331, %p332
    %p334 = scmp.ne.s32.totalorder %s323, %s326
    %p335 = scmp.eq.s32.totalorder %s30, 1
    %p336 = por %p334, %p335
    %p337 = scmp.ne.s32.totalorder %s326, %s327
    %p338 = scmp.eq.s32.totalorder %s30, 0
    %p339 = por %p337, %p338
    %p340 = scmp.ne.s32.totalorder %s326, %s327
    %p341 = scmp.eq.s32.totalorder %s31, 1
    %p342 = por %p340, %p341
    %p344 = scmp.ne.s32.totalorder %s327, %s343
    %p345 = scmp.eq.s32.totalorder %s31, 0
    %p346 = por %p344, %p345
    %s347 = ssub.s32 %s33, %s40
    %p348 = scmp.eq.s32.totalorder %s347, 0
    %s350 = sadd.s32 %s349, 1
    %s351 = scalar_select %p348, %s349, %s350
    %p354 = pneg %p348
    %p355 = scmp.eq.s32.totalorder %s25, 1
    %p356 = por %p354, %p355
    %p357 = scmp.ne.s32.totalorder %s349, %s352
    %p358 = scmp.eq.s32.totalorder %s25, 0
    %p359 = por %p357, %p358
    %p360 = scmp.ne.s32.totalorder %s349, %s352
    %p361 = scmp.eq.s32.totalorder %s30, 1
    %p362 = por %p360, %p361
    %p363 = scmp.ne.s32.totalorder %s352, %s353
    %p364 = scmp.eq.s32.totalorder %s30, 0
    %p365 = por %p363, %p364
    %p366 = scmp.ne.s32.totalorder %s352, %s353
    %p367 = scmp.eq.s32.totalorder %s31, 1
    %p368 = por %p366, %p367
    %p370 = scmp.ne.s32.totalorder %s353, %s369
    %p371 = scmp.eq.s32.totalorder %s31, 0
    %p372 = por %p370, %p371
    %s373 = ssub.s32 %s33, %s40
    %p374 = scmp.eq.s32.totalorder %s373, 0
    %s376 = sadd.s32 %s375, 1
    %s377 = scalar_select %p374, %s375, %s376
    %p380 = pneg %p374
    %p381 = scmp.eq.s32.totalorder %s25, 1
    %p382 = por %p380, %p381
    %p383 = scmp.ne.s32.totalorder %s375, %s378
    %p384 = scmp.eq.s32.totalorder %s25, 0
    %p385 = por %p383, %p384
    %p386 = scmp.ne.s32.totalorder %s375, %s378
    %p387 = scmp.eq.s32.totalorder %s30, 1
    %p388 = por %p386, %p387
    %p389 = scmp.ne.s32.totalorder %s378, %s379
    %p390 = scmp.eq.s32.totalorder %s30, 0
    %p391 = por %p389, %p390
    %p392 = scmp.ne.s32.totalorder %s378, %s379
    %p393 = scmp.eq.s32.totalorder %s31, 1
    %p394 = por %p392, %p393
    %p396 = scmp.ne.s32.totalorder %s379, %s395
    %p397 = scmp.eq.s32.totalorder %s31, 0
    %p398 = por %p396, %p397
    %s399 = ssub.s32 %s33, %s40
    %p400 = scmp.eq.s32.totalorder %s399, 0
    %s402 = sadd.s32 %s401, 1
    %s403 = scalar_select %p400, %s401, %s402
    %p406 = pneg %p400
    %p407 = scmp.eq.s32.totalorder %s25, 1
    %p408 = por %p406, %p407
    %p409 = scmp.ne.s32.totalorder %s401, %s404
    %p410 = scmp.eq.s32.totalorder %s25, 0
    %p411 = por %p409, %p410
    %p412 = scmp.ne.s32.totalorder %s401, %s404
    %p413 = scmp.eq.s32.totalorder %s30, 1
    %p414 = por %p412, %p413
    %p415 = scmp.ne.s32.totalorder %s404, %s405
    %p416 = scmp.eq.s32.totalorder %s30, 0
    %p417 = por %p415, %p416
    %p418 = scmp.ne.s32.totalorder %s404, %s405
    %p419 = scmp.eq.s32.totalorder %s31, 1
    %p420 = por %p418, %p419
    %p422 = scmp.ne.s32.totalorder %s405, %s421
    %p423 = scmp.eq.s32.totalorder %s31, 0
    %p424 = por %p422, %p423
    %s425 = ssub.s32 %s33, %s40
    %p426 = scmp.eq.s32.totalorder %s425, 0
    %s428 = sadd.s32 %s427, 1
    %s429 = scalar_select %p426, %s427, %s428
    %p432 = pneg %p426
    %p433 = scmp.eq.s32.totalorder %s25, 1
    %p434 = por %p432, %p433
    %p435 = scmp.ne.s32.totalorder %s427, %s430
    %p436 = scmp.eq.s32.totalorder %s25, 0
    %p437 = por %p435, %p436
    %p438 = scmp.ne.s32.totalorder %s427, %s430
    %p439 = scmp.eq.s32.totalorder %s30, 1
    %p440 = por %p438, %p439
    %p441 = scmp.ne.s32.totalorder %s430, %s431
    %p442 = scmp.eq.s32.totalorder %s30, 0
    %p443 = por %p441, %p442
    %p444 = scmp.ne.s32.totalorder %s430, %s431
    %p445 = scmp.eq.s32.totalorder %s31, 1
    %p446 = por %p444, %p445
    %p448 = scmp.ne.s32.totalorder %s431, %s447
    %p449 = scmp.eq.s32.totalorder %s31, 0
    %p450 = por %p448, %p449
    %s451 = ssub.s32 %s33, %s40
    %p452 = scmp.eq.s32.totalorder %s451, 0
    %s454 = sadd.s32 %s453, 1
    %s455 = scalar_select %p452, %s453, %s454
    %p458 = pneg %p452
    %p459 = scmp.eq.s32.totalorder %s25, 1
    %p460 = por %p458, %p459
    %p461 = scmp.ne.s32.totalorder %s453, %s456
    %p462 = scmp.eq.s32.totalorder %s25, 0
    %p463 = por %p461, %p462
    %p464 = scmp.ne.s32.totalorder %s453, %s456
    %p465 = scmp.eq.s32.totalorder %s30, 1
    %p466 = por %p464, %p465
    %p467 = scmp.ne.s32.totalorder %s456, %s457
    %p468 = scmp.eq.s32.totalorder %s30, 0
    %p469 = por %p467, %p468
    %p470 = scmp.ne.s32.totalorder %s456, %s457
    %p471 = scmp.eq.s32.totalorder %s31, 1
    %p472 = por %p470, %p471
    %p474 = scmp.ne.s32.totalorder %s457, %s473
    %p475 = scmp.eq.s32.totalorder %s31, 0
    %p476 = por %p474, %p475
    %s478 = sadd.s32 %s477, 1
    %p481 = scmp.eq.s32.totalorder %s25, 1
    %p482 = scmp.ne.s32.totalorder %s477, %s479
    %p483 = scmp.eq.s32.totalorder %s25, 0
    %p484 = por %p482, %p483
    %p485 = scmp.ne.s32.totalorder %s477, %s479
    %p486 = scmp.eq.s32.totalorder %s30, 1
    %p487 = por %p485, %p486
    %p488 = scmp.ne.s32.totalorder %s479, %s480
    %p489 = scmp.eq.s32.totalorder %s30, 0
    %p490 = por %p488, %p489
    %p491 = scmp.ne.s32.totalorder %s479, %s480
    %p492 = scmp.eq.s32.totalorder %s31, 1
    %p493 = por %p491, %p492
    %p495 = scmp.ne.s32.totalorder %s480, %s494
    %p496 = scmp.eq.s32.totalorder %s31, 0
    %p497 = por %p495, %p496
    %s499 = sadd.s32 %s498, 1
    %p502 = scmp.eq.s32.totalorder %s25, 1
    %p503 = scmp.ne.s32.totalorder %s498, %s500
    %p504 = scmp.eq.s32.totalorder %s25, 0
    %p505 = por %p503, %p504
    %p506 = scmp.ne.s32.totalorder %s498, %s500
    %p507 = scmp.eq.s32.totalorder %s30, 1
    %p508 = por %p506, %p507
    %p509 = scmp.ne.s32.totalorder %s500, %s501
    %p510 = scmp.eq.s32.totalorder %s30, 0
    %p511 = por %p509, %p510
    %p512 = scmp.ne.s32.totalorder %s500, %s501
    %p513 = scmp.eq.s32.totalorder %s31, 1
    %p514 = por %p512, %p513
    %p516 = scmp.ne.s32.totalorder %s501, %s515
    %p517 = scmp.eq.s32.totalorder %s31, 0
    %p518 = por %p516, %p517
    %s519 = ssub.s32 %s32, %s44
    %p520 = scmp.eq.s32.totalorder %s519, 0
    %s522 = sadd.s32 %s521, 1
    %s523 = scalar_select %p520, %s521, %s522
    %p526 = pneg %p520
    %p527 = scmp.eq.s32.totalorder %s25, 1
    %p528 = por %p526, %p527
    %p529 = scmp.ne.s32.totalorder %s521, %s524
    %p530 = scmp.eq.s32.totalorder %s25, 0
    %p531 = por %p529, %p530
    %p532 = scmp.ne.s32.totalorder %s521, %s524
    %p533 = scmp.eq.s32.totalorder %s30, 1
    %p534 = por %p532, %p533
    %p535 = scmp.ne.s32.totalorder %s524, %s525
    %p536 = scmp.eq.s32.totalorder %s30, 0
    %p537 = por %p535, %p536
    %p538 = scmp.ne.s32.totalorder %s524, %s525
    %p539 = scmp.eq.s32.totalorder %s31, 1
    %p540 = por %p538, %p539
    %p542 = scmp.ne.s32.totalorder %s525, %s541
    %p543 = scmp.eq.s32.totalorder %s31, 0
    %p544 = por %p542, %p543
    %p545 = scmp.le.s32.totalorder 1, %s25
    %p546 = scmp.lt.s32.totalorder %s25, 3
    %p547 = pnand %p545, %p546
    %p548 = pneg %p547
    // Predicated region
    $region9: #{encoder_forward.1} parent=5 // pred_check
      _
    $region10: #{encoder_forward.1} parent=5 // pred_check_branch
      %550 = sbr.rel (%p547) target = $region12
    $region11: #{encoder_forward.1} parent=5 // pred_region
      %s551 = ssub.s32 %s25, 1
      // Predicated region
      $region13: #{encoder_forward.1} parent=11 // pred_check
        %p552 = pneg %p63
      $region14: #{encoder_forward.1} parent=11 // pred_check_branch
        %554 = sbr.rel (%p552) target = $region16
      $region15: #{encoder_forward.1} parent=11 // pred_region
        %s555 = smul.u32 2, %s34
        %p556 = scmp.lt.s32.totalorder %s555, 1
        %s557 = scalar_select %p556, %s555, 1
        %s558 = smul.addr %s557, 3
        %s559 = smul.addr %s558, 8
        %s560 = scalar_lea.vmem %s0, %s559
        %s561 = smul.u32 2, %s34
      $region16: #{encoder_forward.1} parent=11 // pred_fallthru
        _
      // Predicated region
      $region17: #{encoder_forward.1} parent=11 // pred_check
        %p562 = pneg %p84
      $region18: #{encoder_forward.1} parent=11 // pred_check_branch
        %564 = sbr.rel (%p562) target = $region20
      $region19: #{encoder_forward.1} parent=11 // pred_region
        _
      $region20: #{encoder_forward.1} parent=11 // pred_fallthru
        _
      // Predicated region
      $region21: #{encoder_forward.1} parent=11 // pred_check
        %p565 = pneg %p105
      $region22: #{encoder_forward.1} parent=11 // pred_check_branch
        %567 = sbr.rel (%p565) target = $region24
      $region23: #{encoder_forward.1} parent=11 // pred_region
        _
      $region24: #{encoder_forward.1} parent=11 // pred_fallthru
        _
      // Predicated region
      $region25: #{encoder_forward.1} parent=11 // pred_check
        %p568 = pneg %p490
      $region26: #{encoder_forward.1} parent=11 // pred_check_branch
        %570 = sbr.rel (%p568) target = $region28
      $region27: #{encoder_forward.1} parent=11 // pred_region
        _
      $region28: #{encoder_forward.1} parent=11 // pred_fallthru
        _
      // Predicated region
      $region29: #{encoder_forward.1} parent=11 // pred_check
        %p571 = pneg %p511
      $region30: #{encoder_forward.1} parent=11 // pred_check_branch
        %573 = sbr.rel (%p571) target = $region32
      $region31: #{encoder_forward.1} parent=11 // pred_region
        _
      $region32: #{encoder_forward.1} parent=11 // pred_fallthru
        _
    $region12: #{encoder_forward.1} parent=5 // pred_fallthru
      _
    %p574 = scmp.lt.s32.totalorder %s25, 2
    // Predicated region
    $region33: #{encoder_forward.1} parent=5 // pred_check
      %p575 = pneg %p574
    $region34: #{encoder_forward.1} parent=5 // pred_check_branch
      %577 = sbr.rel (%p575) target = $region36
    $region35: #{encoder_forward.1} parent=5 // pred_region
      // Predicated region
      $region37: #{encoder_forward.1} parent=35 // pred_check
        %p578 = pneg %p125
      $region38: #{encoder_forward.1} parent=35 // pred_check_branch
        %580 = sbr.rel (%p578) target = $region40
      $region39: #{encoder_forward.1} parent=35 // pred_region
        %p581 = scmp.lt.s32.totalorder %s33, 1
        %s582 = scalar_select %p581, %s33, 1
        %s583 = scalar_lea.vmem %s3, %s582
      $region40: #{encoder_forward.1} parent=35 // pred_fallthru
        _
      // Predicated region
      $region41: #{encoder_forward.1} parent=35 // pred_check
        %p584 = pneg %p151
      $region42: #{encoder_forward.1} parent=35 // pred_check_branch
        %586 = sbr.rel (%p584) target = $region44
      $region43: #{encoder_forward.1} parent=35 // pred_region
        %p587 = scmp.lt.s32.totalorder %s33, 1
        %s588 = scalar_select %p587, %s33, 1
        %s589 = scalar_lea.vmem %s4, %s588
      $region44: #{encoder_forward.1} parent=35 // pred_fallthru
        _
      // Predicated region
      $region45: #{encoder_forward.1} parent=35 // pred_check
        %p590 = pneg %p177
      $region46: #{encoder_forward.1} parent=35 // pred_check_branch
        %592 = sbr.rel (%p590) target = $region48
      $region47: #{encoder_forward.1} parent=35 // pred_region
        %p593 = scmp.lt.s32.totalorder %s33, 1
        %s594 = scalar_select %p593, %s33, 1
        %s595 = smul.addr %s594, 4
        %s596 = smul.addr %s595, 4
        %s597 = scalar_lea.vmem %s5, %s596
      $region48: #{encoder_forward.1} parent=35 // pred_fallthru
        _
      // Predicated region
      $region49: #{encoder_forward.1} parent=35 // pred_check
        %p598 = pneg %p203
      $region50: #{encoder_forward.1} parent=35 // pred_check_branch
        %600 = sbr.rel (%p598) target = $region52
      $region51: #{encoder_forward.1} parent=35 // pred_region
        %p601 = scmp.lt.s32.totalorder %s33, 1
        %s602 = scalar_select %p601, %s33, 1
        %s603 = scalar_lea.vmem %s6, %s602
      $region52: #{encoder_forward.1} parent=35 // pred_fallthru
        _
      // Predicated region
      $region53: #{encoder_forward.1} parent=35 // pred_check
        %p604 = pneg %p229
      $region54: #{encoder_forward.1} parent=35 // pred_check_branch
        %606 = sbr.rel (%p604) target = $region56
      $region55: #{encoder_forward.1} parent=35 // pred_region
        %p607 = scmp.lt.s32.totalorder %s33, 1
        %s608 = scalar_select %p607, %s33, 1
        %s609 = smul.addr %s608, 4
        %s610 = smul.addr %s609, 4
        %s611 = scalar_lea.vmem %s7, %s610
      $region56: #{encoder_forward.1} parent=35 // pred_fallthru
        _
      // Predicated region
      $region57: #{encoder_forward.1} parent=35 // pred_check
        %p612 = pneg %p255
      $region58: #{encoder_forward.1} parent=35 // pred_check_branch
        %614 = sbr.rel (%p612) target = $region60
      $region59: #{encoder_forward.1} parent=35 // pred_region
        %p615 = scmp.lt.s32.totalorder %s33, 1
        %s616 = scalar_select %p615, %s33, 1
        %s617 = scalar_lea.vmem %s8, %s616
      $region60: #{encoder_forward.1} parent=35 // pred_fallthru
        _
      // Predicated region
      $region61: #{encoder_forward.1} parent=35 // pred_check
        %p618 = pneg %p281
      $region62: #{encoder_forward.1} parent=35 // pred_check_branch
        %620 = sbr.rel (%p618) target = $region64
      $region63: #{encoder_forward.1} parent=35 // pred_region
        %p621 = scmp.lt.s32.totalorder %s33, 1
        %s622 = scalar_select %p621, %s33, 1
        %s623 = scalar_lea.vmem %s9, %s622
      $region64: #{encoder_forward.1} parent=35 // pred_fallthru
        _
      // Predicated region
      $region65: #{encoder_forward.1} parent=35 // pred_check
        %p624 = pneg %p307
      $region66: #{encoder_forward.1} parent=35 // pred_check_branch
        %626 = sbr.rel (%p624) target = $region68
      $region67: #{encoder_forward.1} parent=35 // pred_region
        %p627 = scmp.lt.s32.totalorder %s33, 1
        %s628 = scalar_select %p627, %s33, 1
        %s629 = scalar_lea.vmem %s10, %s628
      $region68: #{encoder_forward.1} parent=35 // pred_fallthru
        _
      // Predicated region
      $region69: #{encoder_forward.1} parent=35 // pred_check
        %p630 = pneg %p333
      $region70: #{encoder_forward.1} parent=35 // pred_check_branch
        %632 = sbr.rel (%p630) target = $region72
      $region71: #{encoder_forward.1} parent=35 // pred_region
        %p633 = scmp.lt.s32.totalorder %s33, 1
        %s634 = scalar_select %p633, %s33, 1
        %s635 = smul.addr %s634, 4
        %s636 = smul.addr %s635, 4
        %s637 = scalar_lea.vmem %s11, %s636
      $region72: #{encoder_forward.1} parent=35 // pred_fallthru
        _
      // Predicated region
      $region73: #{encoder_forward.1} parent=35 // pred_check
        %p638 = pneg %p359
      $region74: #{encoder_forward.1} parent=35 // pred_check_branch
        %640 = sbr.rel (%p638) target = $region76
      $region75: #{encoder_forward.1} parent=35 // pred_region
        %p641 = scmp.lt.s32.totalorder %s33, 1
        %s642 = scalar_select %p641, %s33, 1
        %s643 = scalar_lea.vmem %s12, %s642
      $region76: #{encoder_forward.1} parent=35 // pred_fallthru
        _
      // Predicated region
      $region77: #{encoder_forward.1} parent=35 // pred_check
        %p644 = pneg %p385
      $region78: #{encoder_forward.1} parent=35 // pred_check_branch
        %646 = sbr.rel (%p644) target = $region80
      $region79: #{encoder_forward.1} parent=35 // pred_region
        %p647 = scmp.lt.s32.totalorder %s33, 1
        %s648 = scalar_select %p647, %s33, 1
        %s649 = smul.addr %s648, 8
        %s650 = smul.addr %s649, 4
        %s651 = scalar_lea.vmem %s13, %s650
      $region80: #{encoder_forward.1} parent=35 // pred_fallthru
        _
      // Predicated region
      $region81: #{encoder_forward.1} parent=35 // pred_check
        %p652 = pneg %p411
      $region82: #{encoder_forward.1} parent=35 // pred_check_branch
        %654 = sbr.rel (%p652) target = $region84
      $region83: #{encoder_forward.1} parent=35 // pred_region
        %p655 = scmp.lt.s32.totalorder %s33, 1
        %s656 = scalar_select %p655, %s33, 1
        %s657 = scalar_lea.vmem %s14, %s656
      $region84: #{encoder_forward.1} parent=35 // pred_fallthru
        _
      // Predicated region
      $region85: #{encoder_forward.1} parent=35 // pred_check
        %p658 = pneg %p437
      $region86: #{encoder_forward.1} parent=35 // pred_check_branch
        %660 = sbr.rel (%p658) target = $region88
      $region87: #{encoder_forward.1} parent=35 // pred_region
        %p661 = scmp.lt.s32.totalorder %s33, 1
        %s662 = scalar_select %p661, %s33, 1
        %s663 = smul.addr %s662, 2
        %s664 = smul.addr %s663, 8
        %s665 = scalar_lea.vmem %s15, %s664
      $region88: #{encoder_forward.1} parent=35 // pred_fallthru
        _
      // Predicated region
      $region89: #{encoder_forward.1} parent=35 // pred_check
        %p666 = pneg %p463
      $region90: #{encoder_forward.1} parent=35 // pred_check_branch
        %668 = sbr.rel (%p666) target = $region92
      $region91: #{encoder_forward.1} parent=35 // pred_region
        %p669 = scmp.lt.s32.totalorder %s33, 1
        %s670 = scalar_select %p669, %s33, 1
        %s671 = scalar_lea.vmem %s16, %s670
      $region92: #{encoder_forward.1} parent=35 // pred_fallthru
        _
    $region36: #{encoder_forward.1} parent=5 // pred_fallthru
      _
    %p672 = scmp.le.s32.totalorder 1, %s25
    %p673 = scmp.lt.s32.totalorder %s25, 3
    %p674 = pnand %p672, %p673
    %p675 = pneg %p674
    // Predicated region
    $region93: #{encoder_forward.1} parent=5 // pred_check
      _
    $region94: #{encoder_forward.1} parent=5 // pred_check_branch
      %677 = sbr.rel (%p674) target = $region96
    $region95: #{encoder_forward.1} parent=5 // pred_region
      %s678 = ssub.s32 %s25, 1
      %s679 = smul.u32 2, %s34
      %p680 = scmp.lt.s32.totalorder %s679, 1
      %s681 = scalar_select %p680, %s679, 1
      %s682 = smul.addr %s681, 3
      %s683 = smul.addr %s682, 8
      %s684 = scalar_lea.vmem %s0, %s683
      %p685 = pneg %p63
      %p686 = pneg %p60
      %p687 = pneg %p84
      %p688 = pneg %p81
      %p689 = pneg %p105
      %p690 = pneg %p102
      %p691 = scmp.lt.s32.totalorder %s35, 1
      %s692 = scalar_select %p691, %s35, 1
      %s693 = scalar_lea.vmem %s3, %s692
      %p694 = pneg %p131
      %p695 = pneg %p128
      %p696 = scmp.lt.s32.totalorder %s35, 1
      %s697 = scalar_select %p696, %s35, 1
      %s698 = scalar_lea.vmem %s4, %s697
      %p699 = pneg %p157
      %p700 = pneg %p154
      %p701 = scmp.lt.s32.totalorder %s35, 1
      %s702 = scalar_select %p701, %s35, 1
      %s703 = smul.addr %s702, 4
      %s704 = smul.addr %s703, 4
      %s705 = scalar_lea.vmem %s5, %s704
      %p706 = pneg %p183
      %p707 = pneg %p180
      %p708 = scmp.lt.s32.totalorder %s35, 1
      %s709 = scalar_select %p708, %s35, 1
      %s710 = scalar_lea.vmem %s6, %s709
      %p711 = pneg %p209
      %p712 = pneg %p206
      %p713 = scmp.lt.s32.totalorder %s35, 1
      %s714 = scalar_select %p713, %s35, 1
      %s715 = smul.addr %s714, 4
      %s716 = smul.addr %s715, 4
      %s717 = scalar_lea.vmem %s7, %s716
      %p718 = pneg %p235
      %p719 = pneg %p232
      %p720 = scmp.lt.s32.totalorder %s35, 1
      %s721 = scalar_select %p720, %s35, 1
      %s722 = scalar_lea.vmem %s8, %s721
      %p723 = pneg %p261
      %p724 = pneg %p258
      %p725 = scmp.lt.s32.totalorder %s35, 1
      %s726 = scalar_select %p725, %s35, 1
      %s727 = scalar_lea.vmem %s9, %s726
      %p728 = pneg %p287
      %p729 = pneg %p284
      %p730 = scmp.lt.s32.totalorder %s35, 1
      %s731 = scalar_select %p730, %s35, 1
      %s732 = scalar_lea.vmem %s10, %s731
      %p733 = pneg %p313
      %p734 = pneg %p310
      %p735 = scmp.lt.s32.totalorder %s35, 1
      %s736 = scalar_select %p735, %s35, 1
      %s737 = smul.addr %s736, 4
      %s738 = smul.addr %s737, 4
      %s739 = scalar_lea.vmem %s11, %s738
      %p740 = pneg %p339
      %p741 = pneg %p336
      %p742 = scmp.lt.s32.totalorder %s35, 1
      %s743 = scalar_select %p742, %s35, 1
      %s744 = scalar_lea.vmem %s12, %s743
      %p745 = pneg %p365
      %p746 = pneg %p362
      %p747 = scmp.lt.s32.totalorder %s35, 1
      %s748 = scalar_select %p747, %s35, 1
      %s749 = smul.addr %s748, 8
      %s750 = smul.addr %s749, 4
      %s751 = scalar_lea.vmem %s13, %s750
      %p752 = pneg %p391
      %p753 = pneg %p388
      %p754 = scmp.lt.s32.totalorder %s35, 1
      %s755 = scalar_select %p754, %s35, 1
      %s756 = scalar_lea.vmem %s14, %s755
      %p757 = pneg %p417
      %p758 = pneg %p414
      %p759 = scmp.lt.s32.totalorder %s35, 1
      %s760 = scalar_select %p759, %s35, 1
      %s761 = smul.addr %s760, 2
      %s762 = smul.addr %s761, 8
      %s763 = scalar_lea.vmem %s15, %s762
      %p764 = pneg %p443
      %p765 = pneg %p440
      %p766 = scmp.lt.s32.totalorder %s35, 1
      %s767 = scalar_select %p766, %s35, 1
      %s768 = scalar_lea.vmem %s16, %s767
      %p769 = pneg %p469
      %p770 = pneg %p466
      %p771 = pneg %p490
      %p772 = pneg %p487
      %p773 = pneg %p511
      %p774 = pneg %p508
      %p775 = pneg %p537
      %p776 = pneg %p534
      %s777 = smul.u32 2, %s34
      %p778 = scmp.lt.s32.totalorder %s777, 1
      %s779 = scalar_select %p778, %s777, 1
      %s780 = smul.addr %s779, 3
      %s781 = smul.addr %s780, 8
      %s782 = scalar_lea.vmem %s19, %s781
      %s783 = smul.u32 2, %s34
      %p784 = scmp.lt.s32.totalorder %s783, 1
      %s785 = scalar_select %p784, %s783, 1
      %s786 = smul.addr %s785, 3
      %s787 = smul.addr %s786, 8
      %s788 = scalar_lea.vmem %s0, %s787
      %s789 = smul.u32 2, %s34
      %p790 = scmp.lt.s32.totalorder %s35, 1
      %s791 = scalar_select %p790, %s35, 1
      %s792 = scalar_lea.vmem %s3, %s791
      %p793 = scmp.lt.s32.totalorder %s35, 1
      %s794 = scalar_select %p793, %s35, 1
      %s795 = scalar_lea.vmem %s4, %s794
      %p796 = scmp.lt.s32.totalorder %s35, 1
      %s797 = scalar_select %p796, %s35, 1
      %s798 = smul.addr %s797, 4
      %s799 = smul.addr %s798, 4
      %s800 = scalar_lea.vmem %s5, %s799
      %p801 = scmp.lt.s32.totalorder %s35, 1
      %s802 = scalar_select %p801, %s35, 1
      %s803 = scalar_lea.vmem %s6, %s802
      %p804 = scmp.lt.s32.totalorder %s35, 1
      %s805 = scalar_select %p804, %s35, 1
      %s806 = smul.addr %s805, 4
      %s807 = smul.addr %s806, 4
      %s808 = scalar_lea.vmem %s7, %s807
      %p809 = scmp.lt.s32.totalorder %s35, 1
      %s810 = scalar_select %p809, %s35, 1
      %s811 = scalar_lea.vmem %s8, %s810
      %p812 = scmp.lt.s32.totalorder %s35, 1
      %s813 = scalar_select %p812, %s35, 1
      %s814 = scalar_lea.vmem %s9, %s813
      %p815 = scmp.lt.s32.totalorder %s35, 1
      %s816 = scalar_select %p815, %s35, 1
      %s817 = scalar_lea.vmem %s10, %s816
      %p818 = scmp.lt.s32.totalorder %s35, 1
      %s819 = scalar_select %p818, %s35, 1
      %s820 = smul.addr %s819, 4
      %s821 = smul.addr %s820, 4
      %s822 = scalar_lea.vmem %s11, %s821
      %p823 = scmp.lt.s32.totalorder %s35, 1
      %s824 = scalar_select %p823, %s35, 1
      %s825 = scalar_lea.vmem %s12, %s824
      %p826 = scmp.lt.s32.totalorder %s35, 1
      %s827 = scalar_select %p826, %s35, 1
      %s828 = smul.addr %s827, 8
      %s829 = smul.addr %s828, 4
      %s830 = scalar_lea.vmem %s13, %s829
      %p831 = scmp.lt.s32.totalorder %s35, 1
      %s832 = scalar_select %p831, %s35, 1
      %s833 = scalar_lea.vmem %s14, %s832
      %p834 = scmp.lt.s32.totalorder %s35, 1
      %s835 = scalar_select %p834, %s35, 1
      %s836 = smul.addr %s835, 2
      %s837 = smul.addr %s836, 8
      %s838 = scalar_lea.vmem %s15, %s837
      %p839 = scmp.lt.s32.totalorder %s35, 1
      %s840 = scalar_select %p839, %s35, 1
      %s841 = scalar_lea.vmem %s16, %s840
      %s842 = smul.u32 2, %s34
      %p843 = scmp.lt.s32.totalorder %s842, 1
      %s844 = scalar_select %p843, %s842, 1
      %s845 = smul.addr %s844, 3
      %s846 = smul.addr %s845, 8
      %s847 = scalar_lea.vmem %s19, %s846
      %s848 = smul.u32 2, %s34
      %p850 = scmp.eq.s32.totalorder %s35, 0
      // Predicated region
      $region97: #{encoder_forward.1} parent=95 // pred_check
        %p851 = pneg %p850
      $region98: #{encoder_forward.1} parent=95 // pred_check_branch
        %853 = sbr.rel (%p851) target = $region100
      $region99: #{encoder_forward.1} parent=95 // pred_region
        %v854 = vld [vmem:[%s788] sm:$0xff]
        %v855 = vld [vmem:[%s788 + $0x8] sm:$0xff]
        %v856 = vld [vmem:[%s788 + $0x10] sm:$0xff]
        %v857 = vld [vmem:[%s788 + $0x18] sm:$0xff]
        %v858 = vld [vmem:[%s788 + $0x20] sm:$0xff]
        %v859 = vld [vmem:[%s788 + $0x28] sm:$0xff]
        %vm860 = vcmask 261120
        %861 = vst.msk [vmem:[#allocation2] sm:$0xff] %vm860, %v854
        %862 = vst.msk [vmem:[#allocation2 + $0x8] sm:$0xff] %vm860, %v855
        %863 = vst.msk [vmem:[#allocation2 + $0x10] sm:$0xff] %vm860, %v856
        %864 = vst.msk [vmem:[#allocation2 + $0x18] sm:$0xff] %vm860, %v857
        %865 = vst.msk [vmem:[#allocation2 + $0x20] sm:$0xff] %vm860, %v858
        %866 = vst.msk [vmem:[#allocation2 + $0x28] sm:$0xff] %vm860, %v859
      $region100: #{encoder_forward.1} parent=95 // pred_fallthru
        _
      %v867 = vld [vmem:[%s792] sm:$0x1]
      %v868 = vld [vmem:[%s795] sm:$0x1]
      %v869 = vld [vmem:[%s800] sm:$0xf]
      %v870 = vld [vmem:[%s800 + $0x4] sm:$0xf]
      %v871 = vld [vmem:[%s800 + $0x8] sm:$0xf]
      %v872 = vld [vmem:[%s800 + $0xc] sm:$0xf]
      %v873 = vld [vmem:[%s803] sm:$0x1]
      %v874 = vld [vmem:[%s808] sm:$0xf]
      %v875 = vld [vmem:[%s808 + $0x4] sm:$0xf]
      %v876 = vld [vmem:[%s808 + $0x8] sm:$0xf]
      %v877 = vld [vmem:[%s808 + $0xc] sm:$0xf]
      %v878 = vld [vmem:[%s811] sm:$0x1]
      %v879 = vld [vmem:[%s814] sm:$0x1]
      %v880 = vld [vmem:[%s817] sm:$0x1]
      %v881 = vld [vmem:[%s822] sm:$0xf]
      %v882 = vld [vmem:[%s822 + $0x4] sm:$0xf]
      %v883 = vld [vmem:[%s822 + $0x8] sm:$0xf]
      %v884 = vld [vmem:[%s822 + $0xc] sm:$0xf]
      %v885 = vld [vmem:[%s825] sm:$0x1]
      %v886 = vld [vmem:[%s830] sm:$0xf]
      %v887 = vld [vmem:[%s830 + $0x4] sm:$0xf]
      %v888 = vld [vmem:[%s830 + $0x8] sm:$0xf]
      %v889 = vld [vmem:[%s830 + $0xc] sm:$0xf]
      %v890 = vld [vmem:[%s830 + $0x10] sm:$0xf]
      %v891 = vld [vmem:[%s830 + $0x14] sm:$0xf]
      %v892 = vld [vmem:[%s830 + $0x18] sm:$0xf]
      %v893 = vld [vmem:[%s830 + $0x1c] sm:$0xf]
      %v894 = vld [vmem:[%s833] sm:$0x1]
      %v895 = vld [vmem:[%s838] sm:$0xff]
      %v896 = vld [vmem:[%s838 + $0x8] sm:$0x1]
      %v897 = vld [vmem:[%s841] sm:$0x1]
      %v898 = vld [vmem:[%s17] sm:$0x1]
      %v899 = vld [vmem:[%s18] sm:$0x1]
      %v900 = vld [vmem:[%s2] sm:$0xff]
      %v901 = vld [vmem:[%s2 + $0x8] sm:$0xff]
      %v902 = vld [vmem:[%s2 + $0x10] sm:$0xff]
      %v903 = vld [vmem:[%s1] sm:$0xff]
      %v904 = vld [vmem:[%s1 + $0x8] sm:$0xff]
      %v905 = vld [vmem:[%s1 + $0x10] sm:$0xff]
      %s906 = scalar_lea.vmem %s1, 24
      %v907 = vld [vmem:[%s906] sm:$0xff]
      %v908 = vld [vmem:[%s906 + $0x8] sm:$0xff]
      %v909 = vld [vmem:[%s906 + $0x10] sm:$0xff]
      %s910 = scalar_lea.vmem %s1, 48
      %v911 = vld [vmem:[%s910] sm:$0xff]
      %v912 = vld [vmem:[%s910 + $0x8] sm:$0xff]
      %v913 = vld [vmem:[%s910 + $0x10] sm:$0xff]
      %s914 = scalar_lea.vmem %s1, 72
      %v915 = vld [vmem:[%s914] sm:$0xff]
      %v916 = vld [vmem:[%s914 + $0x8] sm:$0xff]
      %v917 = vld [vmem:[%s914 + $0x10] sm:$0xff]
      %s918 = scalar_lea.vmem %s1, 96
      %v919 = vld [vmem:[%s918] sm:$0xff]
      %v920 = vld [vmem:[%s918 + $0x8] sm:$0xff]
      %v921 = vld [vmem:[%s918 + $0x10] sm:$0xff]
      %s922 = scalar_lea.vmem %s1, 120
      %v923 = vld [vmem:[%s922] sm:$0xff]
      %v924 = vld [vmem:[%s922 + $0x8] sm:$0xff]
      %v925 = vld [vmem:[%s922 + $0x10] sm:$0xff]
      %s926 = scalar_lea.vmem %s1, 144
      %v927 = vld [vmem:[%s926] sm:$0xff]
      %v928 = vld [vmem:[%s926 + $0x8] sm:$0xff]
      %v929 = vld [vmem:[%s926 + $0x10] sm:$0xff]
      %s930 = scalar_lea.vmem %s1, 168
      %v931 = vld [vmem:[%s930] sm:$0xff]
      %v932 = vld [vmem:[%s930 + $0x8] sm:$0xff]
      %v933 = vld [vmem:[%s930 + $0x10] sm:$0xff]
      %s934 = scalar_lea.vmem %s1, 192
      %v935 = vld [vmem:[%s934] sm:$0xff]
      %v936 = vld [vmem:[%s934 + $0x8] sm:$0xff]
      %v937 = vld [vmem:[%s934 + $0x10] sm:$0xff]
      %v938 = vlaneseq
      %v939 = vand.u32 %v938, 127
      %vm940 = vcmp.lt.s32.totalorder %v939, 17
      %v941 = vsel %vm940, 0.0, -1e+30
      %v942 = vld [vmem:[#allocation2] sm:$0xff]
      %v943 = vld [vmem:[#allocation2 + $0x8] sm:$0xff]
      %v944 = vld [vmem:[#allocation2 + $0x10] sm:$0xff]
      %vm945 = vcmask 261120
      %v946 = vsel %vm945, %v942, 0.0
      %947 = vadd.xlane.f32.xlu0 %v946
      %v948 = vpop.xlane.xlu0 %947
      %v949 = vsel %vm945, %v943, 0.0
      %950 = vadd.xlane.f32.xlu0 %v949
      %v951 = vpop.xlane.xlu0 %950
      %v952 = vsel %vm945, %v944, 0.0
      %953 = vadd.xlane.f32.xlu0 %v952
      %v954 = vpop.xlane.xlu0 %953
      %v955 = vrcp.pop 32.0
      %v956 = vmul.f32 32.0, %v955
      %v957 = vsub.f32 1.0, %v956
      %v958 = vmul.f32 %v955, %v957
      %v959 = vadd.f32 %v955, %v958
      %vm960 = vweird.f32 %v955
      %v961 = vsel %vm960, %v955, %v959
      %v962 = vmul.f32 %v948, %v961
      %v963 = vmul.f32 %v951, %v961
      %v964 = vmul.f32 %v954, %v961
      %v965 = vmul.f32 %v942, %v942
      %v966 = vmul.f32 %v943, %v943
      %v967 = vmul.f32 %v944, %v944
      %v968 = vsel %vm945, %v965, 0.0
      %969 = vadd.xlane.f32.xlu0 %v968
      %v970 = vpop.xlane.xlu0 %969
      %v971 = vsel %vm945, %v966, 0.0
      %972 = vadd.xlane.f32.xlu0 %v971
      %v973 = vpop.xlane.xlu0 %972
      %v974 = vsel %vm945, %v967, 0.0
      %975 = vadd.xlane.f32.xlu0 %v974
      %v976 = vpop.xlane.xlu0 %975
      %v977 = vmul.f32 %v970, %v961
      %v978 = vmul.f32 %v973, %v961
      %v979 = vmul.f32 %v976, %v961
      %v980 = vmul.f32 %v962, %v962
      %v981 = vmul.f32 %v963, %v963
      %v982 = vmul.f32 %v964, %v964
      %v983 = vsub.f32 %v977, %v980
      %v984 = vsub.f32 %v978, %v981
      %v985 = vsub.f32 %v979, %v982
      %v986 = vmax.f32 %v983, 0.0
      %v987 = vmax.f32 %v984, 0.0
      %v988 = vmax.f32 %v985, 0.0
      %v989 = vsub.f32 %v942, %v962
      %v990 = vsub.f32 %v943, %v963
      %v991 = vsub.f32 %v944, %v964
      %v992 = vadd.f32 %v986, 1e-06
      %v993 = vadd.f32 %v987, 1e-06
      %v994 = vadd.f32 %v988, 1e-06
      %v995 = vrsqrt.pop %v992
      %v996 = vmul.f32 %v995, %v992
      %v997 = vmul.f32 %v996, %v995
      %v998 = vmul.f32 0.5, %v997
      %v999 = vsub.f32 1.5, %v998
      %v1000 = vmul.f32 %v995, %v999
      %vm1001 = vweird.f32 %v992
      %vm1002 = vweird.f32 %v995
      %vm1003 = vmor %vm1001, %vm1002
      %v1004 = vsel %vm1003, %v995, %v1000
      %v1005 = vrsqrt.pop %v993
      %v1006 = vmul.f32 %v1005, %v993
      %v1007 = vmul.f32 %v1006, %v1005
      %v1008 = vmul.f32 0.5, %v1007
      %v1009 = vsub.f32 1.5, %v1008
      %v1010 = vmul.f32 %v1005, %v1009
      %vm1011 = vweird.f32 %v993
      %vm1012 = vweird.f32 %v1005
      %vm1013 = vmor %vm1011, %vm1012
      %v1014 = vsel %vm1013, %v1005, %v1010
      %v1015 = vrsqrt.pop %v994
      %v1016 = vmul.f32 %v1015, %v994
      %v1017 = vmul.f32 %v1016, %v1015
      %v1018 = vmul.f32 0.5, %v1017
      %v1019 = vsub.f32 1.5, %v1018
      %v1020 = vmul.f32 %v1015, %v1019
      %vm1021 = vweird.f32 %v994
      %vm1022 = vweird.f32 %v1015
      %vm1023 = vmor %vm1021, %vm1022
      %v1024 = vsel %vm1023, %v1015, %v1020
      %v1025 = vmul.f32 %v989, %v1004
      %v1026 = vmul.f32 %v990, %v1014
      %v1027 = vmul.f32 %v991, %v1024
      %v1029 = vperm.slane %v867, 0
      %v1031 = vmul.f32 %v1025, %v1029
      %v1032 = vmul.f32 %v1026, %v1029
      %v1033 = vmul.f32 %v1027, %v1029
      %v1035 = vperm.slane %v868, 0
      %v1037 = vadd.f32 %v1031, %v1035
      %v1038 = vadd.f32 %v1032, %v1035
      %v1039 = vadd.f32 %v1033, %v1035
      %v1040 = vpack.c.bf16 %v1038, %v1037
      %v1041 = vpack.c.bf16 %v1039, %v1039
      %v1043 = vperm.slane %v873, 0
      %v1049 = vunpack.c.l.b16 %v869
      %v1050 = vunpack.c.l.b16 %v870
      %v1051 = vunpack.c.l.b16 %v871
      %v1052 = vunpack.c.l.b16 %v872
      %v1053 = vpack.c.b16 %v1050, %v1049
      %v1054 = vpack.c.b16 %v1052, %v1051
      %v1058 = vsel %vm945, %v1040, 0
      %v1061 = vsel %vm945, %v1041, 0
      %1063 = vmatpush.bf16.msra.mxu0 0
      %1064 = vmatpush.bf16.msra.mxu0 0
      %1065 = vmatpush.bf16.msra.mxu0 0
      %1066 = vmatpush.bf16.msra.mxu0 0
      %1067 = vmatpush.bf16.msra.mxu0 0
      %1068 = vmatpush.bf16.msra.mxu0 0
      %1069 = vmatpush.bf16.msra.mxu0 %v1054
      %1070 = vmatpush.bf16.msra.mxu0 %v1053
      %1071 = vmatmul.bf16.gmra.mxu0 %v1058
      %v1072 = vpop.f32.mrf.mxu0
      %v1073 = vadd.f32 %v1043, %v1072
      %v1074 = vpop.f32.mrf.mxu0
      %v1075 = vadd.f32 %v1043, %v1074
      %1076 = vmatmul.bf16.gmra.mxu0 %v1061
      %v1077 = vpop.f32.mrf.mxu0
      %v1078 = vadd.f32 %v1043, %v1077
      %v1079 = vpop.f32.mrf.mxu0
      %1080 = vdwg.mxu0
      %v1081 = vpack.c.bf16 %v1073, %v1073
      %v1082 = vpack.c.bf16 %v1075, %v1075
      %v1083 = vpack.c.bf16 %v1078, %v1078
      %v1087 = vunpack.c.l.b16 %v1081
      %v1088 = vunpack.c.l.b16 %v1082
      %v1089 = vunpack.c.l.b16 %v1083
      %v1090 = vpack.c.b16 %v1088, %v1087
      %v1091 = vpack.c.b16 %v1089, %v1089
      %1092 = vrot.lane.b32.xlu0 %v1090, 96
      %v1093 = vpop.permute.xlu0 %1092
      %1094 = vrot.lane.b32.xlu0 %v1091, 96
      %v1095 = vpop.permute.xlu0 %1094
      %vm1096 = vcmask 64512
      %v1098 = vsel %vm1096, %v1090, 0
      %v1101 = vsel %vm1096, %v1091, 0
      %v1104 = vsel %vm1096, %v1093, 0
      %v1107 = vsel %vm1096, %v1095, 0
      %1109 = vmatpush.bf16.xpose.msra.mxu0 0
      %1110 = vmatpush.bf16.xpose.msra.mxu0 0
      %1111 = vmatpush.bf16.xpose.msra.mxu0 0
      %1112 = vmatpush.bf16.xpose.msra.mxu0 0
      %1113 = vmatpush.bf16.xpose.msra.mxu0 0
      %1114 = vmatpush.bf16.xpose.msra.mxu0 0
      %1115 = vmatpush.bf16.xpose.msra.mxu0 %v1107
      %1116 = vmatpush.bf16.xpose.msra.mxu0 %v1104
      %1117 = vmatmul.bf16.gmra.mxu0 %v1098
      %v1118 = vpop.f32.mrf.mxu0
      %v1119 = vadd.f32 %v941, %v1118
      %v1120 = vpop.f32.mrf.mxu0
      %v1121 = vadd.f32 %v941, %v1120
      %1122 = vmatmul.bf16.gmra.mxu0 %v1101
      %v1123 = vpop.f32.mrf.mxu0
      %v1124 = vadd.f32 %v941, %v1123
      %v1125 = vpop.f32.mrf.mxu0
      %1126 = vdwg.mxu0
      %vm1127 = vcmask 195584
      %v1128 = vsel %vm1127, %v1119, -inf
      %1129 = vmax.xlane.f32.xlu0 %v1128
      %v1130 = vpop.xlane.xlu0 %1129
      %v1131 = vsel %vm1127, %v1121, -inf
      %1132 = vmax.xlane.f32.xlu0 %v1131
      %v1133 = vpop.xlane.xlu0 %1132
      %v1134 = vsel %vm1127, %v1124, -inf
      %1135 = vmax.xlane.f32.xlu0 %v1134
      %v1136 = vpop.xlane.xlu0 %1135
      %v1137 = vsub.f32 %v1119, %v1130
      %v1138 = vsub.f32 %v1121, %v1133
      %v1139 = vsub.f32 %v1124, %v1136
      %v1140 = vmul.f32 %v1137, 1.442695
      %v1141 = vpow.pop %v1140
      %v1142 = vmul.f32 %v1138, 1.442695
      %v1143 = vpow.pop %v1142
      %v1144 = vmul.f32 %v1139, 1.442695
      %v1145 = vpow.pop %v1144
      %v1146 = vsel %vm1127, %v1141, 0.0
      %1147 = vadd.xlane.f32.xlu0 %v1146
      %v1148 = vpop.xlane.xlu0 %1147
      %v1149 = vsel %vm1127, %v1143, 0.0
      %1150 = vadd.xlane.f32.xlu0 %v1149
      %v1151 = vpop.xlane.xlu0 %1150
      %v1152 = vsel %vm1127, %v1145, 0.0
      %1153 = vadd.xlane.f32.xlu0 %v1152
      %v1154 = vpop.xlane.xlu0 %1153
      %v1155 = vrcp.pop %v1148
      %v1156 = vrcp.pop %v1151
      %v1157 = vrcp.pop %v1154
      %v1158 = vmul.f32 %v1141, %v1155
      %v1159 = vmul.f32 %v1143, %v1156
      %v1160 = vmul.f32 %v1145, %v1157
      %v1161 = vpack.c.bf16 %v1159, %v1158
      %v1162 = vpack.c.bf16 %v1160, %v1160
      %1163 = vrot.lane.b32.xlu0 %v1090, 64
      %v1164 = vpop.permute.xlu0 %1163
      %1165 = vrot.lane.b32.xlu0 %v1091, 64
      %v1166 = vpop.permute.xlu0 %1165
      %v1169 = vsel %vm1127, %v1161, 0
      %v1172 = vsel %vm1127, %v1162, 0
      %vm1174 = vcmask 1043456
      %v1176 = vsel %vm1174, %v1166, 0
      %1178 = vmatpush.bf16.msra.mxu0 0
      %1179 = vmatpush.bf16.msra.mxu0 0
      %1180 = vmatpush.bf16.msra.mxu0 0
      %1181 = vmatpush.bf16.msra.mxu0 0
      %1182 = vmatpush.bf16.msra.mxu0 0
      %1183 = vmatpush.bf16.msra.mxu0 0
      %1184 = vmatpush.bf16.msra.mxu0 %v1176
      %1185 = vmatpush.bf16.msra.mxu0 %v1164
      %1186 = vmatmul.bf16.gmra.mxu0 %v1169
      %v1187 = vpop.f32.mrf.mxu0
      %v1188 = vadd.f32 0.0, %v1187
      %v1189 = vpop.f32.mrf.mxu0
      %v1190 = vadd.f32 0.0, %v1189
      %1191 = vmatmul.bf16.gmra.mxu0 %v1172
      %v1192 = vpop.f32.mrf.mxu0
      %v1193 = vadd.f32 0.0, %v1192
      %v1194 = vpop.f32.mrf.mxu0
      %1195 = vdwg.mxu0
      %1196 = vrot.lane.b32.xlu0 %v1090, 120
      %v1197 = vpop.permute.xlu0 %1196
      %1198 = vrot.lane.b32.xlu0 %v1091, 120
      %v1199 = vpop.permute.xlu0 %1198
      %1200 = vrot.lane.b32.xlu0 %v1090, 88
      %v1201 = vpop.permute.xlu0 %1200
      %1202 = vrot.lane.b32.xlu0 %v1091, 88
      %v1203 = vpop.permute.xlu0 %1202
      %v1205 = vsel %vm1096, %v1197, 0
      %v1208 = vsel %vm1096, %v1199, 0
      %v1211 = vsel %vm1096, %v1201, 0
      %v1214 = vsel %vm1096, %v1203, 0
      %1216 = vmatpush.bf16.xpose.msra.mxu0 0
      %1217 = vmatpush.bf16.xpose.msra.mxu0 0
      %1218 = vmatpush.bf16.xpose.msra.mxu0 0
      %1219 = vmatpush.bf16.xpose.msra.mxu0 0
      %1220 = vmatpush.bf16.xpose.msra.mxu0 0
      %1221 = vmatpush.bf16.xpose.msra.mxu0 0
      %1222 = vmatpush.bf16.xpose.msra.mxu0 %v1214
      %1223 = vmatpush.bf16.xpose.msra.mxu0 %v1211
      %1224 = vmatmul.bf16.gmra.mxu0 %v1205
      %v1225 = vpop.f32.mrf.mxu0
      %v1226 = vadd.f32 %v941, %v1225
      %v1227 = vpop.f32.mrf.mxu0
      %v1228 = vadd.f32 %v941, %v1227
      %1229 = vmatmul.bf16.gmra.mxu0 %v1208
      %v1230 = vpop.f32.mrf.mxu0
      %v1231 = vadd.f32 %v941, %v1230
      %v1232 = vpop.f32.mrf.mxu0
      %1233 = vdwg.mxu0
      %v1234 = vsel %vm1127, %v1226, -inf
      %1235 = vmax.xlane.f32.xlu0 %v1234
      %v1236 = vpop.xlane.xlu0 %1235
      %v1237 = vsel %vm1127, %v1228, -inf
      %1238 = vmax.xlane.f32.xlu0 %v1237
      %v1239 = vpop.xlane.xlu0 %1238
      %v1240 = vsel %vm1127, %v1231, -inf
      %1241 = vmax.xlane.f32.xlu0 %v1240
      %v1242 = vpop.xlane.xlu0 %1241
      %v1243 = vsub.f32 %v1226, %v1236
      %v1244 = vsub.f32 %v1228, %v1239
      %v1245 = vsub.f32 %v1231, %v1242
      %v1246 = vmul.f32 %v1243, 1.442695
      %v1247 = vpow.pop %v1246
      %v1248 = vmul.f32 %v1244, 1.442695
      %v1249 = vpow.pop %v1248
      %v1250 = vmul.f32 %v1245, 1.442695
      %v1251 = vpow.pop %v1250
      %v1252 = vsel %vm1127, %v1247, 0.0
      %1253 = vadd.xlane.f32.xlu0 %v1252
      %v1254 = vpop.xlane.xlu0 %1253
      %v1255 = vsel %vm1127, %v1249, 0.0
      %1256 = vadd.xlane.f32.xlu0 %v1255
      %v1257 = vpop.xlane.xlu0 %1256
      %v1258 = vsel %vm1127, %v1251, 0.0
      %1259 = vadd.xlane.f32.xlu0 %v1258
      %v1260 = vpop.xlane.xlu0 %1259
      %v1261 = vrcp.pop %v1254
      %v1262 = vrcp.pop %v1257
      %v1263 = vrcp.pop %v1260
      %v1264 = vmul.f32 %v1247, %v1261
      %v1265 = vmul.f32 %v1249, %v1262
      %v1266 = vmul.f32 %v1251, %v1263
      %v1267 = vpack.c.bf16 %v1265, %v1264
      %v1268 = vpack.c.bf16 %v1266, %v1266
      %1269 = vrot.lane.b32.xlu0 %v1090, 56
      %v1270 = vpop.permute.xlu0 %1269
      %1271 = vrot.lane.b32.xlu0 %v1091, 56
      %v1272 = vpop.permute.xlu0 %1271
      %v1275 = vsel %vm1127, %v1267, 0
      %v1278 = vsel %vm1127, %v1268, 0
      %v1281 = vsel %vm1174, %v1272, 0
      %1283 = vmatpush.bf16.msra.mxu0 0
      %1284 = vmatpush.bf16.msra.mxu0 0
      %1285 = vmatpush.bf16.msra.mxu0 0
      %1286 = vmatpush.bf16.msra.mxu0 0
      %1287 = vmatpush.bf16.msra.mxu0 0
      %1288 = vmatpush.bf16.msra.mxu0 0
      %1289 = vmatpush.bf16.msra.mxu0 %v1281
      %1290 = vmatpush.bf16.msra.mxu0 %v1270
      %1291 = vmatmul.bf16.gmra.mxu0 %v1275
      %v1292 = vpop.f32.mrf.mxu0
      %v1293 = vadd.f32 0.0, %v1292
      %v1294 = vpop.f32.mrf.mxu0
      %v1295 = vadd.f32 0.0, %v1294
      %1296 = vmatmul.bf16.gmra.mxu0 %v1278
      %v1297 = vpop.f32.mrf.mxu0
      %v1298 = vadd.f32 0.0, %v1297
      %v1299 = vpop.f32.mrf.mxu0
      %1300 = vdwg.mxu0
      %1301 = vrot.lane.b32.xlu0 %v1090, 112
      %v1302 = vpop.permute.xlu0 %1301
      %1303 = vrot.lane.b32.xlu0 %v1091, 112
      %v1304 = vpop.permute.xlu0 %1303
      %1305 = vrot.lane.b32.xlu0 %v1090, 80
      %v1306 = vpop.permute.xlu0 %1305
      %1307 = vrot.lane.b32.xlu0 %v1091, 80
      %v1308 = vpop.permute.xlu0 %1307
      %v1310 = vsel %vm1096, %v1302, 0
      %v1313 = vsel %vm1096, %v1304, 0
      %v1316 = vsel %vm1096, %v1306, 0
      %v1319 = vsel %vm1096, %v1308, 0
      %1321 = vmatpush.bf16.xpose.msra.mxu0 0
      %1322 = vmatpush.bf16.xpose.msra.mxu0 0
      %1323 = vmatpush.bf16.xpose.msra.mxu0 0
      %1324 = vmatpush.bf16.xpose.msra.mxu0 0
      %1325 = vmatpush.bf16.xpose.msra.mxu0 0
      %1326 = vmatpush.bf16.xpose.msra.mxu0 0
      %1327 = vmatpush.bf16.xpose.msra.mxu0 %v1319
      %1328 = vmatpush.bf16.xpose.msra.mxu0 %v1316
      %1329 = vmatmul.bf16.gmra.mxu0 %v1310
      %v1330 = vpop.f32.mrf.mxu0
      %v1331 = vadd.f32 %v941, %v1330
      %v1332 = vpop.f32.mrf.mxu0
      %v1333 = vadd.f32 %v941, %v1332
      %1334 = vmatmul.bf16.gmra.mxu0 %v1313
      %v1335 = vpop.f32.mrf.mxu0
      %v1336 = vadd.f32 %v941, %v1335
      %v1337 = vpop.f32.mrf.mxu0
      %1338 = vdwg.mxu0
      %v1339 = vsel %vm1127, %v1331, -inf
      %1340 = vmax.xlane.f32.xlu0 %v1339
      %v1341 = vpop.xlane.xlu0 %1340
      %v1342 = vsel %vm1127, %v1333, -inf
      %1343 = vmax.xlane.f32.xlu0 %v1342
      %v1344 = vpop.xlane.xlu0 %1343
      %v1345 = vsel %vm1127, %v1336, -inf
      %1346 = vmax.xlane.f32.xlu0 %v1345
      %v1347 = vpop.xlane.xlu0 %1346
      %v1348 = vsub.f32 %v1331, %v1341
      %v1349 = vsub.f32 %v1333, %v1344
      %v1350 = vsub.f32 %v1336, %v1347
      %v1351 = vmul.f32 %v1348, 1.442695
      %v1352 = vpow.pop %v1351
      %v1353 = vmul.f32 %v1349, 1.442695
      %v1354 = vpow.pop %v1353
      %v1355 = vmul.f32 %v1350, 1.442695
      %v1356 = vpow.pop %v1355
      %v1357 = vsel %vm1127, %v1352, 0.0
      %1358 = vadd.xlane.f32.xlu0 %v1357
      %v1359 = vpop.xlane.xlu0 %1358
      %v1360 = vsel %vm1127, %v1354, 0.0
      %1361 = vadd.xlane.f32.xlu0 %v1360
      %v1362 = vpop.xlane.xlu0 %1361
      %v1363 = vsel %vm1127, %v1356, 0.0
      %1364 = vadd.xlane.f32.xlu0 %v1363
      %v1365 = vpop.xlane.xlu0 %1364
      %v1366 = vrcp.pop %v1359
      %v1367 = vrcp.pop %v1362
      %v1368 = vrcp.pop %v1365
      %v1369 = vmul.f32 %v1352, %v1366
      %v1370 = vmul.f32 %v1354, %v1367
      %v1371 = vmul.f32 %v1356, %v1368
      %v1372 = vpack.c.bf16 %v1370, %v1369
      %v1373 = vpack.c.bf16 %v1371, %v1371
      %1374 = vrot.lane.b32.xlu0 %v1090, 48
      %v1375 = vpop.permute.xlu0 %1374
      %1376 = vrot.lane.b32.xlu0 %v1091, 48
      %v1377 = vpop.permute.xlu0 %1376
      %v1380 = vsel %vm1127, %v1372, 0
      %v1383 = vsel %vm1127, %v1373, 0
      %v1386 = vsel %vm1174, %v1377, 0
      %1388 = vmatpush.bf16.msra.mxu0 0
      %1389 = vmatpush.bf16.msra.mxu0 0
      %1390 = vmatpush.bf16.msra.mxu0 0
      %1391 = vmatpush.bf16.msra.mxu0 0
      %1392 = vmatpush.bf16.msra.mxu0 0
      %1393 = vmatpush.bf16.msra.mxu0 0
      %1394 = vmatpush.bf16.msra.mxu0 %v1386
      %1395 = vmatpush.bf16.msra.mxu0 %v1375
      %1396 = vmatmul.bf16.gmra.mxu0 %v1380
      %v1397 = vpop.f32.mrf.mxu0
      %v1398 = vadd.f32 0.0, %v1397
      %v1399 = vpop.f32.mrf.mxu0
      %v1400 = vadd.f32 0.0, %v1399
      %1401 = vmatmul.bf16.gmra.mxu0 %v1383
      %v1402 = vpop.f32.mrf.mxu0
      %v1403 = vadd.f32 0.0, %v1402
      %v1404 = vpop.f32.mrf.mxu0
      %1405 = vdwg.mxu0
      %1406 = vrot.lane.b32.xlu0 %v1090, 104
      %v1407 = vpop.permute.xlu0 %1406
      %1408 = vrot.lane.b32.xlu0 %v1091, 104
      %v1409 = vpop.permute.xlu0 %1408
      %1410 = vrot.lane.b32.xlu0 %v1090, 72
      %v1411 = vpop.permute.xlu0 %1410
      %1412 = vrot.lane.b32.xlu0 %v1091, 72
      %v1413 = vpop.permute.xlu0 %1412
      %v1415 = vsel %vm1096, %v1407, 0
      %v1418 = vsel %vm1096, %v1409, 0
      %v1421 = vsel %vm1096, %v1411, 0
      %v1424 = vsel %vm1096, %v1413, 0
      %1426 = vmatpush.bf16.xpose.msra.mxu0 0
      %1427 = vmatpush.bf16.xpose.msra.mxu0 0
      %1428 = vmatpush.bf16.xpose.msra.mxu0 0
      %1429 = vmatpush.bf16.xpose.msra.mxu0 0
      %1430 = vmatpush.bf16.xpose.msra.mxu0 0
      %1431 = vmatpush.bf16.xpose.msra.mxu0 0
      %1432 = vmatpush.bf16.xpose.msra.mxu0 %v1424
      %1433 = vmatpush.bf16.xpose.msra.mxu0 %v1421
      %1434 = vmatmul.bf16.gmra.mxu0 %v1415
      %v1435 = vpop.f32.mrf.mxu0
      %v1436 = vadd.f32 %v941, %v1435
      %v1437 = vpop.f32.mrf.mxu0
      %v1438 = vadd.f32 %v941, %v1437
      %1439 = vmatmul.bf16.gmra.mxu0 %v1418
      %v1440 = vpop.f32.mrf.mxu0
      %v1441 = vadd.f32 %v941, %v1440
      %v1442 = vpop.f32.mrf.mxu0
      %1443 = vdwg.mxu0
      %v1444 = vsel %vm1127, %v1436, -inf
      %1445 = vmax.xlane.f32.xlu0 %v1444
      %v1446 = vpop.xlane.xlu0 %1445
      %v1447 = vsel %vm1127, %v1438, -inf
      %1448 = vmax.xlane.f32.xlu0 %v1447
      %v1449 = vpop.xlane.xlu0 %1448
      %v1450 = vsel %vm1127, %v1441, -inf
      %1451 = vmax.xlane.f32.xlu0 %v1450
      %v1452 = vpop.xlane.xlu0 %1451
      %v1453 = vsub.f32 %v1436, %v1446
      %v1454 = vsub.f32 %v1438, %v1449
      %v1455 = vsub.f32 %v1441, %v1452
      %v1456 = vmul.f32 %v1453, 1.442695
      %v1457 = vpow.pop %v1456
      %v1458 = vmul.f32 %v1454, 1.442695
      %v1459 = vpow.pop %v1458
      %v1460 = vmul.f32 %v1455, 1.442695
      %v1461 = vpow.pop %v1460
      %v1462 = vsel %vm1127, %v1457, 0.0
      %1463 = vadd.xlane.f32.xlu0 %v1462
      %v1464 = vpop.xlane.xlu0 %1463
      %v1465 = vsel %vm1127, %v1459, 0.0
      %1466 = vadd.xlane.f32.xlu0 %v1465
      %v1467 = vpop.xlane.xlu0 %1466
      %v1468 = vsel %vm1127, %v1461, 0.0
      %1469 = vadd.xlane.f32.xlu0 %v1468
      %v1470 = vpop.xlane.xlu0 %1469
      %v1471 = vrcp.pop %v1464
      %v1472 = vrcp.pop %v1467
      %v1473 = vrcp.pop %v1470
      %v1474 = vmul.f32 %v1457, %v1471
      %v1475 = vmul.f32 %v1459, %v1472
      %v1476 = vmul.f32 %v1461, %v1473
      %v1477 = vpack.c.bf16 %v1475, %v1474
      %v1478 = vpack.c.bf16 %v1476, %v1476
      %1479 = vrot.lane.b32.xlu0 %v1090, 40
      %v1480 = vpop.permute.xlu0 %1479
      %1481 = vrot.lane.b32.xlu0 %v1091, 40
      %v1482 = vpop.permute.xlu0 %1481
      %v1485 = vsel %vm1127, %v1477, 0
      %v1488 = vsel %vm1127, %v1478, 0
      %v1491 = vsel %vm1174, %v1482, 0
      %1493 = vmatpush.bf16.msra.mxu0 0
      %1494 = vmatpush.bf16.msra.mxu0 0
      %1495 = vmatpush.bf16.msra.mxu0 0
      %1496 = vmatpush.bf16.msra.mxu0 0
      %1497 = vmatpush.bf16.msra.mxu0 0
      %1498 = vmatpush.bf16.msra.mxu0 0
      %1499 = vmatpush.bf16.msra.mxu0 %v1491
      %1500 = vmatpush.bf16.msra.mxu0 %v1480
      %1501 = vmatmul.bf16.gmra.mxu0 %v1485
      %v1502 = vpop.f32.mrf.mxu0
      %v1503 = vadd.f32 0.0, %v1502
      %v1504 = vpop.f32.mrf.mxu0
      %v1505 = vadd.f32 0.0, %v1504
      %1506 = vmatmul.bf16.gmra.mxu0 %v1488
      %v1507 = vpop.f32.mrf.mxu0
      %v1508 = vadd.f32 0.0, %v1507
      %v1509 = vpop.f32.mrf.mxu0
      %1510 = vdwg.mxu0
      %1514 = vrot.lane.b32.xlu0 %v1293, 8
      %v1515 = vpop.permute.xlu0 %1514
      %1516 = vrot.lane.b32.xlu0 %v1295, 8
      %v1517 = vpop.permute.xlu0 %1516
      %1518 = vrot.lane.b32.xlu0 %v1298, 8
      %v1519 = vpop.permute.xlu0 %1518
      %1526 = vrot.lane.b32.xlu0 %v1398, 16
      %v1527 = vpop.permute.xlu0 %1526
      %1528 = vrot.lane.b32.xlu0 %v1400, 16
      %v1529 = vpop.permute.xlu0 %1528
      %1530 = vrot.lane.b32.xlu0 %v1403, 16
      %v1531 = vpop.permute.xlu0 %1530
      %1538 = vrot.lane.b32.xlu0 %v1503, 24
      %v1539 = vpop.permute.xlu0 %1538
      %1540 = vrot.lane.b32.xlu0 %v1505, 24
      %v1541 = vpop.permute.xlu0 %1540
      %1542 = vrot.lane.b32.xlu0 %v1508, 24
      %v1543 = vpop.permute.xlu0 %1542
      %v1547 = vsel %vm1096, %v1188, %v1515
      %v1548 = vsel %vm1096, %v1190, %v1517
      %v1549 = vsel %vm1096, %v1193, %v1519
      %vm1550 = vcmask 130048
      %v1551 = vsel %vm1550, %v1547, %v1527
      %v1552 = vsel %vm1550, %v1548, %v1529
      %v1553 = vsel %vm1550, %v1549, %v1531
      %v1554 = vsel %vm1127, %v1551, %v1539
      %v1555 = vsel %vm1127, %v1552, %v1541
      %v1556 = vsel %vm1127, %v1553, %v1543
      %v1557 = vpack.c.bf16 %v1555, %v1554
      %v1558 = vpack.c.bf16 %v1556, %v1556
      %v1560 = vperm.slane %v878, 0
      %v1566 = vunpack.c.l.b16 %v874
      %v1567 = vunpack.c.l.b16 %v875
      %v1568 = vunpack.c.l.b16 %v876
      %v1569 = vunpack.c.l.b16 %v877
      %v1570 = vpack.c.b16 %v1567, %v1566
      %v1571 = vpack.c.b16 %v1569, %v1568
      %v1575 = vsel %vm945, %v1557, 0
      %v1578 = vsel %vm945, %v1558, 0
      %1580 = vmatpush.bf16.msra.mxu0 0
      %1581 = vmatpush.bf16.msra.mxu0 0
      %1582 = vmatpush.bf16.msra.mxu0 0
      %1583 = vmatpush.bf16.msra.mxu0 0
      %1584 = vmatpush.bf16.msra.mxu0 0
      %1585 = vmatpush.bf16.msra.mxu0 0
      %1586 = vmatpush.bf16.msra.mxu0 %v1571
      %1587 = vmatpush.bf16.msra.mxu0 %v1570
      %1588 = vmatmul.bf16.gmra.mxu0 %v1575
      %v1589 = vpop.f32.mrf.mxu0
      %v1590 = vadd.f32 %v1560, %v1589
      %v1591 = vpop.f32.mrf.mxu0
      %v1592 = vadd.f32 %v1560, %v1591
      %1593 = vmatmul.bf16.gmra.mxu0 %v1578
      %v1594 = vpop.f32.mrf.mxu0
      %v1595 = vadd.f32 %v1560, %v1594
      %v1596 = vpop.f32.mrf.mxu0
      %1597 = vdwg.mxu0
      %v1598 = vadd.f32 %v942, %v1590
      %v1599 = vadd.f32 %v943, %v1592
      %v1600 = vadd.f32 %v944, %v1595
      %v1601 = vsel %vm945, %v1598, 0.0
      %1602 = vadd.xlane.f32.xlu0 %v1601
      %v1603 = vpop.xlane.xlu0 %1602
      %v1604 = vsel %vm945, %v1599, 0.0
      %1605 = vadd.xlane.f32.xlu0 %v1604
      %v1606 = vpop.xlane.xlu0 %1605
      %v1607 = vsel %vm945, %v1600, 0.0
      %1608 = vadd.xlane.f32.xlu0 %v1607
      %v1609 = vpop.xlane.xlu0 %1608
      %v1610 = vmul.f32 %v1603, %v961
      %v1611 = vmul.f32 %v1606, %v961
      %v1612 = vmul.f32 %v1609, %v961
      %v1613 = vmul.f32 %v1598, %v1598
      %v1614 = vmul.f32 %v1599, %v1599
      %v1615 = vmul.f32 %v1600, %v1600
      %v1616 = vsel %vm945, %v1613, 0.0
      %1617 = vadd.xlane.f32.xlu0 %v1616
      %v1618 = vpop.xlane.xlu0 %1617
      %v1619 = vsel %vm945, %v1614, 0.0
      %1620 = vadd.xlane.f32.xlu0 %v1619
      %v1621 = vpop.xlane.xlu0 %1620
      %v1622 = vsel %vm945, %v1615, 0.0
      %1623 = vadd.xlane.f32.xlu0 %v1622
      %v1624 = vpop.xlane.xlu0 %1623
      %v1625 = vmul.f32 %v1618, %v961
      %v1626 = vmul.f32 %v1621, %v961
      %v1627 = vmul.f32 %v1624, %v961
      %v1628 = vmul.f32 %v1610, %v1610
      %v1629 = vmul.f32 %v1611, %v1611
      %v1630 = vmul.f32 %v1612, %v1612
      %v1631 = vsub.f32 %v1625, %v1628
      %v1632 = vsub.f32 %v1626, %v1629
      %v1633 = vsub.f32 %v1627, %v1630
      %v1634 = vmax.f32 %v1631, 0.0
      %v1635 = vmax.f32 %v1632, 0.0
      %v1636 = vmax.f32 %v1633, 0.0
      %v1637 = vsub.f32 %v1598, %v1610
      %v1638 = vsub.f32 %v1599, %v1611
      %v1639 = vsub.f32 %v1600, %v1612
      %v1640 = vadd.f32 %v1634, 1e-06
      %v1641 = vadd.f32 %v1635, 1e-06
      %v1642 = vadd.f32 %v1636, 1e-06
      %v1643 = vrsqrt.pop %v1640
      %v1644 = vmul.f32 %v1643, %v1640
      %v1645 = vmul.f32 %v1644, %v1643
      %v1646 = vmul.f32 0.5, %v1645
      %v1647 = vsub.f32 1.5, %v1646
      %v1648 = vmul.f32 %v1643, %v1647
      %vm1649 = vweird.f32 %v1640
      %vm1650 = vweird.f32 %v1643
      %vm1651 = vmor %vm1649, %vm1650
      %v1652 = vsel %vm1651, %v1643, %v1648
      %v1653 = vrsqrt.pop %v1641
      %v1654 = vmul.f32 %v1653, %v1641
      %v1655 = vmul.f32 %v1654, %v1653
      %v1656 = vmul.f32 0.5, %v1655
      %v1657 = vsub.f32 1.5, %v1656
      %v1658 = vmul.f32 %v1653, %v1657
      %vm1659 = vweird.f32 %v1641
      %vm1660 = vweird.f32 %v1653
      %vm1661 = vmor %vm1659, %vm1660
      %v1662 = vsel %vm1661, %v1653, %v1658
      %v1663 = vrsqrt.pop %v1642
      %v1664 = vmul.f32 %v1663, %v1642
      %v1665 = vmul.f32 %v1664, %v1663
      %v1666 = vmul.f32 0.5, %v1665
      %v1667 = vsub.f32 1.5, %v1666
      %v1668 = vmul.f32 %v1663, %v1667
      %vm1669 = vweird.f32 %v1642
      %vm1670 = vweird.f32 %v1663
      %vm1671 = vmor %vm1669, %vm1670
      %v1672 = vsel %vm1671, %v1663, %v1668
      %v1673 = vmul.f32 %v1637, %v1652
      %v1674 = vmul.f32 %v1638, %v1662
      %v1675 = vmul.f32 %v1639, %v1672
      %v1677 = vperm.slane %v879, 0
      %v1679 = vmul.f32 %v1673, %v1677
      %v1680 = vmul.f32 %v1674, %v1677
      %v1681 = vmul.f32 %v1675, %v1677
      %v1683 = vperm.slane %v880, 0
      %v1685 = vadd.f32 %v1679, %v1683
      %v1686 = vadd.f32 %v1680, %v1683
      %v1687 = vadd.f32 %v1681, %v1683
      %v1688 = vpack.c.bf16 %v1686, %v1685
      %v1689 = vpack.c.bf16 %v1687, %v1687
      %v1691 = vperm.slane %v885, 0
      %v1697 = vunpack.c.l.b16 %v881
      %v1698 = vunpack.c.l.b16 %v882
      %v1699 = vunpack.c.l.b16 %v883
      %v1700 = vunpack.c.l.b16 %v884
      %v1701 = vpack.c.b16 %v1698, %v1697
      %v1702 = vpack.c.b16 %v1700, %v1699
      %v1706 = vsel %vm945, %v1688, 0
      %v1709 = vsel %vm945, %v1689, 0
      %1711 = vmatpush.bf16.msra.mxu0 0
      %1712 = vmatpush.bf16.msra.mxu0 0
      %1713 = vmatpush.bf16.msra.mxu0 0
      %1714 = vmatpush.bf16.msra.mxu0 0
      %1715 = vmatpush.bf16.msra.mxu0 0
      %1716 = vmatpush.bf16.msra.mxu0 0
      %1717 = vmatpush.bf16.msra.mxu0 %v1702
      %1718 = vmatpush.bf16.msra.mxu0 %v1701
      %1719 = vmatmul.bf16.gmra.mxu0 %v1706
      %v1720 = vpop.f32.mrf.mxu0
      %v1721 = vadd.f32 %v1691, %v1720
      %v1722 = vpop.f32.mrf.mxu0
      %v1723 = vadd.f32 %v1691, %v1722
      %1724 = vmatmul.bf16.gmra.mxu0 %v1709
      %v1725 = vpop.f32.mrf.mxu0
      %v1726 = vadd.f32 %v1691, %v1725
      %v1727 = vpop.f32.mrf.mxu0
      %1728 = vdwg.mxu0
      %v1729 = vmul.f32 %v1721, 0.5
      %v1730 = vmul.f32 %v1723, 0.5
      %v1731 = vmul.f32 %v1726, 0.5
      %v1732 = vmul.f32 %v1721, 0.044715
      %v1733 = vmul.f32 %v1723, 0.044715
      %v1734 = vmul.f32 %v1726, 0.044715
      %v1735 = vmul.f32 %v1732, %v1721
      %v1736 = vmul.f32 %v1733, %v1723
      %v1737 = vmul.f32 %v1734, %v1726
      %v1738 = vmul.f32 %v1735, %v1721
      %v1739 = vmul.f32 %v1736, %v1723
      %v1740 = vmul.f32 %v1737, %v1726
      %v1741 = vadd.f32 %v1721, %v1738
      %v1742 = vadd.f32 %v1723, %v1739
      %v1743 = vadd.f32 %v1726, %v1740
      %v1744 = vmul.f32 %v1741, 0.7978846
      %v1745 = vmul.f32 %v1742, 0.7978846
      %v1746 = vmul.f32 %v1743, 0.7978846
      %v1747 = vtanh.pop %v1744
      %v1748 = vtanh.pop %v1745
      %v1749 = vtanh.pop %v1746
      %v1750 = vadd.f32 %v1747, 1.0
      %v1751 = vadd.f32 %v1748, 1.0
      %v1752 = vadd.f32 %v1749, 1.0
      %v1753 = vmul.f32 %v1729, %v1750
      %v1754 = vmul.f32 %v1730, %v1751
      %v1755 = vmul.f32 %v1731, %v1752
      %v1756 = vpack.c.bf16 %v1754, %v1753
      %v1757 = vpack.c.bf16 %v1755, %v1755
      %v1759 = vperm.slane %v894, 0
      %v1769 = vunpack.c.l.b16 %v886
      %v1770 = vunpack.c.l.b16 %v887
      %v1771 = vunpack.c.l.b16 %v888
      %v1772 = vunpack.c.l.b16 %v889
      %v1773 = vunpack.c.l.b16 %v890
      %v1774 = vunpack.c.l.b16 %v891
      %v1775 = vunpack.c.l.b16 %v892
      %v1776 = vunpack.c.l.b16 %v893
      %v1777 = vpack.c.b16 %v1770, %v1769
      %v1778 = vpack.c.b16 %v1772, %v1771
      %v1779 = vpack.c.b16 %v1774, %v1773
      %v1780 = vpack.c.b16 %v1776, %v1775
      %vm1785 = vcmask 523264
      %v1787 = vsel %vm1785, %v1756, 0
      %v1790 = vsel %vm1785, %v1757, 0
      %1792 = vmatpush.bf16.msra.mxu0 0
      %1793 = vmatpush.bf16.msra.mxu0 0
      %1794 = vmatpush.bf16.msra.mxu0 0
      %1795 = vmatpush.bf16.msra.mxu0 0
      %1796 = vmatpush.bf16.msra.mxu0 %v1780
      %1797 = vmatpush.bf16.msra.mxu0 %v1779
      %1798 = vmatpush.bf16.msra.mxu0 %v1778
      %1799 = vmatpush.bf16.msra.mxu0 %v1777
      %1800 = vmatmul.bf16.gmra.mxu0 %v1787
      %v1801 = vpop.f32.mrf.mxu0
      %v1802 = vadd.f32 %v1759, %v1801
      %v1803 = vpop.f32.mrf.mxu0
      %v1804 = vadd.f32 %v1759, %v1803
      %1805 = vmatmul.bf16.gmra.mxu0 %v1790
      %v1806 = vpop.f32.mrf.mxu0
      %v1807 = vadd.f32 %v1759, %v1806
      %v1808 = vpop.f32.mrf.mxu0
      %1809 = vdwg.mxu0
      %v1810 = vadd.f32 %v1598, %v1802
      %v1811 = vadd.f32 %v1599, %v1804
      %v1812 = vadd.f32 %v1600, %v1807
      %v1813 = vrot.slane %v1810, 3
      %v1814 = vrot.slane %v1811, 3
      %v1815 = vrot.slane %v1812, 3
      %v1816 = vlaneseq
      %v1817 = vshrl.u32 %v1816, 7
      %vm1818 = vcmp.lt.s32.totalorder %v1817, 5
      %v1819 = vsel %vm1818, %v1814, %v1815
      %v1820 = vsel %vm1818, %v1813, %v1814
      %v1821 = vsel %vm1818, %v1815, %v1813
      %1823 = vset.pattern.permute.xlu0 0
      %1824 = vperm.xlu0 %1823, %v903
      %v1825 = vpop.permute.xlu0 %1824
      %1828 = vset.pattern.permute.xlu0 0
      %1829 = vperm.xlu0 %1828, %v904
      %v1830 = vpop.permute.xlu0 %1829
      %1833 = vset.pattern.permute.xlu0 0
      %1834 = vperm.xlu0 %1833, %v905
      %v1835 = vpop.permute.xlu0 %1834
      %v1837 = vmul.f32 %v1821, %v1825
      %v1838 = vmul.f32 %v1820, %v1830
      %v1839 = vmul.f32 %v1819, %v1835
      %v1840 = vperm.slane %v895, 0
      %v1841 = vmul.f32 %v1837, %v1840
      %v1842 = vmul.f32 %v1838, %v1840
      %v1843 = vmul.f32 %v1839, %v1840
      %v1844 = vadd.f32 %v1841, 0.0
      %v1845 = vadd.f32 %v1842, 0.0
      %v1846 = vadd.f32 %v1843, 0.0
      %v1847 = vrot.slane %v1810, 4
      %v1848 = vrot.slane %v1811, 4
      %v1849 = vrot.slane %v1812, 4
      %vm1850 = vcmp.lt.s32.totalorder %v1817, 4
      %v1851 = vsel %vm1850, %v1848, %v1849
      %v1852 = vsel %vm1850, %v1847, %v1848
      %v1853 = vsel %vm1850, %v1849, %v1847
      %1855 = vset.pattern.permute.xlu0 0
      %1856 = vperm.xlu0 %1855, %v907
      %v1857 = vpop.permute.xlu0 %1856
      %1860 = vset.pattern.permute.xlu0 0
      %1861 = vperm.xlu0 %1860, %v908
      %v1862 = vpop.permute.xlu0 %1861
      %1865 = vset.pattern.permute.xlu0 0
      %1866 = vperm.xlu0 %1865, %v909
      %v1867 = vpop.permute.xlu0 %1866
      %v1869 = vmul.f32 %v1853, %v1857
      %v1870 = vmul.f32 %v1852, %v1862
      %v1871 = vmul.f32 %v1851, %v1867
      %v1872 = vperm.slane %v895, 1
      %v1873 = vmul.f32 %v1869, %v1872
      %v1874 = vmul.f32 %v1870, %v1872
      %v1875 = vmul.f32 %v1871, %v1872
      %v1876 = vadd.f32 %v1844, %v1873
      %v1877 = vadd.f32 %v1845, %v1874
      %v1878 = vadd.f32 %v1846, %v1875
      %v1879 = vrot.slane %v1810, 5
      %v1880 = vrot.slane %v1811, 5
      %v1881 = vrot.slane %v1812, 5
      %vm1882 = vcmp.lt.s32.totalorder %v1817, 3
      %v1883 = vsel %vm1882, %v1880, %v1881
      %v1884 = vsel %vm1882, %v1879, %v1880
      %v1885 = vsel %vm1882, %v1881, %v1879
      %1887 = vset.pattern.permute.xlu0 0
      %1888 = vperm.xlu0 %1887, %v911
      %v1889 = vpop.permute.xlu0 %1888
      %1892 = vset.pattern.permute.xlu0 0
      %1893 = vperm.xlu0 %1892, %v912
      %v1894 = vpop.permute.xlu0 %1893
      %1897 = vset.pattern.permute.xlu0 0
      %1898 = vperm.xlu0 %1897, %v913
      %v1899 = vpop.permute.xlu0 %1898
      %v1901 = vmul.f32 %v1885, %v1889
      %v1902 = vmul.f32 %v1884, %v1894
      %v1903 = vmul.f32 %v1883, %v1899
      %v1904 = vperm.slane %v895, 2
      %v1905 = vmul.f32 %v1901, %v1904
      %v1906 = vmul.f32 %v1902, %v1904
      %v1907 = vmul.f32 %v1903, %v1904
      %v1908 = vadd.f32 %v1876, %v1905
      %v1909 = vadd.f32 %v1877, %v1906
      %v1910 = vadd.f32 %v1878, %v1907
      %v1911 = vrot.slane %v1810, 7
      %v1912 = vrot.slane %v1811, 7
      %v1913 = vrot.slane %v1812, 7
      %vm1914 = vcmp.lt.s32.totalorder %v1817, 1
      %v1915 = vsel %vm1914, %v1912, %v1913
      %v1916 = vsel %vm1914, %v1911, %v1912
      %v1917 = vsel %vm1914, %v1913, %v1911
      %1919 = vset.pattern.permute.xlu0 0
      %1920 = vperm.xlu0 %1919, %v915
      %v1921 = vpop.permute.xlu0 %1920
      %1924 = vset.pattern.permute.xlu0 0
      %1925 = vperm.xlu0 %1924, %v916
      %v1926 = vpop.permute.xlu0 %1925
      %1929 = vset.pattern.permute.xlu0 0
      %1930 = vperm.xlu0 %1929, %v917
      %v1931 = vpop.permute.xlu0 %1930
      %v1933 = vmul.f32 %v1917, %v1921
      %v1934 = vmul.f32 %v1916, %v1926
      %v1935 = vmul.f32 %v1915, %v1931
      %v1936 = vperm.slane %v895, 3
      %v1937 = vmul.f32 %v1933, %v1936
      %v1938 = vmul.f32 %v1934, %v1936
      %v1939 = vmul.f32 %v1935, %v1936
      %v1940 = vadd.f32 %v1908, %v1937
      %v1941 = vadd.f32 %v1909, %v1938
      %v1942 = vadd.f32 %v1910, %v1939
      %1944 = vset.pattern.permute.xlu0 0
      %1945 = vperm.xlu0 %1944, %v919
      %v1946 = vpop.permute.xlu0 %1945
      %1949 = vset.pattern.permute.xlu0 0
      %1950 = vperm.xlu0 %1949, %v920
      %v1951 = vpop.permute.xlu0 %1950
      %1954 = vset.pattern.permute.xlu0 0
      %1955 = vperm.xlu0 %1954, %v921
      %v1956 = vpop.permute.xlu0 %1955
      %v1958 = vmul.f32 %v1810, %v1946
      %v1959 = vmul.f32 %v1811, %v1951
      %v1960 = vmul.f32 %v1812, %v1956
      %v1961 = vperm.slane %v895, 4
      %v1962 = vmul.f32 %v1958, %v1961
      %v1963 = vmul.f32 %v1959, %v1961
      %v1964 = vmul.f32 %v1960, %v1961
      %v1965 = vadd.f32 %v1940, %v1962
      %v1966 = vadd.f32 %v1941, %v1963
      %v1967 = vadd.f32 %v1942, %v1964
      %v1968 = vrot.slane %v1810, 1
      %v1969 = vrot.slane %v1811, 1
      %v1970 = vrot.slane %v1812, 1
      %vm1971 = vcmp.lt.s32.totalorder %v1817, 7
      %v1972 = vsel %vm1971, %v1969, %v1970
      %v1973 = vsel %vm1971, %v1968, %v1969
      %v1974 = vsel %vm1971, %v1970, %v1968
      %1976 = vset.pattern.permute.xlu0 0
      %1977 = vperm.xlu0 %1976, %v923
      %v1978 = vpop.permute.xlu0 %1977
      %1981 = vset.pattern.permute.xlu0 0
      %1982 = vperm.xlu0 %1981, %v924
      %v1983 = vpop.permute.xlu0 %1982
      %1986 = vset.pattern.permute.xlu0 0
      %1987 = vperm.xlu0 %1986, %v925
      %v1988 = vpop.permute.xlu0 %1987
      %v1990 = vmul.f32 %v1973, %v1978
      %v1991 = vmul.f32 %v1972, %v1983
      %v1992 = vmul.f32 %v1974, %v1988
      %v1993 = vperm.slane %v895, 5
      %v1994 = vmul.f32 %v1990, %v1993
      %v1995 = vmul.f32 %v1991, %v1993
      %v1996 = vmul.f32 %v1992, %v1993
      %v1997 = vadd.f32 %v1965, %v1994
      %v1998 = vadd.f32 %v1966, %v1995
      %v1999 = vadd.f32 %v1967, %v1996
      %2001 = vset.pattern.permute.xlu0 0
      %2002 = vperm.xlu0 %2001, %v927
      %v2003 = vpop.permute.xlu0 %2002
      %2006 = vset.pattern.permute.xlu0 0
      %2007 = vperm.xlu0 %2006, %v928
      %v2008 = vpop.permute.xlu0 %2007
      %2011 = vset.pattern.permute.xlu0 0
      %2012 = vperm.xlu0 %2011, %v929
      %v2013 = vpop.permute.xlu0 %2012
      %v2015 = vmul.f32 %v1820, %v2003
      %v2016 = vmul.f32 %v1819, %v2008
      %v2017 = vmul.f32 %v1821, %v2013
      %v2018 = vperm.slane %v895, 6
      %v2019 = vmul.f32 %v2015, %v2018
      %v2020 = vmul.f32 %v2016, %v2018
      %v2021 = vmul.f32 %v2017, %v2018
      %v2022 = vadd.f32 %v1997, %v2019
      %v2023 = vadd.f32 %v1998, %v2020
      %v2024 = vadd.f32 %v1999, %v2021
      %2026 = vset.pattern.permute.xlu0 0
      %2027 = vperm.xlu0 %2026, %v931
      %v2028 = vpop.permute.xlu0 %2027
      %2031 = vset.pattern.permute.xlu0 0
      %2032 = vperm.xlu0 %2031, %v932
      %v2033 = vpop.permute.xlu0 %2032
      %2036 = vset.pattern.permute.xlu0 0
      %2037 = vperm.xlu0 %2036, %v933
      %v2038 = vpop.permute.xlu0 %2037
      %v2040 = vmul.f32 %v1852, %v2028
      %v2041 = vmul.f32 %v1851, %v2033
      %v2042 = vmul.f32 %v1853, %v2038
      %v2043 = vperm.slane %v895, 7
      %v2044 = vmul.f32 %v2040, %v2043
      %v2045 = vmul.f32 %v2041, %v2043
      %v2046 = vmul.f32 %v2042, %v2043
      %v2047 = vadd.f32 %v2022, %v2044
      %v2048 = vadd.f32 %v2023, %v2045
      %v2049 = vadd.f32 %v2024, %v2046
      %2051 = vset.pattern.permute.xlu0 0
      %2052 = vperm.xlu0 %2051, %v935
      %v2053 = vpop.permute.xlu0 %2052
      %2056 = vset.pattern.permute.xlu0 0
      %2057 = vperm.xlu0 %2056, %v936
      %v2058 = vpop.permute.xlu0 %2057
      %2061 = vset.pattern.permute.xlu0 0
      %2062 = vperm.xlu0 %2061, %v937
      %v2063 = vpop.permute.xlu0 %2062
      %v2065 = vmul.f32 %v1884, %v2053
      %v2066 = vmul.f32 %v1883, %v2058
      %v2067 = vmul.f32 %v1885, %v2063
      %v2068 = vperm.slane %v896, 0
      %v2069 = vmul.f32 %v2065, %v2068
      %v2070 = vmul.f32 %v2066, %v2068
      %v2071 = vmul.f32 %v2067, %v2068
      %v2072 = vadd.f32 %v2047, %v2069
      %v2073 = vadd.f32 %v2048, %v2070
      %v2074 = vadd.f32 %v2049, %v2071
      %v2076 = vperm.slane %v897, 0
      %v2078 = vadd.f32 %v2072, %v2076
      %v2079 = vadd.f32 %v2073, %v2076
      %v2080 = vadd.f32 %v2074, %v2076
      %v2081 = vsub.f32 %v2078, %v1810
      %v2082 = vsub.f32 %v2079, %v1811
      %v2083 = vsub.f32 %v2080, %v1812
      %2085 = vset.pattern.permute.xlu0 0
      %2086 = vperm.xlu0 %2085, %v900
      %v2087 = vpop.permute.xlu0 %2086
      %2090 = vset.pattern.permute.xlu0 0
      %2091 = vperm.xlu0 %2090, %v901
      %v2092 = vpop.permute.xlu0 %2091
      %2095 = vset.pattern.permute.xlu0 0
      %2096 = vperm.xlu0 %2095, %v902
      %v2097 = vpop.permute.xlu0 %2096
      %v2099 = vmul.f32 %v2087, %v2081
      %v2100 = vmul.f32 %v2092, %v2082
      %v2101 = vmul.f32 %v2097, %v2083
      %v2102 = vadd.f32 %v1810, %v2099
      %v2103 = vadd.f32 %v1811, %v2100
      %v2104 = vadd.f32 %v1812, %v2101
      %v2105 = vadd.f32 %v2102, %v1802
      %v2106 = vadd.f32 %v2103, %v1804
      %v2107 = vadd.f32 %v2104, %v1807
      %2108 = vst.msk [vmem:[#allocation2] sm:$0xff] %vm945, %v2105
      %2109 = vst.msk [vmem:[#allocation2 + $0x8] sm:$0xff] %vm945, %v2106
      %2110 = vst.msk [vmem:[#allocation2 + $0x10] sm:$0xff] %vm945, %v2107
      %p2111 = scmp.eq.s32.totalorder %s35, 1
      // Predicated region
      $region101: #{encoder_forward.1} parent=95 // pred_check
        %p2112 = pneg %p2111
      $region102: #{encoder_forward.1} parent=95 // pred_check_branch
        %2114 = sbr.rel (%p2112) target = $region104
      $region103: #{encoder_forward.1} parent=95 // pred_region
        %v2115 = vsel %vm945, %v2105, 0.0
        %2116 = vadd.xlane.f32.xlu0 %v2115
        %v2117 = vpop.xlane.xlu0 %2116
        %v2118 = vsel %vm945, %v2106, 0.0
        %2119 = vadd.xlane.f32.xlu0 %v2118
        %v2120 = vpop.xlane.xlu0 %2119
        %v2121 = vsel %vm945, %v2107, 0.0
        %2122 = vadd.xlane.f32.xlu0 %v2121
        %v2123 = vpop.xlane.xlu0 %2122
        %v2124 = vmul.f32 %v2117, %v961
        %v2125 = vmul.f32 %v2120, %v961
        %v2126 = vmul.f32 %v2123, %v961
        %v2127 = vmul.f32 %v2105, %v2105
        %v2128 = vmul.f32 %v2106, %v2106
        %v2129 = vmul.f32 %v2107, %v2107
        %v2130 = vsel %vm945, %v2127, 0.0
        %2131 = vadd.xlane.f32.xlu0 %v2130
        %v2132 = vpop.xlane.xlu0 %2131
        %v2133 = vsel %vm945, %v2128, 0.0
        %2134 = vadd.xlane.f32.xlu0 %v2133
        %v2135 = vpop.xlane.xlu0 %2134
        %v2136 = vsel %vm945, %v2129, 0.0
        %2137 = vadd.xlane.f32.xlu0 %v2136
        %v2138 = vpop.xlane.xlu0 %2137
        %v2139 = vmul.f32 %v2132, %v961
        %v2140 = vmul.f32 %v2135, %v961
        %v2141 = vmul.f32 %v2138, %v961
        %v2142 = vmul.f32 %v2124, %v2124
        %v2143 = vmul.f32 %v2125, %v2125
        %v2144 = vmul.f32 %v2126, %v2126
        %v2145 = vsub.f32 %v2139, %v2142
        %v2146 = vsub.f32 %v2140, %v2143
        %v2147 = vsub.f32 %v2141, %v2144
        %v2148 = vmax.f32 %v2145, 0.0
        %v2149 = vmax.f32 %v2146, 0.0
        %v2150 = vmax.f32 %v2147, 0.0
        %v2151 = vsub.f32 %v2105, %v2124
        %v2152 = vsub.f32 %v2106, %v2125
        %v2153 = vsub.f32 %v2107, %v2126
        %v2154 = vadd.f32 %v2148, 1e-06
        %v2155 = vadd.f32 %v2149, 1e-06
        %v2156 = vadd.f32 %v2150, 1e-06
        %v2157 = vrsqrt.pop %v2154
        %v2158 = vmul.f32 %v2157, %v2154
        %v2159 = vmul.f32 %v2158, %v2157
        %v2160 = vmul.f32 0.5, %v2159
        %v2161 = vsub.f32 1.5, %v2160
        %v2162 = vmul.f32 %v2157, %v2161
        %vm2163 = vweird.f32 %v2154
        %vm2164 = vweird.f32 %v2157
        %vm2165 = vmor %vm2163, %vm2164
        %v2166 = vsel %vm2165, %v2157, %v2162
        %v2167 = vrsqrt.pop %v2155
        %v2168 = vmul.f32 %v2167, %v2155
        %v2169 = vmul.f32 %v2168, %v2167
        %v2170 = vmul.f32 0.5, %v2169
        %v2171 = vsub.f32 1.5, %v2170
        %v2172 = vmul.f32 %v2167, %v2171
        %vm2173 = vweird.f32 %v2155
        %vm2174 = vweird.f32 %v2167
        %vm2175 = vmor %vm2173, %vm2174
        %v2176 = vsel %vm2175, %v2167, %v2172
        %v2177 = vrsqrt.pop %v2156
        %v2178 = vmul.f32 %v2177, %v2156
        %v2179 = vmul.f32 %v2178, %v2177
        %v2180 = vmul.f32 0.5, %v2179
        %v2181 = vsub.f32 1.5, %v2180
        %v2182 = vmul.f32 %v2177, %v2181
        %vm2183 = vweird.f32 %v2156
        %vm2184 = vweird.f32 %v2177
        %vm2185 = vmor %vm2183, %vm2184
        %v2186 = vsel %vm2185, %v2177, %v2182
        %v2187 = vmul.f32 %v2151, %v2166
        %v2188 = vmul.f32 %v2152, %v2176
        %v2189 = vmul.f32 %v2153, %v2186
        %v2191 = vperm.slane %v898, 0
        %v2193 = vmul.f32 %v2187, %v2191
        %v2194 = vmul.f32 %v2188, %v2191
        %v2195 = vmul.f32 %v2189, %v2191
        %v2197 = vperm.slane %v899, 0
        %v2199 = vadd.f32 %v2193, %v2197
        %v2200 = vadd.f32 %v2194, %v2197
        %v2201 = vadd.f32 %v2195, %v2197
        %2202 = vst.msk [vmem:[%s847] sm:$0xff] %vm945, %v2199
        %2203 = vst.msk [vmem:[%s847 + $0x8] sm:$0xff] %vm945, %v2200
        %2204 = vst.msk [vmem:[%s847 + $0x10] sm:$0xff] %vm945, %v2201
      $region104: #{encoder_forward.1} parent=95 // pred_fallthru
        _
      %s2205 = scalar_lea.vmem [#allocation2], 24
      %v2206 = vld [vmem:[%s2205] sm:$0xff]
      %v2207 = vld [vmem:[%s2205 + $0x8] sm:$0xff]
      %v2208 = vld [vmem:[%s2205 + $0x10] sm:$0xff]
      %v2209 = vsel %vm945, %v2206, 0.0
      %2210 = vadd.xlane.f32.xlu0 %v2209
      %v2211 = vpop.xlane.xlu0 %2210
      %v2212 = vsel %vm945, %v2207, 0.0
      %2213 = vadd.xlane.f32.xlu0 %v2212
      %v2214 = vpop.xlane.xlu0 %2213
      %v2215 = vsel %vm945, %v2208, 0.0
      %2216 = vadd.xlane.f32.xlu0 %v2215
      %v2217 = vpop.xlane.xlu0 %2216
      %v2218 = vmul.f32 %v2211, %v961
      %v2219 = vmul.f32 %v2214, %v961
      %v2220 = vmul.f32 %v2217, %v961
      %v2221 = vmul.f32 %v2206, %v2206
      %v2222 = vmul.f32 %v2207, %v2207
      %v2223 = vmul.f32 %v2208, %v2208
      %v2224 = vsel %vm945, %v2221, 0.0
      %2225 = vadd.xlane.f32.xlu0 %v2224
      %v2226 = vpop.xlane.xlu0 %2225
      %v2227 = vsel %vm945, %v2222, 0.0
      %2228 = vadd.xlane.f32.xlu0 %v2227
      %v2229 = vpop.xlane.xlu0 %2228
      %v2230 = vsel %vm945, %v2223, 0.0
      %2231 = vadd.xlane.f32.xlu0 %v2230
      %v2232 = vpop.xlane.xlu0 %2231
      %v2233 = vmul.f32 %v2226, %v961
      %v2234 = vmul.f32 %v2229, %v961
      %v2235 = vmul.f32 %v2232, %v961
      %v2236 = vmul.f32 %v2218, %v2218
      %v2237 = vmul.f32 %v2219, %v2219
      %v2238 = vmul.f32 %v2220, %v2220
      %v2239 = vsub.f32 %v2233, %v2236
      %v2240 = vsub.f32 %v2234, %v2237
      %v2241 = vsub.f32 %v2235, %v2238
      %v2242 = vmax.f32 %v2239, 0.0
      %v2243 = vmax.f32 %v2240, 0.0
      %v2244 = vmax.f32 %v2241, 0.0
      %v2245 = vsub.f32 %v2206, %v2218
      %v2246 = vsub.f32 %v2207, %v2219
      %v2247 = vsub.f32 %v2208, %v2220
      %v2248 = vadd.f32 %v2242, 1e-06
      %v2249 = vadd.f32 %v2243, 1e-06
      %v2250 = vadd.f32 %v2244, 1e-06
      %v2251 = vrsqrt.pop %v2248
      %v2252 = vmul.f32 %v2251, %v2248
      %v2253 = vmul.f32 %v2252, %v2251
      %v2254 = vmul.f32 0.5, %v2253
      %v2255 = vsub.f32 1.5, %v2254
      %v2256 = vmul.f32 %v2251, %v2255
      %vm2257 = vweird.f32 %v2248
      %vm2258 = vweird.f32 %v2251
      %vm2259 = vmor %vm2257, %vm2258
      %v2260 = vsel %vm2259, %v2251, %v2256
      %v2261 = vrsqrt.pop %v2249
      %v2262 = vmul.f32 %v2261, %v2249
      %v2263 = vmul.f32 %v2262, %v2261
      %v2264 = vmul.f32 0.5, %v2263
      %v2265 = vsub.f32 1.5, %v2264
      %v2266 = vmul.f32 %v2261, %v2265
      %vm2267 = vweird.f32 %v2249
      %vm2268 = vweird.f32 %v2261
      %vm2269 = vmor %vm2267, %vm2268
      %v2270 = vsel %vm2269, %v2261, %v2266
      %v2271 = vrsqrt.pop %v2250
      %v2272 = vmul.f32 %v2271, %v2250
      %v2273 = vmul.f32 %v2272, %v2271
      %v2274 = vmul.f32 0.5, %v2273
      %v2275 = vsub.f32 1.5, %v2274
      %v2276 = vmul.f32 %v2271, %v2275
      %vm2277 = vweird.f32 %v2250
      %vm2278 = vweird.f32 %v2271
      %vm2279 = vmor %vm2277, %vm2278
      %v2280 = vsel %vm2279, %v2271, %v2276
      %v2281 = vmul.f32 %v2245, %v2260
      %v2282 = vmul.f32 %v2246, %v2270
      %v2283 = vmul.f32 %v2247, %v2280
      %v2284 = vmul.f32 %v2281, %v1029
      %v2285 = vmul.f32 %v2282, %v1029
      %v2286 = vmul.f32 %v2283, %v1029
      %v2287 = vadd.f32 %v2284, %v1035
      %v2288 = vadd.f32 %v2285, %v1035
      %v2289 = vadd.f32 %v2286, %v1035
      %v2290 = vpack.c.bf16 %v2288, %v2287
      %v2291 = vpack.c.bf16 %v2289, %v2289
      %v2293 = vsel %vm945, %v2290, 0
      %v2296 = vsel %vm945, %v2291, 0
      %2298 = vmatpush.bf16.msra.mxu0 0
      %2299 = vmatpush.bf16.msra.mxu0 0
      %2300 = vmatpush.bf16.msra.mxu0 0
      %2301 = vmatpush.bf16.msra.mxu0 0
      %2302 = vmatpush.bf16.msra.mxu0 0
      %2303 = vmatpush.bf16.msra.mxu0 0
      %2304 = vmatpush.bf16.msra.mxu0 %v1054
      %2305 = vmatpush.bf16.msra.mxu0 %v1053
      %2306 = vmatmul.bf16.gmra.mxu0 %v2293
      %v2307 = vpop.f32.mrf.mxu0
      %v2308 = vadd.f32 %v1043, %v2307
      %v2309 = vpop.f32.mrf.mxu0
      %v2310 = vadd.f32 %v1043, %v2309
      %2311 = vmatmul.bf16.gmra.mxu0 %v2296
      %v2312 = vpop.f32.mrf.mxu0
      %v2313 = vadd.f32 %v1043, %v2312
      %v2314 = vpop.f32.mrf.mxu0
      %2315 = vdwg.mxu0
      %v2316 = vpack.c.bf16 %v2308, %v2308
      %v2317 = vpack.c.bf16 %v2310, %v2310
      %v2318 = vpack.c.bf16 %v2313, %v2313
      %v2322 = vunpack.c.l.b16 %v2316
      %v2323 = vunpack.c.l.b16 %v2317
      %v2324 = vunpack.c.l.b16 %v2318
      %v2325 = vpack.c.b16 %v2323, %v2322
      %v2326 = vpack.c.b16 %v2324, %v2324
      %2327 = vrot.lane.b32.xlu0 %v2325, 96
      %v2328 = vpop.permute.xlu0 %2327
      %2329 = vrot.lane.b32.xlu0 %v2326, 96
      %v2330 = vpop.permute.xlu0 %2329
      %v2332 = vsel %vm1096, %v2325, 0
      %v2335 = vsel %vm1096, %v2326, 0
      %v2338 = vsel %vm1096, %v2328, 0
      %v2341 = vsel %vm1096, %v2330, 0
      %2343 = vmatpush.bf16.xpose.msra.mxu0 0
      %2344 = vmatpush.bf16.xpose.msra.mxu0 0
      %2345 = vmatpush.bf16.xpose.msra.mxu0 0
      %2346 = vmatpush.bf16.xpose.msra.mxu0 0
      %2347 = vmatpush.bf16.xpose.msra.mxu0 0
      %2348 = vmatpush.bf16.xpose.msra.mxu0 0
      %2349 = vmatpush.bf16.xpose.msra.mxu0 %v2341
      %2350 = vmatpush.bf16.xpose.msra.mxu0 %v2338
      %2351 = vmatmul.bf16.gmra.mxu0 %v2332
      %v2352 = vpop.f32.mrf.mxu0
      %v2353 = vadd.f32 %v941, %v2352
      %v2354 = vpop.f32.mrf.mxu0
      %v2355 = vadd.f32 %v941, %v2354
      %2356 = vmatmul.bf16.gmra.mxu0 %v2335
      %v2357 = vpop.f32.mrf.mxu0
      %v2358 = vadd.f32 %v941, %v2357
      %v2359 = vpop.f32.mrf.mxu0
      %2360 = vdwg.mxu0
      %v2361 = vsel %vm1127, %v2353, -inf
      %2362 = vmax.xlane.f32.xlu0 %v2361
      %v2363 = vpop.xlane.xlu0 %2362
      %v2364 = vsel %vm1127, %v2355, -inf
      %2365 = vmax.xlane.f32.xlu0 %v2364
      %v2366 = vpop.xlane.xlu0 %2365
      %v2367 = vsel %vm1127, %v2358, -inf
      %2368 = vmax.xlane.f32.xlu0 %v2367
      %v2369 = vpop.xlane.xlu0 %2368
      %v2370 = vsub.f32 %v2353, %v2363
      %v2371 = vsub.f32 %v2355, %v2366
      %v2372 = vsub.f32 %v2358, %v2369
      %v2373 = vmul.f32 %v2370, 1.442695
      %v2374 = vpow.pop %v2373
      %v2375 = vmul.f32 %v2371, 1.442695
      %v2376 = vpow.pop %v2375
      %v2377 = vmul.f32 %v2372, 1.442695
      %v2378 = vpow.pop %v2377
      %v2379 = vsel %vm1127, %v2374, 0.0
      %2380 = vadd.xlane.f32.xlu0 %v2379
      %v2381 = vpop.xlane.xlu0 %2380
      %v2382 = vsel %vm1127, %v2376, 0.0
      %2383 = vadd.xlane.f32.xlu0 %v2382
      %v2384 = vpop.xlane.xlu0 %2383
      %v2385 = vsel %vm1127, %v2378, 0.0
      %2386 = vadd.xlane.f32.xlu0 %v2385
      %v2387 = vpop.xlane.xlu0 %2386
      %v2388 = vrcp.pop %v2381
      %v2389 = vrcp.pop %v2384
      %v2390 = vrcp.pop %v2387
      %v2391 = vmul.f32 %v2374, %v2388
      %v2392 = vmul.f32 %v2376, %v2389
      %v2393 = vmul.f32 %v2378, %v2390
      %v2394 = vpack.c.bf16 %v2392, %v2391
      %v2395 = vpack.c.bf16 %v2393, %v2393
      %2396 = vrot.lane.b32.xlu0 %v2325, 64
      %v2397 = vpop.permute.xlu0 %2396
      %2398 = vrot.lane.b32.xlu0 %v2326, 64
      %v2399 = vpop.permute.xlu0 %2398
      %v2402 = vsel %vm1127, %v2394, 0
      %v2405 = vsel %vm1127, %v2395, 0
      %v2408 = vsel %vm1174, %v2399, 0
      %2410 = vmatpush.bf16.msra.mxu0 0
      %2411 = vmatpush.bf16.msra.mxu0 0
      %2412 = vmatpush.bf16.msra.mxu0 0
      %2413 = vmatpush.bf16.msra.mxu0 0
      %2414 = vmatpush.bf16.msra.mxu0 0
      %2415 = vmatpush.bf16.msra.mxu0 0
      %2416 = vmatpush.bf16.msra.mxu0 %v2408
      %2417 = vmatpush.bf16.msra.mxu0 %v2397
      %2418 = vmatmul.bf16.gmra.mxu0 %v2402
      %v2419 = vpop.f32.mrf.mxu0
      %v2420 = vadd.f32 0.0, %v2419
      %v2421 = vpop.f32.mrf.mxu0
      %v2422 = vadd.f32 0.0, %v2421
      %2423 = vmatmul.bf16.gmra.mxu0 %v2405
      %v2424 = vpop.f32.mrf.mxu0
      %v2425 = vadd.f32 0.0, %v2424
      %v2426 = vpop.f32.mrf.mxu0
      %2427 = vdwg.mxu0
      %2428 = vrot.lane.b32.xlu0 %v2325, 120
      %v2429 = vpop.permute.xlu0 %2428
      %2430 = vrot.lane.b32.xlu0 %v2326, 120
      %v2431 = vpop.permute.xlu0 %2430
      %2432 = vrot.lane.b32.xlu0 %v2325, 88
      %v2433 = vpop.permute.xlu0 %2432
      %2434 = vrot.lane.b32.xlu0 %v2326, 88
      %v2435 = vpop.permute.xlu0 %2434
      %v2437 = vsel %vm1096, %v2429, 0
      %v2440 = vsel %vm1096, %v2431, 0
      %v2443 = vsel %vm1096, %v2433, 0
      %v2446 = vsel %vm1096, %v2435, 0
      %2448 = vmatpush.bf16.xpose.msra.mxu0 0
      %2449 = vmatpush.bf16.xpose.msra.mxu0 0
      %2450 = vmatpush.bf16.xpose.msra.mxu0 0
      %2451 = vmatpush.bf16.xpose.msra.mxu0 0
      %2452 = vmatpush.bf16.xpose.msra.mxu0 0
      %2453 = vmatpush.bf16.xpose.msra.mxu0 0
      %2454 = vmatpush.bf16.xpose.msra.mxu0 %v2446
      %2455 = vmatpush.bf16.xpose.msra.mxu0 %v2443
      %2456 = vmatmul.bf16.gmra.mxu0 %v2437
      %v2457 = vpop.f32.mrf.mxu0
      %v2458 = vadd.f32 %v941, %v2457
      %v2459 = vpop.f32.mrf.mxu0
      %v2460 = vadd.f32 %v941, %v2459
      %2461 = vmatmul.bf16.gmra.mxu0 %v2440
      %v2462 = vpop.f32.mrf.mxu0
      %v2463 = vadd.f32 %v941, %v2462
      %v2464 = vpop.f32.mrf.mxu0
      %2465 = vdwg.mxu0
      %v2466 = vsel %vm1127, %v2458, -inf
      %2467 = vmax.xlane.f32.xlu0 %v2466
      %v2468 = vpop.xlane.xlu0 %2467
      %v2469 = vsel %vm1127, %v2460, -inf
      %2470 = vmax.xlane.f32.xlu0 %v2469
      %v2471 = vpop.xlane.xlu0 %2470
      %v2472 = vsel %vm1127, %v2463, -inf
      %2473 = vmax.xlane.f32.xlu0 %v2472
      %v2474 = vpop.xlane.xlu0 %2473
      %v2475 = vsub.f32 %v2458, %v2468
      %v2476 = vsub.f32 %v2460, %v2471
      %v2477 = vsub.f32 %v2463, %v2474
      %v2478 = vmul.f32 %v2475, 1.442695
      %v2479 = vpow.pop %v2478
      %v2480 = vmul.f32 %v2476, 1.442695
      %v2481 = vpow.pop %v2480
      %v2482 = vmul.f32 %v2477, 1.442695
      %v2483 = vpow.pop %v2482
      %v2484 = vsel %vm1127, %v2479, 0.0
      %2485 = vadd.xlane.f32.xlu0 %v2484
      %v2486 = vpop.xlane.xlu0 %2485
      %v2487 = vsel %vm1127, %v2481, 0.0
      %2488 = vadd.xlane.f32.xlu0 %v2487
      %v2489 = vpop.xlane.xlu0 %2488
      %v2490 = vsel %vm1127, %v2483, 0.0
      %2491 = vadd.xlane.f32.xlu0 %v2490
      %v2492 = vpop.xlane.xlu0 %2491
      %v2493 = vrcp.pop %v2486
      %v2494 = vrcp.pop %v2489
      %v2495 = vrcp.pop %v2492
      %v2496 = vmul.f32 %v2479, %v2493
      %v2497 = vmul.f32 %v2481, %v2494
      %v2498 = vmul.f32 %v2483, %v2495
      %v2499 = vpack.c.bf16 %v2497, %v2496
      %v2500 = vpack.c.bf16 %v2498, %v2498
      %2501 = vrot.lane.b32.xlu0 %v2325, 56
      %v2502 = vpop.permute.xlu0 %2501
      %2503 = vrot.lane.b32.xlu0 %v2326, 56
      %v2504 = vpop.permute.xlu0 %2503
      %v2507 = vsel %vm1127, %v2499, 0
      %v2510 = vsel %vm1127, %v2500, 0
      %v2513 = vsel %vm1174, %v2504, 0
      %2515 = vmatpush.bf16.msra.mxu0 0
      %2516 = vmatpush.bf16.msra.mxu0 0
      %2517 = vmatpush.bf16.msra.mxu0 0
      %2518 = vmatpush.bf16.msra.mxu0 0
      %2519 = vmatpush.bf16.msra.mxu0 0
      %2520 = vmatpush.bf16.msra.mxu0 0
      %2521 = vmatpush.bf16.msra.mxu0 %v2513
      %2522 = vmatpush.bf16.msra.mxu0 %v2502
      %2523 = vmatmul.bf16.gmra.mxu0 %v2507
      %v2524 = vpop.f32.mrf.mxu0
      %v2525 = vadd.f32 0.0, %v2524
      %v2526 = vpop.f32.mrf.mxu0
      %v2527 = vadd.f32 0.0, %v2526
      %2528 = vmatmul.bf16.gmra.mxu0 %v2510
      %v2529 = vpop.f32.mrf.mxu0
      %v2530 = vadd.f32 0.0, %v2529
      %v2531 = vpop.f32.mrf.mxu0
      %2532 = vdwg.mxu0
      %2533 = vrot.lane.b32.xlu0 %v2325, 112
      %v2534 = vpop.permute.xlu0 %2533
      %2535 = vrot.lane.b32.xlu0 %v2326, 112
      %v2536 = vpop.permute.xlu0 %2535
      %2537 = vrot.lane.b32.xlu0 %v2325, 80
      %v2538 = vpop.permute.xlu0 %2537
      %2539 = vrot.lane.b32.xlu0 %v2326, 80
      %v2540 = vpop.permute.xlu0 %2539
      %v2542 = vsel %vm1096, %v2534, 0
      %v2545 = vsel %vm1096, %v2536, 0
      %v2548 = vsel %vm1096, %v2538, 0
      %v2551 = vsel %vm1096, %v2540, 0
      %2553 = vmatpush.bf16.xpose.msra.mxu0 0
      %2554 = vmatpush.bf16.xpose.msra.mxu0 0
      %2555 = vmatpush.bf16.xpose.msra.mxu0 0
      %2556 = vmatpush.bf16.xpose.msra.mxu0 0
      %2557 = vmatpush.bf16.xpose.msra.mxu0 0
      %2558 = vmatpush.bf16.xpose.msra.mxu0 0
      %2559 = vmatpush.bf16.xpose.msra.mxu0 %v2551
      %2560 = vmatpush.bf16.xpose.msra.mxu0 %v2548
      %2561 = vmatmul.bf16.gmra.mxu0 %v2542
      %v2562 = vpop.f32.mrf.mxu0
      %v2563 = vadd.f32 %v941, %v2562
      %v2564 = vpop.f32.mrf.mxu0
      %v2565 = vadd.f32 %v941, %v2564
      %2566 = vmatmul.bf16.gmra.mxu0 %v2545
      %v2567 = vpop.f32.mrf.mxu0
      %v2568 = vadd.f32 %v941, %v2567
      %v2569 = vpop.f32.mrf.mxu0
      %2570 = vdwg.mxu0
      %v2571 = vsel %vm1127, %v2563, -inf
      %2572 = vmax.xlane.f32.xlu0 %v2571
      %v2573 = vpop.xlane.xlu0 %2572
      %v2574 = vsel %vm1127, %v2565, -inf
      %2575 = vmax.xlane.f32.xlu0 %v2574
      %v2576 = vpop.xlane.xlu0 %2575
      %v2577 = vsel %vm1127, %v2568, -inf
      %2578 = vmax.xlane.f32.xlu0 %v2577
      %v2579 = vpop.xlane.xlu0 %2578
      %v2580 = vsub.f32 %v2563, %v2573
      %v2581 = vsub.f32 %v2565, %v2576
      %v2582 = vsub.f32 %v2568, %v2579
      %v2583 = vmul.f32 %v2580, 1.442695
      %v2584 = vpow.pop %v2583
      %v2585 = vmul.f32 %v2581, 1.442695
      %v2586 = vpow.pop %v2585
      %v2587 = vmul.f32 %v2582, 1.442695
      %v2588 = vpow.pop %v2587
      %v2589 = vsel %vm1127, %v2584, 0.0
      %2590 = vadd.xlane.f32.xlu0 %v2589
      %v2591 = vpop.xlane.xlu0 %2590
      %v2592 = vsel %vm1127, %v2586, 0.0
      %2593 = vadd.xlane.f32.xlu0 %v2592
      %v2594 = vpop.xlane.xlu0 %2593
      %v2595 = vsel %vm1127, %v2588, 0.0
      %2596 = vadd.xlane.f32.xlu0 %v2595
      %v2597 = vpop.xlane.xlu0 %2596
      %v2598 = vrcp.pop %v2591
      %v2599 = vrcp.pop %v2594
      %v2600 = vrcp.pop %v2597
      %v2601 = vmul.f32 %v2584, %v2598
      %v2602 = vmul.f32 %v2586, %v2599
      %v2603 = vmul.f32 %v2588, %v2600
      %v2604 = vpack.c.bf16 %v2602, %v2601
      %v2605 = vpack.c.bf16 %v2603, %v2603
      %2606 = vrot.lane.b32.xlu0 %v2325, 48
      %v2607 = vpop.permute.xlu0 %2606
      %2608 = vrot.lane.b32.xlu0 %v2326, 48
      %v2609 = vpop.permute.xlu0 %2608
      %v2612 = vsel %vm1127, %v2604, 0
      %v2615 = vsel %vm1127, %v2605, 0
      %v2618 = vsel %vm1174, %v2609, 0
      %2620 = vmatpush.bf16.msra.mxu0 0
      %2621 = vmatpush.bf16.msra.mxu0 0
      %2622 = vmatpush.bf16.msra.mxu0 0
      %2623 = vmatpush.bf16.msra.mxu0 0
      %2624 = vmatpush.bf16.msra.mxu0 0
      %2625 = vmatpush.bf16.msra.mxu0 0
      %2626 = vmatpush.bf16.msra.mxu0 %v2618
      %2627 = vmatpush.bf16.msra.mxu0 %v2607
      %2628 = vmatmul.bf16.gmra.mxu0 %v2612
      %v2629 = vpop.f32.mrf.mxu0
      %v2630 = vadd.f32 0.0, %v2629
      %v2631 = vpop.f32.mrf.mxu0
      %v2632 = vadd.f32 0.0, %v2631
      %2633 = vmatmul.bf16.gmra.mxu0 %v2615
      %v2634 = vpop.f32.mrf.mxu0
      %v2635 = vadd.f32 0.0, %v2634
      %v2636 = vpop.f32.mrf.mxu0
      %2637 = vdwg.mxu0
      %2638 = vrot.lane.b32.xlu0 %v2325, 104
      %v2639 = vpop.permute.xlu0 %2638
      %2640 = vrot.lane.b32.xlu0 %v2326, 104
      %v2641 = vpop.permute.xlu0 %2640
      %2642 = vrot.lane.b32.xlu0 %v2325, 72
      %v2643 = vpop.permute.xlu0 %2642
      %2644 = vrot.lane.b32.xlu0 %v2326, 72
      %v2645 = vpop.permute.xlu0 %2644
      %v2647 = vsel %vm1096, %v2639, 0
      %v2650 = vsel %vm1096, %v2641, 0
      %v2653 = vsel %vm1096, %v2643, 0
      %v2656 = vsel %vm1096, %v2645, 0
      %2658 = vmatpush.bf16.xpose.msra.mxu0 0
      %2659 = vmatpush.bf16.xpose.msra.mxu0 0
      %2660 = vmatpush.bf16.xpose.msra.mxu0 0
      %2661 = vmatpush.bf16.xpose.msra.mxu0 0
      %2662 = vmatpush.bf16.xpose.msra.mxu0 0
      %2663 = vmatpush.bf16.xpose.msra.mxu0 0
      %2664 = vmatpush.bf16.xpose.msra.mxu0 %v2656
      %2665 = vmatpush.bf16.xpose.msra.mxu0 %v2653
      %2666 = vmatmul.bf16.gmra.mxu0 %v2647
      %v2667 = vpop.f32.mrf.mxu0
      %v2668 = vadd.f32 %v941, %v2667
      %v2669 = vpop.f32.mrf.mxu0
      %v2670 = vadd.f32 %v941, %v2669
      %2671 = vmatmul.bf16.gmra.mxu0 %v2650
      %v2672 = vpop.f32.mrf.mxu0
      %v2673 = vadd.f32 %v941, %v2672
      %v2674 = vpop.f32.mrf.mxu0
      %2675 = vdwg.mxu0
      %v2676 = vsel %vm1127, %v2668, -inf
      %2677 = vmax.xlane.f32.xlu0 %v2676
      %v2678 = vpop.xlane.xlu0 %2677
      %v2679 = vsel %vm1127, %v2670, -inf
      %2680 = vmax.xlane.f32.xlu0 %v2679
      %v2681 = vpop.xlane.xlu0 %2680
      %v2682 = vsel %vm1127, %v2673, -inf
      %2683 = vmax.xlane.f32.xlu0 %v2682
      %v2684 = vpop.xlane.xlu0 %2683
      %v2685 = vsub.f32 %v2668, %v2678
      %v2686 = vsub.f32 %v2670, %v2681
      %v2687 = vsub.f32 %v2673, %v2684
      %v2688 = vmul.f32 %v2685, 1.442695
      %v2689 = vpow.pop %v2688
      %v2690 = vmul.f32 %v2686, 1.442695
      %v2691 = vpow.pop %v2690
      %v2692 = vmul.f32 %v2687, 1.442695
      %v2693 = vpow.pop %v2692
      %v2694 = vsel %vm1127, %v2689, 0.0
      %2695 = vadd.xlane.f32.xlu0 %v2694
      %v2696 = vpop.xlane.xlu0 %2695
      %v2697 = vsel %vm1127, %v2691, 0.0
      %2698 = vadd.xlane.f32.xlu0 %v2697
      %v2699 = vpop.xlane.xlu0 %2698
      %v2700 = vsel %vm1127, %v2693, 0.0
      %2701 = vadd.xlane.f32.xlu0 %v2700
      %v2702 = vpop.xlane.xlu0 %2701
      %v2703 = vrcp.pop %v2696
      %v2704 = vrcp.pop %v2699
      %v2705 = vrcp.pop %v2702
      %v2706 = vmul.f32 %v2689, %v2703
      %v2707 = vmul.f32 %v2691, %v2704
      %v2708 = vmul.f32 %v2693, %v2705
      %v2709 = vpack.c.bf16 %v2707, %v2706
      %v2710 = vpack.c.bf16 %v2708, %v2708
      %2711 = vrot.lane.b32.xlu0 %v2325, 40
      %v2712 = vpop.permute.xlu0 %2711
      %2713 = vrot.lane.b32.xlu0 %v2326, 40
      %v2714 = vpop.permute.xlu0 %2713
      %v2717 = vsel %vm1127, %v2709, 0
      %v2720 = vsel %vm1127, %v2710, 0
      %v2723 = vsel %vm1174, %v2714, 0
      %2725 = vmatpush.bf16.msra.mxu0 0
      %2726 = vmatpush.bf16.msra.mxu0 0
      %2727 = vmatpush.bf16.msra.mxu0 0
      %2728 = vmatpush.bf16.msra.mxu0 0
      %2729 = vmatpush.bf16.msra.mxu0 0
      %2730 = vmatpush.bf16.msra.mxu0 0
      %2731 = vmatpush.bf16.msra.mxu0 %v2723
      %2732 = vmatpush.bf16.msra.mxu0 %v2712
      %2733 = vmatmul.bf16.gmra.mxu0 %v2717
      %v2734 = vpop.f32.mrf.mxu0
      %v2735 = vadd.f32 0.0, %v2734
      %v2736 = vpop.f32.mrf.mxu0
      %v2737 = vadd.f32 0.0, %v2736
      %2738 = vmatmul.bf16.gmra.mxu0 %v2720
      %v2739 = vpop.f32.mrf.mxu0
      %v2740 = vadd.f32 0.0, %v2739
      %v2741 = vpop.f32.mrf.mxu0
      %2742 = vdwg.mxu0
      %2746 = vrot.lane.b32.xlu0 %v2525, 8
      %v2747 = vpop.permute.xlu0 %2746
      %2748 = vrot.lane.b32.xlu0 %v2527, 8
      %v2749 = vpop.permute.xlu0 %2748
      %2750 = vrot.lane.b32.xlu0 %v2530, 8
      %v2751 = vpop.permute.xlu0 %2750
      %2758 = vrot.lane.b32.xlu0 %v2630, 16
      %v2759 = vpop.permute.xlu0 %2758
      %2760 = vrot.lane.b32.xlu0 %v2632, 16
      %v2761 = vpop.permute.xlu0 %2760
      %2762 = vrot.lane.b32.xlu0 %v2635, 16
      %v2763 = vpop.permute.xlu0 %2762
      %2770 = vrot.lane.b32.xlu0 %v2735, 24
      %v2771 = vpop.permute.xlu0 %2770
      %2772 = vrot.lane.b32.xlu0 %v2737, 24
      %v2773 = vpop.permute.xlu0 %2772
      %2774 = vrot.lane.b32.xlu0 %v2740, 24
      %v2775 = vpop.permute.xlu0 %2774
      %v2779 = vsel %vm1096, %v2420, %v2747
      %v2780 = vsel %vm1096, %v2422, %v2749
      %v2781 = vsel %vm1096, %v2425, %v2751
      %v2782 = vsel %vm1550, %v2779, %v2759
      %v2783 = vsel %vm1550, %v2780, %v2761
      %v2784 = vsel %vm1550, %v2781, %v2763
      %v2785 = vsel %vm1127, %v2782, %v2771
      %v2786 = vsel %vm1127, %v2783, %v2773
      %v2787 = vsel %vm1127, %v2784, %v2775
      %v2788 = vpack.c.bf16 %v2786, %v2785
      %v2789 = vpack.c.bf16 %v2787, %v2787
      %v2791 = vsel %vm945, %v2788, 0
      %v2794 = vsel %vm945, %v2789, 0
      %2796 = vmatpush.bf16.msra.mxu0 0
      %2797 = vmatpush.bf16.msra.mxu0 0
      %2798 = vmatpush.bf16.msra.mxu0 0
      %2799 = vmatpush.bf16.msra.mxu0 0
      %2800 = vmatpush.bf16.msra.mxu0 0
      %2801 = vmatpush.bf16.msra.mxu0 0
      %2802 = vmatpush.bf16.msra.mxu0 %v1571
      %2803 = vmatpush.bf16.msra.mxu0 %v1570
      %2804 = vmatmul.bf16.gmra.mxu0 %v2791
      %v2805 = vpop.f32.mrf.mxu0
      %v2806 = vadd.f32 %v1560, %v2805
      %v2807 = vpop.f32.mrf.mxu0
      %v2808 = vadd.f32 %v1560, %v2807
      %2809 = vmatmul.bf16.gmra.mxu0 %v2794
      %v2810 = vpop.f32.mrf.mxu0
      %v2811 = vadd.f32 %v1560, %v2810
      %v2812 = vpop.f32.mrf.mxu0
      %2813 = vdwg.mxu0
      %v2814 = vadd.f32 %v2206, %v2806
      %v2815 = vadd.f32 %v2207, %v2808
      %v2816 = vadd.f32 %v2208, %v2811
      %v2817 = vsel %vm945, %v2814, 0.0
      %2818 = vadd.xlane.f32.xlu0 %v2817
      %v2819 = vpop.xlane.xlu0 %2818
      %v2820 = vsel %vm945, %v2815, 0.0
      %2821 = vadd.xlane.f32.xlu0 %v2820
      %v2822 = vpop.xlane.xlu0 %2821
      %v2823 = vsel %vm945, %v2816, 0.0
      %2824 = vadd.xlane.f32.xlu0 %v2823
      %v2825 = vpop.xlane.xlu0 %2824
      %v2826 = vmul.f32 %v2819, %v961
      %v2827 = vmul.f32 %v2822, %v961
      %v2828 = vmul.f32 %v2825, %v961
      %v2829 = vmul.f32 %v2814, %v2814
      %v2830 = vmul.f32 %v2815, %v2815
      %v2831 = vmul.f32 %v2816, %v2816
      %v2832 = vsel %vm945, %v2829, 0.0
      %2833 = vadd.xlane.f32.xlu0 %v2832
      %v2834 = vpop.xlane.xlu0 %2833
      %v2835 = vsel %vm945, %v2830, 0.0
      %2836 = vadd.xlane.f32.xlu0 %v2835
      %v2837 = vpop.xlane.xlu0 %2836
      %v2838 = vsel %vm945, %v2831, 0.0
      %2839 = vadd.xlane.f32.xlu0 %v2838
      %v2840 = vpop.xlane.xlu0 %2839
      %v2841 = vmul.f32 %v2834, %v961
      %v2842 = vmul.f32 %v2837, %v961
      %v2843 = vmul.f32 %v2840, %v961
      %v2844 = vmul.f32 %v2826, %v2826
      %v2845 = vmul.f32 %v2827, %v2827
      %v2846 = vmul.f32 %v2828, %v2828
      %v2847 = vsub.f32 %v2841, %v2844
      %v2848 = vsub.f32 %v2842, %v2845
      %v2849 = vsub.f32 %v2843, %v2846
      %v2850 = vmax.f32 %v2847, 0.0
      %v2851 = vmax.f32 %v2848, 0.0
      %v2852 = vmax.f32 %v2849, 0.0
      %v2853 = vsub.f32 %v2814, %v2826
      %v2854 = vsub.f32 %v2815, %v2827
      %v2855 = vsub.f32 %v2816, %v2828
      %v2856 = vadd.f32 %v2850, 1e-06
      %v2857 = vadd.f32 %v2851, 1e-06
      %v2858 = vadd.f32 %v2852, 1e-06
      %v2859 = vrsqrt.pop %v2856
      %v2860 = vmul.f32 %v2859, %v2856
      %v2861 = vmul.f32 %v2860, %v2859
      %v2862 = vmul.f32 0.5, %v2861
      %v2863 = vsub.f32 1.5, %v2862
      %v2864 = vmul.f32 %v2859, %v2863
      %vm2865 = vweird.f32 %v2856
      %vm2866 = vweird.f32 %v2859
      %vm2867 = vmor %vm2865, %vm2866
      %v2868 = vsel %vm2867, %v2859, %v2864
      %v2869 = vrsqrt.pop %v2857
      %v2870 = vmul.f32 %v2869, %v2857
      %v2871 = vmul.f32 %v2870, %v2869
      %v2872 = vmul.f32 0.5, %v2871
      %v2873 = vsub.f32 1.5, %v2872
      %v2874 = vmul.f32 %v2869, %v2873
      %vm2875 = vweird.f32 %v2857
      %vm2876 = vweird.f32 %v2869
      %vm2877 = vmor %vm2875, %vm2876
      %v2878 = vsel %vm2877, %v2869, %v2874
      %v2879 = vrsqrt.pop %v2858
      %v2880 = vmul.f32 %v2879, %v2858
      %v2881 = vmul.f32 %v2880, %v2879
      %v2882 = vmul.f32 0.5, %v2881
      %v2883 = vsub.f32 1.5, %v2882
      %v2884 = vmul.f32 %v2879, %v2883
      %vm2885 = vweird.f32 %v2858
      %vm2886 = vweird.f32 %v2879
      %vm2887 = vmor %vm2885, %vm2886
      %v2888 = vsel %vm2887, %v2879, %v2884
      %v2889 = vmul.f32 %v2853, %v2868
      %v2890 = vmul.f32 %v2854, %v2878
      %v2891 = vmul.f32 %v2855, %v2888
      %v2892 = vmul.f32 %v2889, %v1677
      %v2893 = vmul.f32 %v2890, %v1677
      %v2894 = vmul.f32 %v2891, %v1677
      %v2895 = vadd.f32 %v2892, %v1683
      %v2896 = vadd.f32 %v2893, %v1683
      %v2897 = vadd.f32 %v2894, %v1683
      %v2898 = vpack.c.bf16 %v2896, %v2895
      %v2899 = vpack.c.bf16 %v2897, %v2897
      %v2901 = vsel %vm945, %v2898, 0
      %v2904 = vsel %vm945, %v2899, 0
      %2906 = vmatpush.bf16.msra.mxu0 0
      %2907 = vmatpush.bf16.msra.mxu0 0
      %2908 = vmatpush.bf16.msra.mxu0 0
      %2909 = vmatpush.bf16.msra.mxu0 0
      %2910 = vmatpush.bf16.msra.mxu0 0
      %2911 = vmatpush.bf16.msra.mxu0 0
      %2912 = vmatpush.bf16.msra.mxu0 %v1702
      %2913 = vmatpush.bf16.msra.mxu0 %v1701
      %2914 = vmatmul.bf16.gmra.mxu0 %v2901
      %v2915 = vpop.f32.mrf.mxu0
      %v2916 = vadd.f32 %v1691, %v2915
      %v2917 = vpop.f32.mrf.mxu0
      %v2918 = vadd.f32 %v1691, %v2917
      %2919 = vmatmul.bf16.gmra.mxu0 %v2904
      %v2920 = vpop.f32.mrf.mxu0
      %v2921 = vadd.f32 %v1691, %v2920
      %v2922 = vpop.f32.mrf.mxu0
      %2923 = vdwg.mxu0
      %v2924 = vmul.f32 %v2916, 0.5
      %v2925 = vmul.f32 %v2918, 0.5
      %v2926 = vmul.f32 %v2921, 0.5
      %v2927 = vmul.f32 %v2916, 0.044715
      %v2928 = vmul.f32 %v2918, 0.044715
      %v2929 = vmul.f32 %v2921, 0.044715
      %v2930 = vmul.f32 %v2927, %v2916
      %v2931 = vmul.f32 %v2928, %v2918
      %v2932 = vmul.f32 %v2929, %v2921
      %v2933 = vmul.f32 %v2930, %v2916
      %v2934 = vmul.f32 %v2931, %v2918
      %v2935 = vmul.f32 %v2932, %v2921
      %v2936 = vadd.f32 %v2916, %v2933
      %v2937 = vadd.f32 %v2918, %v2934
      %v2938 = vadd.f32 %v2921, %v2935
      %v2939 = vmul.f32 %v2936, 0.7978846
      %v2940 = vmul.f32 %v2937, 0.7978846
      %v2941 = vmul.f32 %v2938, 0.7978846
      %v2942 = vtanh.pop %v2939
      %v2943 = vtanh.pop %v2940
      %v2944 = vtanh.pop %v2941
      %v2945 = vadd.f32 %v2942, 1.0
      %v2946 = vadd.f32 %v2943, 1.0
      %v2947 = vadd.f32 %v2944, 1.0
      %v2948 = vmul.f32 %v2924, %v2945
      %v2949 = vmul.f32 %v2925, %v2946
      %v2950 = vmul.f32 %v2926, %v2947
      %v2951 = vpack.c.bf16 %v2949, %v2948
      %v2952 = vpack.c.bf16 %v2950, %v2950
      %v2954 = vsel %vm1785, %v2951, 0
      %v2957 = vsel %vm1785, %v2952, 0
      %2959 = vmatpush.bf16.msra.mxu0 0
      %2960 = vmatpush.bf16.msra.mxu0 0
      %2961 = vmatpush.bf16.msra.mxu0 0
      %2962 = vmatpush.bf16.msra.mxu0 0
      %2963 = vmatpush.bf16.msra.mxu0 %v1780
      %2964 = vmatpush.bf16.msra.mxu0 %v1779
      %2965 = vmatpush.bf16.msra.mxu0 %v1778
      %2966 = vmatpush.bf16.msra.mxu0 %v1777
      %2967 = vmatmul.bf16.gmra.mxu0 %v2954
      %v2968 = vpop.f32.mrf.mxu0
      %v2969 = vadd.f32 %v1759, %v2968
      %v2970 = vpop.f32.mrf.mxu0
      %v2971 = vadd.f32 %v1759, %v2970
      %2972 = vmatmul.bf16.gmra.mxu0 %v2957
      %v2973 = vpop.f32.mrf.mxu0
      %v2974 = vadd.f32 %v1759, %v2973
      %v2975 = vpop.f32.mrf.mxu0
      %2976 = vdwg.mxu0
      %v2977 = vadd.f32 %v2814, %v2969
      %v2978 = vadd.f32 %v2815, %v2971
      %v2979 = vadd.f32 %v2816, %v2974
      %v2980 = vrot.slane %v2977, 3
      %v2981 = vrot.slane %v2978, 3
      %v2982 = vrot.slane %v2979, 3
      %v2983 = vsel %vm1818, %v2981, %v2982
      %v2984 = vsel %vm1818, %v2980, %v2981
      %v2985 = vsel %vm1818, %v2982, %v2980
      %v2986 = vmul.f32 %v2985, %v1825
      %v2987 = vmul.f32 %v2984, %v1830
      %v2988 = vmul.f32 %v2983, %v1835
      %v2989 = vmul.f32 %v2986, %v1840
      %v2990 = vmul.f32 %v2987, %v1840
      %v2991 = vmul.f32 %v2988, %v1840
      %v2992 = vadd.f32 %v2989, 0.0
      %v2993 = vadd.f32 %v2990, 0.0
      %v2994 = vadd.f32 %v2991, 0.0
      %v2995 = vrot.slane %v2977, 4
      %v2996 = vrot.slane %v2978, 4
      %v2997 = vrot.slane %v2979, 4
      %v2998 = vsel %vm1850, %v2996, %v2997
      %v2999 = vsel %vm1850, %v2995, %v2996
      %v3000 = vsel %vm1850, %v2997, %v2995
      %v3001 = vmul.f32 %v3000, %v1857
      %v3002 = vmul.f32 %v2999, %v1862
      %v3003 = vmul.f32 %v2998, %v1867
      %v3004 = vmul.f32 %v3001, %v1872
      %v3005 = vmul.f32 %v3002, %v1872
      %v3006 = vmul.f32 %v3003, %v1872
      %v3007 = vadd.f32 %v2992, %v3004
      %v3008 = vadd.f32 %v2993, %v3005
      %v3009 = vadd.f32 %v2994, %v3006
      %v3010 = vrot.slane %v2977, 5
      %v3011 = vrot.slane %v2978, 5
      %v3012 = vrot.slane %v2979, 5
      %v3013 = vsel %vm1882, %v3011, %v3012
      %v3014 = vsel %vm1882, %v3010, %v3011
      %v3015 = vsel %vm1882, %v3012, %v3010
      %v3016 = vmul.f32 %v3015, %v1889
      %v3017 = vmul.f32 %v3014, %v1894
      %v3018 = vmul.f32 %v3013, %v1899
      %v3019 = vmul.f32 %v3016, %v1904
      %v3020 = vmul.f32 %v3017, %v1904
      %v3021 = vmul.f32 %v3018, %v1904
      %v3022 = vadd.f32 %v3007, %v3019
      %v3023 = vadd.f32 %v3008, %v3020
      %v3024 = vadd.f32 %v3009, %v3021
      %v3025 = vrot.slane %v2977, 7
      %v3026 = vrot.slane %v2978, 7
      %v3027 = vrot.slane %v2979, 7
      %v3028 = vsel %vm1914, %v3026, %v3027
      %v3029 = vsel %vm1914, %v3025, %v3026
      %v3030 = vsel %vm1914, %v3027, %v3025
      %v3031 = vmul.f32 %v3030, %v1921
      %v3032 = vmul.f32 %v3029, %v1926
      %v3033 = vmul.f32 %v3028, %v1931
      %v3034 = vmul.f32 %v3031, %v1936
      %v3035 = vmul.f32 %v3032, %v1936
      %v3036 = vmul.f32 %v3033, %v1936
      %v3037 = vadd.f32 %v3022, %v3034
      %v3038 = vadd.f32 %v3023, %v3035
      %v3039 = vadd.f32 %v3024, %v3036
      %v3040 = vmul.f32 %v2977, %v1946
      %v3041 = vmul.f32 %v2978, %v1951
      %v3042 = vmul.f32 %v2979, %v1956
      %v3043 = vmul.f32 %v3040, %v1961
      %v3044 = vmul.f32 %v3041, %v1961
      %v3045 = vmul.f32 %v3042, %v1961
      %v3046 = vadd.f32 %v3037, %v3043
      %v3047 = vadd.f32 %v3038, %v3044
      %v3048 = vadd.f32 %v3039, %v3045
      %v3049 = vrot.slane %v2977, 1
      %v3050 = vrot.slane %v2978, 1
      %v3051 = vrot.slane %v2979, 1
      %v3052 = vsel %vm1971, %v3050, %v3051
      %v3053 = vsel %vm1971, %v3049, %v3050
      %v3054 = vsel %vm1971, %v3051, %v3049
      %v3055 = vmul.f32 %v3053, %v1978
      %v3056 = vmul.f32 %v3052, %v1983
      %v3057 = vmul.f32 %v3054, %v1988
      %v3058 = vmul.f32 %v3055, %v1993
      %v3059 = vmul.f32 %v3056, %v1993
      %v3060 = vmul.f32 %v3057, %v1993
      %v3061 = vadd.f32 %v3046, %v3058
      %v3062 = vadd.f32 %v3047, %v3059
      %v3063 = vadd.f32 %v3048, %v3060
      %v3064 = vmul.f32 %v2984, %v2003
      %v3065 = vmul.f32 %v2983, %v2008
      %v3066 = vmul.f32 %v2985, %v2013
      %v3067 = vmul.f32 %v3064, %v2018
      %v3068 = vmul.f32 %v3065, %v2018
      %v3069 = vmul.f32 %v3066, %v2018
      %v3070 = vadd.f32 %v3061, %v3067
      %v3071 = vadd.f32 %v3062, %v3068
      %v3072 = vadd.f32 %v3063, %v3069
      %v3073 = vmul.f32 %v2999, %v2028
      %v3074 = vmul.f32 %v2998, %v2033
      %v3075 = vmul.f32 %v3000, %v2038
      %v3076 = vmul.f32 %v3073, %v2043
      %v3077 = vmul.f32 %v3074, %v2043
      %v3078 = vmul.f32 %v3075, %v2043
      %v3079 = vadd.f32 %v3070, %v3076
      %v3080 = vadd.f32 %v3071, %v3077
      %v3081 = vadd.f32 %v3072, %v3078
      %v3082 = vmul.f32 %v3014, %v2053
      %v3083 = vmul.f32 %v3013, %v2058
      %v3084 = vmul.f32 %v3015, %v2063
      %v3085 = vmul.f32 %v3082, %v2068
      %v3086 = vmul.f32 %v3083, %v2068
      %v3087 = vmul.f32 %v3084, %v2068
      %v3088 = vadd.f32 %v3079, %v3085
      %v3089 = vadd.f32 %v3080, %v3086
      %v3090 = vadd.f32 %v3081, %v3087
      %v3091 = vadd.f32 %v3088, %v2076
      %v3092 = vadd.f32 %v3089, %v2076
      %v3093 = vadd.f32 %v3090, %v2076
      %v3094 = vsub.f32 %v3091, %v2977
      %v3095 = vsub.f32 %v3092, %v2978
      %v3096 = vsub.f32 %v3093, %v2979
      %v3097 = vmul.f32 %v2087, %v3094
      %v3098 = vmul.f32 %v2092, %v3095
      %v3099 = vmul.f32 %v2097, %v3096
      %v3100 = vadd.f32 %v2977, %v3097
      %v3101 = vadd.f32 %v2978, %v3098
      %v3102 = vadd.f32 %v2979, %v3099
      %v3103 = vadd.f32 %v3100, %v2969
      %v3104 = vadd.f32 %v3101, %v2971
      %v3105 = vadd.f32 %v3102, %v2974
      %3106 = vst.msk [vmem:[%s2205] sm:$0xff] %vm945, %v3103
      %3107 = vst.msk [vmem:[%s2205 + $0x8] sm:$0xff] %vm945, %v3104
      %3108 = vst.msk [vmem:[%s2205 + $0x10] sm:$0xff] %vm945, %v3105
      // Predicated region
      $region105: #{encoder_forward.1} parent=95 // pred_check
        %p3109 = pneg %p2111
      $region106: #{encoder_forward.1} parent=95 // pred_check_branch
        %3111 = sbr.rel (%p3109) target = $region108
      $region107: #{encoder_forward.1} parent=95 // pred_region
        %v3112 = vsel %vm945, %v3103, 0.0
        %3113 = vadd.xlane.f32.xlu0 %v3112
        %v3114 = vpop.xlane.xlu0 %3113
        %v3115 = vsel %vm945, %v3104, 0.0
        %3116 = vadd.xlane.f32.xlu0 %v3115
        %v3117 = vpop.xlane.xlu0 %3116
        %v3118 = vsel %vm945, %v3105, 0.0
        %3119 = vadd.xlane.f32.xlu0 %v3118
        %v3120 = vpop.xlane.xlu0 %3119
        %v3121 = vmul.f32 %v3114, %v961
        %v3122 = vmul.f32 %v3117, %v961
        %v3123 = vmul.f32 %v3120, %v961
        %v3124 = vmul.f32 %v3103, %v3103
        %v3125 = vmul.f32 %v3104, %v3104
        %v3126 = vmul.f32 %v3105, %v3105
        %v3127 = vsel %vm945, %v3124, 0.0
        %3128 = vadd.xlane.f32.xlu0 %v3127
        %v3129 = vpop.xlane.xlu0 %3128
        %v3130 = vsel %vm945, %v3125, 0.0
        %3131 = vadd.xlane.f32.xlu0 %v3130
        %v3132 = vpop.xlane.xlu0 %3131
        %v3133 = vsel %vm945, %v3126, 0.0
        %3134 = vadd.xlane.f32.xlu0 %v3133
        %v3135 = vpop.xlane.xlu0 %3134
        %v3136 = vmul.f32 %v3129, %v961
        %v3137 = vmul.f32 %v3132, %v961
        %v3138 = vmul.f32 %v3135, %v961
        %v3139 = vmul.f32 %v3121, %v3121
        %v3140 = vmul.f32 %v3122, %v3122
        %v3141 = vmul.f32 %v3123, %v3123
        %v3142 = vsub.f32 %v3136, %v3139
        %v3143 = vsub.f32 %v3137, %v3140
        %v3144 = vsub.f32 %v3138, %v3141
        %v3145 = vmax.f32 %v3142, 0.0
        %v3146 = vmax.f32 %v3143, 0.0
        %v3147 = vmax.f32 %v3144, 0.0
        %v3148 = vsub.f32 %v3103, %v3121
        %v3149 = vsub.f32 %v3104, %v3122
        %v3150 = vsub.f32 %v3105, %v3123
        %v3151 = vadd.f32 %v3145, 1e-06
        %v3152 = vadd.f32 %v3146, 1e-06
        %v3153 = vadd.f32 %v3147, 1e-06
        %v3154 = vrsqrt.pop %v3151
        %v3155 = vmul.f32 %v3154, %v3151
        %v3156 = vmul.f32 %v3155, %v3154
        %v3157 = vmul.f32 0.5, %v3156
        %v3158 = vsub.f32 1.5, %v3157
        %v3159 = vmul.f32 %v3154, %v3158
        %vm3160 = vweird.f32 %v3151
        %vm3161 = vweird.f32 %v3154
        %vm3162 = vmor %vm3160, %vm3161
        %v3163 = vsel %vm3162, %v3154, %v3159
        %v3164 = vrsqrt.pop %v3152
        %v3165 = vmul.f32 %v3164, %v3152
        %v3166 = vmul.f32 %v3165, %v3164
        %v3167 = vmul.f32 0.5, %v3166
        %v3168 = vsub.f32 1.5, %v3167
        %v3169 = vmul.f32 %v3164, %v3168
        %vm3170 = vweird.f32 %v3152
        %vm3171 = vweird.f32 %v3164
        %vm3172 = vmor %vm3170, %vm3171
        %v3173 = vsel %vm3172, %v3164, %v3169
        %v3174 = vrsqrt.pop %v3153
        %v3175 = vmul.f32 %v3174, %v3153
        %v3176 = vmul.f32 %v3175, %v3174
        %v3177 = vmul.f32 0.5, %v3176
        %v3178 = vsub.f32 1.5, %v3177
        %v3179 = vmul.f32 %v3174, %v3178
        %vm3180 = vweird.f32 %v3153
        %vm3181 = vweird.f32 %v3174
        %vm3182 = vmor %vm3180, %vm3181
        %v3183 = vsel %vm3182, %v3174, %v3179
        %v3184 = vmul.f32 %v3148, %v3163
        %v3185 = vmul.f32 %v3149, %v3173
        %v3186 = vmul.f32 %v3150, %v3183
        %v3188 = vperm.slane %v898, 0
        %v3190 = vmul.f32 %v3184, %v3188
        %v3191 = vmul.f32 %v3185, %v3188
        %v3192 = vmul.f32 %v3186, %v3188
        %v3194 = vperm.slane %v899, 0
        %v3196 = vadd.f32 %v3190, %v3194
        %v3197 = vadd.f32 %v3191, %v3194
        %v3198 = vadd.f32 %v3192, %v3194
        %s3199 = scalar_lea.vmem %s847, 24
        %3200 = vst.msk [vmem:[%s3199] sm:$0xff] %vm945, %v3196
        %3201 = vst.msk [vmem:[%s3199 + $0x8] sm:$0xff] %vm945, %v3197
        %3202 = vst.msk [vmem:[%s3199 + $0x10] sm:$0xff] %vm945, %v3198
      $region108: #{encoder_forward.1} parent=95 // pred_fallthru
        _
      %s3203 = smul.u32 2, %s34
      %p3204 = scmp.lt.s32.totalorder %s3203, 1
      %s3205 = scalar_select %p3204, %s3203, 1
      %s3206 = smul.addr %s3205, 3
      %s3207 = smul.addr %s3206, 8
      %s3208 = scalar_lea.vmem %s19, %s3207
      // Predicated region
      $region109: #{encoder_forward.1} parent=95 // pred_check
        %p3209 = pneg %p534
      $region110: #{encoder_forward.1} parent=95 // pred_check_branch
        %3211 = sbr.rel (%p3209) target = $region112
      $region111: #{encoder_forward.1} parent=95 // pred_region
        %s3212 = smul.u32 2, %s34
      $region112: #{encoder_forward.1} parent=95 // pred_fallthru
        _
      // Predicated region
      $region113: #{encoder_forward.1} parent=95 // pred_check
        %p3213 = pneg %p534
      $region114: #{encoder_forward.1} parent=95 // pred_check_branch
        %3215 = sbr.rel (%p3213) target = $region116
      $region115: #{encoder_forward.1} parent=95 // pred_region
        %s3216 = smul.u32 2, %s34
        %p3217 = scmp.lt.s32.totalorder %s3216, 1
        %s3218 = scalar_select %p3217, %s3216, 1
        %s3219 = smul.addr %s3218, 3
        %s3220 = smul.addr %s3219, 8
        %s3221 = scalar_lea.vmem %s19, %s3220
      $region116: #{encoder_forward.1} parent=95 // pred_fallthru
        _
    $region96: #{encoder_forward.1} parent=5 // pred_fallthru
      _
    %p3222 = scmp.le.s32.totalorder 2, %s25
    // Predicated region
    $region117: #{encoder_forward.1} parent=5 // pred_check
      %p3223 = pneg %p3222
    $region118: #{encoder_forward.1} parent=5 // pred_check_branch
      %3225 = sbr.rel (%p3223) target = $region120
    $region119: #{encoder_forward.1} parent=5 // pred_region
      %s3226 = ssub.s32 %s25, 2
    $region120: #{encoder_forward.1} parent=5 // pred_fallthru
      _
  $region6: #{encoder_forward.1} parent=0 // loop_footer
    %s29 = sadd.s32 1, %s25
  $region7: #{encoder_forward.1} parent=0 // loop_footer_branch
    %24 = sbr.rel target = $region3
  $region8: #{encoder_forward.1} parent=0 // loop_exit
    _

</llo_original>
